<compile_context>
chip_gen: v5e
topology: v5e:2x2
jax: 0.10.0
libtpu: 0.0.40
codegen_flags: <defaults>
</compile_context>

<pallas_src>
import jax
import jax.numpy as jnp
from jax.experimental import pallas as pl
from jax.experimental.pallas import tpu as pltpu

BN_EPS = 1e-5
TILE_M = 512                      # rows per grid step (multiple of 16 for bf16 sublanes)
VMEM_LIMIT = 32 * 1024 * 1024     # explicit scoped-VMEM budget, safe on v5e/v6e/v7x

NUM_ANCHORS = 2                   # Slim uses anchor_num=2 for every head
HEAD_DIMS = (("bbox", 4), ("cls", 2), ("ldm", 8))
HEAD_COUT = NUM_ANCHORS * sum(k for _, k in HEAD_DIMS)     # 28
HEAD_PAD = 128                    # lane-dense padded head output width

# (cin, cout, stride) for conv1 .. conv13
LAYER_CFG = [
    (3, 16, 2), (16, 32, 1), (32, 32, 2), (32, 32, 1), (32, 64, 2),
    (64, 64, 1), (64, 64, 1), (64, 64, 1), (64, 64, 2), (64, 64, 1),
    (64, 64, 1), (64, 64, 2), (64, 64, 1),
]
DETECTION_IDXS = (7, 10, 12)      # outputs of conv8, conv11, conv13


# --------------------------------------------------------------------------- #
# Pallas kernels
# --------------------------------------------------------------------------- #
def _matmul_stats_kernel(x_ref, w_ref, acc_ref, stats_ref):
    """Per-tile conv matmul + row statistics.

    x_ref:     (TILE_M, K)  bf16 im2col patches
    w_ref:     (K, Cout)    bf16 conv weights
    acc_ref:   (TILE_M, Cout) f32 raw conv output (pre-BN)
    stats_ref: (8, Cout)    f32  row 0 = sum over rows, row 1 = sum of squares
    """
    acc = jnp.dot(x_ref[...], w_ref[...], preferred_element_type=jnp.float32)
    acc_ref[...] = acc
    ssum = jnp.sum(acc, axis=0, keepdims=True)           # (1, Cout)
    ssq = jnp.sum(acc * acc, axis=0, keepdims=True)      # (1, Cout)
    pad = jnp.zeros((6, acc.shape[1]), jnp.float32)
    stats_ref[...] = jnp.concatenate([ssum, ssq, pad], axis=0)


def _scale_shift_relu_kernel(acc_ref, s_ref, b_ref, o_ref):
    """Folded BatchNorm + ReLU:  y = max(acc * s + b, 0)  (s, b per channel)."""
    y = acc_ref[...] * s_ref[...] + b_ref[...]
    o_ref[...] = jnp.maximum(y, 0.0).astype(o_ref.dtype)


def _head_matmul_kernel(x_ref, w_ref, b_ref, o_ref):
    """Fused (bbox|cls|ldm) 1x1-conv heads: one lane-dense matmul + bias."""
    o_ref[...] = (
        jnp.dot(x_ref[...], w_ref[...], preferred_element_type=jnp.float32)
        + b_ref[...]
    )


# --------------------------------------------------------------------------- #
# Small helpers
# --------------------------------------------------------------------------- #
def _round_up(x, m):
    return (x + m - 1) // m * m


def _pick_tile(m):
    return TILE_M if m >= TILE_M else _round_up(m, 16)


def _pad_rows(x, tile):
    m = x.shape[0]
    m_pad = _round_up(m, tile)
    if m_pad != m:
        x = jnp.pad(x, ((0, m_pad - m),) + ((0, 0),) * (x.ndim - 1))
    return x, m_pad


def _conv_compiler_params():
    return pltpu.CompilerParams(
        dimension_semantics=("parallel",),
        vmem_limit_bytes=VMEM_LIMIT,
    )


# --------------------------------------------------------------------------- #
# conv_bn(3x3 conv -> BatchNorm(train) -> ReLU), tiled two-pass Pallas lowering
# --------------------------------------------------------------------------- #
def im2col_3x3(x_nhwc, stride, pad=1):
    """Extract 3x3 patches -> (N*Ho*Wo, 9*C), K ordered as (ky, kx, c)."""
    n, h, w, c = x_nhwc.shape
    xp = jnp.pad(x_nhwc, ((0, 0), (pad, pad), (pad, pad), (0, 0)))
    ho = (h + 2 * pad - 3) // stride + 1
    wo = (w + 2 * pad - 3) // stride + 1
    cols = []
    for ky in range(3):
        for kx in range(3):
            patch = jax.lax.slice(
                xp,
                (0, ky, kx, 0),
                (n, ky + stride * (ho - 1) + 1, kx + stride * (wo - 1) + 1, c),
                (1, stride, stride, 1),
            )
            cols.append(patch)
    patches = jnp.concatenate(cols, axis=-1)  # (N, Ho, Wo, 9*C)
    return patches.reshape(n * ho * wo, 9 * c), (n, ho, wo)


def conv_bn_relu_pallas(patches, w2d, gamma, beta):
    """patches (M, 9*Cin) -> bf16 activations (M, Cout), BN in training mode."""
    m_true, k = patches.shape
    cout = w2d.shape[1]
    tile = _pick_tile(m_true)
    patches, m_pad = _pad_rows(patches.astype(jnp.bfloat16), tile)
    num_tiles = m_pad // tile
    w2d = w2d.astype(jnp.bfloat16)

    # Pass 1: tiled matmul (MXU, f32 accumulation) + per-tile row sum / sumsq.
    acc, stats = pl.pallas_call(
        _matmul_stats_kernel,
        out_shape=(
            jax.ShapeDtypeStruct((m_pad, cout), jnp.float32),
            jax.ShapeDtypeStruct((8 * num_tiles, cout), jnp.float32),
        ),
        grid=(num_tiles,),
        in_specs=[
            pl.BlockSpec((tile, k), lambda i: (i, 0)),
            pl.BlockSpec((k, cout), lambda i: (0, 0)),
        ],
        out_specs=(
            pl.BlockSpec((tile, cout), lambda i: (i, 0)),
            pl.BlockSpec((8, cout), lambda i: (i, 0)),
        ),
        compiler_params=_conv_compiler_params(),
    )(patches, w2d)

    # Global BatchNorm stats (training mode, biased variance) from the partials.
    # Padded rows are all-zero and contribute nothing; divide by the true M.
    stats = stats.reshape(num_tiles, 8, cout)
    row_sum = jnp.sum(stats[:, 0, :], axis=0)
    row_sq = jnp.sum(stats[:, 1, :], axis=0)
    mean = row_sum / m_true
    var = jnp.maximum(row_sq / m_true - mean * mean, 0.0)
    scale = (gamma * jax.lax.rsqrt(var + BN_EPS)).reshape(1, cout)
    shift = (beta - mean * scale[0]).reshape(1, cout)

    # Pass 2: tiled folded-BN normalize + ReLU, bf16 output.
    y = pl.pallas_call(
        _scale_shift_relu_kernel,
        out_shape=jax.ShapeDtypeStruct((m_pad, cout), jnp.bfloat16),
        grid=(num_tiles,),
        in_specs=[
            pl.BlockSpec((tile, cout), lambda i: (i, 0)),
            pl.BlockSpec((1, cout), lambda i: (0, 0)),
            pl.BlockSpec((1, cout), lambda i: (0, 0)),
        ],
        out_specs=pl.BlockSpec((tile, cout), lambda i: (i, 0)),
        compiler_params=_conv_compiler_params(),
    )(acc, scale, shift)
    return y[:m_true]


# --------------------------------------------------------------------------- #
# Fused detection heads (bbox + cls + landmark 1x1 convs per FPN level)
# --------------------------------------------------------------------------- #
def _fuse_head_params(params, level):
    ws, bs = [], []
    for name, _ in HEAD_DIMS:
        w, b = params["heads"][name][level]
        ws.append(w)
        bs.append(b)
    w_cat = jnp.concatenate(ws, axis=1).astype(jnp.bfloat16)   # (64, 28)
    b_cat = jnp.concatenate(bs, axis=0).astype(jnp.float32)    # (28,)
    w_pad = jnp.pad(w_cat, ((0, 0), (0, HEAD_PAD - HEAD_COUT)))
    b_pad = jnp.pad(b_cat, (0, HEAD_PAD - HEAD_COUT)).reshape(1, HEAD_PAD)
    return w_pad, b_pad


def fused_heads_pallas(det_nhwc, w_pad, b_pad):
    """One lane-dense matmul computing all three heads for one FPN level."""
    n, h, w_sp, c = det_nhwc.shape
    m_true = n * h * w_sp
    x2d = det_nhwc.reshape(m_true, c).astype(jnp.bfloat16)
    tile = _pick_tile(m_true)
    x2d, m_pad = _pad_rows(x2d, tile)
    num_tiles = m_pad // tile

    out = pl.pallas_call(
        _head_matmul_kernel,
        out_shape=jax.ShapeDtypeStruct((m_pad, HEAD_PAD), jnp.float32),
        grid=(num_tiles,),
        in_specs=[
            pl.BlockSpec((tile, c), lambda i: (i, 0)),
            pl.BlockSpec((c, HEAD_PAD), lambda i: (0, 0)),
            pl.BlockSpec((1, HEAD_PAD), lambda i: (0, 0)),
        ],
        out_specs=pl.BlockSpec((tile, HEAD_PAD), lambda i: (i, 0)),
        compiler_params=_conv_compiler_params(),
    )(x2d, w_pad, b_pad)

    out = out[:m_true]
    n_rows = h * w_sp * NUM_ANCHORS
    # Matches: NCHW conv -> permute(0,2,3,1) -> view(N, H*W*anchors, k).
    results = {}
    off = 0
    for name, kdim in HEAD_DIMS:
        width = NUM_ANCHORS * kdim
        results[name] = out[:, off:off + width].reshape(n, n_rows, kdim)
        off += width
    return results


# --------------------------------------------------------------------------- #
# Parameters & forward pass
# --------------------------------------------------------------------------- #
def init_params(key):
    params = {"convs": [], "heads": {name: [] for name, _ in HEAD_DIMS}}
    for cin, cout, _ in LAYER_CFG:
        key, kw, kg, kb = jax.random.split(key, 4)
        w = 0.1 * jax.random.normal(kw, (3, 3, cin, cout), jnp.float32)  # HWIO
        gamma = 1.0 + 0.1 * jax.random.normal(kg, (cout,), jnp.float32)
        beta = 0.1 * jax.random.normal(kb, (cout,), jnp.float32)
        params["convs"].append((w, gamma, beta))
    for name, k in HEAD_DIMS:
        cout = NUM_ANCHORS * k
        for _ in range(3):  # fpn_num = 3
            key, kw, kb = jax.random.split(key, 3)
            w = 0.1 * jax.random.normal(kw, (64, cout), jnp.float32)
            b = 0.1 * jax.random.normal(kb, (cout,), jnp.float32)
            params["heads"][name].append((w, b))
    return params


@jax.jit
def slim_forward(inputs_nchw, params):
    """phase='train' forward of Slim. inputs_nchw: (N, 3, H, W) float32."""
    # bf16 activations halve HBM traffic for the im2col patches; matmuls
    # accumulate in f32 and all BatchNorm math stays in f32.
    x = jnp.transpose(inputs_nchw, (0, 2, 3, 1)).astype(jnp.bfloat16)  # NHWC

    detections = []
    for idx, (cin, cout, stride) in enumerate(LAYER_CFG):
        w, gamma, beta = params["convs"][idx]
        # TODO(synk): replace the JAX-side im2col (9x HBM expansion) with an
        # in-kernel halo-streamed 3x3 conv for the large early layers, and fuse
        # the late stride-1 64-channel layers to keep intermediates in VMEM.
        patches, (n, ho, wo) = im2col_3x3(x, stride)
        y = conv_bn_relu_pallas(patches, w.reshape(9 * cin, cout), gamma, beta)
        x = y.reshape(n, ho, wo, cout)
        if idx in DETECTION_IDXS:
            detections.append(x)

    head_parts = {name: [] for name, _ in HEAD_DIMS}
    for level, det in enumerate(detections):
        w_pad, b_pad = _fuse_head_params(params, level)
        level_out = fused_heads_pallas(det, w_pad, b_pad)
        for name, _ in HEAD_DIMS:
            head_parts[name].append(level_out[name])

    # PyTorch: per-level permute(0,2,1) -> cat(dim=2) -> permute(0,2,1)
    # is identical to concatenation along the anchor axis (dim=1).
    bbox = jnp.concatenate(head_parts["bbox"], axis=1)
    cls = jnp.concatenate(head_parts["cls"], axis=1)
    ldm = jnp.concatenate(head_parts["ldm"], axis=1)
    return bbox, cls, ldm


# --------------------------------------------------------------------------- #
if __name__ == "__main__":
    key = jax.random.PRNGKey(0)
    k_in, k_params = jax.random.split(key)

    # Small input: batch=2, 3 channels, 32x32 spatial.
    inputs = jax.random.normal(k_in, (2, 3, 32, 32), jnp.float32)
    params = init_params(k_params)

    bbox, cls, ldm = slim_forward(inputs, params)
    jax.block_until_ready((bbox, cls, ldm))

    # Total anchors = sum over 3 levels of H*W*2: (4*4 + 2*2 + 1*1) * 2 = 42
    n_anchors = sum(
        (32 // (2 ** s)) * (32 // (2 ** s)) * NUM_ANCHORS for s in (3, 4, 5)
    )
    assert bbox.shape == (2, n_anchors, 4), bbox.shape
    assert cls.shape == (2, n_anchors, 2), cls.shape
    assert ldm.shape == (2, n_anchors, 8), ldm.shape
    assert bbox.dtype == cls.dtype == ldm.dtype == jnp.float32
    assert bool(
        jnp.isfinite(bbox).all() & jnp.isfinite(cls).all() & jnp.isfinite(ldm).all()
    )

    print("KERNEL_OK")
</pallas_src>

<mosaic_0001>
module attributes {stable_mosaic.version = 11 : i64} {
  func.func @_matmul_stats_kernel(%arg0: i32, %arg1: memref<512x27xbf16, #tpu.memory_space<vmem>>, %arg2: memref<27x16xbf16, #tpu.memory_space<vmem>>, %arg3: memref<512x16xf32, #tpu.memory_space<vmem>>, %arg4: memref<8x16xf32, #tpu.memory_space<vmem>>) attributes {dimension_semantics = [#tpu.dimension_semantics<parallel>], iteration_bounds = array<i64: 1>, scalar_prefetch = 0 : i64, scratch_operands = 0 : i64, tpu.core_type = #tpu.core_type<tc>, window_params = [{transform_indices = @transform_0, window_bounds = array<i64: 512, 27>}, {pipeline_mode = #tpu.pipeline_mode<synchronous>, transform_indices = @transform_1, window_bounds = array<i64: 27, 16>}, {transform_indices = @transform_2, window_bounds = array<i64: 512, 16>}, {transform_indices = @transform_3, window_bounds = array<i64: 8, 16>}]} {
    %c0 = arith.constant 0 : index
    %c0_0 = arith.constant 0 : index
    %0 = vector.load %arg1[%c0, %c0_0] : memref<512x27xbf16, #tpu.memory_space<vmem>>, vector<512x27xbf16>
    %c0_1 = arith.constant 0 : index
    %c0_2 = arith.constant 0 : index
    %1 = vector.load %arg2[%c0_1, %c0_2] : memref<27x16xbf16, #tpu.memory_space<vmem>>, vector<27x16xbf16>
    %cst = arith.constant dense<0.000000e+00> : vector<512x16xf32>
    %2 = tpu.matmul %0, %1, %cst {dimension_numbers = #tpu.dot_dimension_numbers<[1], [0], [0], [1], [0, 0, 1, 1], [], []>} : vector<512x27xbf16>, vector<27x16xbf16>, vector<512x16xf32> -> vector<512x16xf32>
    %c0_3 = arith.constant 0 : index
    %c0_4 = arith.constant 0 : index
    %3 = vector.load %arg3[%c0_3, %c0_4] : memref<512x16xf32, #tpu.memory_space<vmem>>, vector<512x16xf32>
    tpu.vector_store %arg3[%c0_3, %c0_4], %2 {strides = array<i32>} : memref<512x16xf32, #tpu.memory_space<vmem>>, vector<512x16xf32>,
    %cst_5 = arith.constant dense<0.000000e+00> : vector<16xf32>
    %4 = vector.multi_reduction <add>, %2, %cst_5 [0] : vector<512x16xf32> to vector<16xf32>
    %5 = vector.shape_cast %4 : vector<16xf32> to vector<1x16xf32>
    %6 = arith.mulf %2, %2 : vector<512x16xf32>
    %cst_6 = arith.constant dense<0.000000e+00> : vector<16xf32>
    %7 = vector.multi_reduction <add>, %6, %cst_6 [0] : vector<512x16xf32> to vector<16xf32>
    %8 = vector.shape_cast %7 : vector<16xf32> to vector<1x16xf32>
    %cst_7 = arith.constant 0.000000e+00 : f32
    %9 = vector.broadcast %cst_7 : f32 to vector<6x16xf32>
    %10 = tpu.concatenate %5, %8, %9 in 0 : vector<1x16xf32>, vector<1x16xf32>, vector<6x16xf32> -> vector<8x16xf32>
    %c0_8 = arith.constant 0 : index
    %c0_9 = arith.constant 0 : index
    %11 = vector.load %arg4[%c0_8, %c0_9] : memref<8x16xf32, #tpu.memory_space<vmem>>, vector<8x16xf32>
    tpu.vector_store %arg4[%c0_8, %c0_9], %10 {strides = array<i32>} : memref<8x16xf32, #tpu.memory_space<vmem>>, vector<8x16xf32>,
    return
  }
  func.func @transform_0(%arg0: i32) -> (i32, i32) {
    %c0_i32 = arith.constant 0 : i32
    %c0_i32_0 = arith.constant 0 : i32
    return %arg0, %c0_i32 : i32, i32
  }
  func.func @transform_1(%arg0: i32) -> (i32, i32) {
    %c0_i32 = arith.constant 0 : i32
    %c0_i32_0 = arith.constant 0 : i32
    %c0_i32_1 = arith.constant 0 : i32
    return %c0_i32, %c0_i32_0 : i32, i32
  }
  func.func @transform_2(%arg0: i32) -> (i32, i32) {
    %c0_i32 = arith.constant 0 : i32
    %c0_i32_0 = arith.constant 0 : i32
    return %arg0, %c0_i32 : i32, i32
  }
  func.func @transform_3(%arg0: i32) -> (i32, i32) {
    %c0_i32 = arith.constant 0 : i32
    %c0_i32_0 = arith.constant 0 : i32
    return %arg0, %c0_i32 : i32, i32
  }
}

module attributes {stable_mosaic.version = 11 : i64} {
  func.func @_scale_shift_relu_kernel(%arg0: i32, %arg1: memref<512x16xf32, #tpu.memory_space<vmem>>, %arg2: memref<1x16xf32, #tpu.memory_space<vmem>>, %arg3: memref<1x16xf32, #tpu.memory_space<vmem>>, %arg4: memref<512x16xbf16, #tpu.memory_space<vmem>>) attributes {dimension_semantics = [#tpu.dimension_semantics<parallel>], iteration_bounds = array<i64: 1>, scalar_prefetch = 0 : i64, scratch_operands = 0 : i64, tpu.core_type = #tpu.core_type<tc>, window_params = [{transform_indices = @transform_0, window_bounds = array<i64: 512, 16>}, {pipeline_mode = #tpu.pipeline_mode<synchronous>, transform_indices = @transform_1, window_bounds = array<i64: 1, 16>}, {pipeline_mode = #tpu.pipeline_mode<synchronous>, transform_indices = @transform_2, window_bounds = array<i64: 1, 16>}, {transform_indices = @transform_3, window_bounds = array<i64: 512, 16>}]} {
    %c0 = arith.constant 0 : index
    %c0_0 = arith.constant 0 : index
    %0 = vector.load %arg1[%c0, %c0_0] : memref<512x16xf32, #tpu.memory_space<vmem>>, vector<512x16xf32>
    %c0_1 = arith.constant 0 : index
    %c0_2 = arith.constant 0 : index
    %1 = vector.load %arg2[%c0_1, %c0_2] : memref<1x16xf32, #tpu.memory_space<vmem>>, vector<1x16xf32>
    %2 = vector.broadcast %1 : vector<1x16xf32> to vector<512x16xf32>
    %3 = arith.mulf %0, %2 : vector<512x16xf32>
    %c0_3 = arith.constant 0 : index
    %c0_4 = arith.constant 0 : index
    %4 = vector.load %arg3[%c0_3, %c0_4] : memref<1x16xf32, #tpu.memory_space<vmem>>, vector<1x16xf32>
    %5 = vector.broadcast %4 : vector<1x16xf32> to vector<512x16xf32>
    %6 = arith.addf %3, %5 : vector<512x16xf32>
    %cst = arith.constant 0.000000e+00 : f32
    %7 = vector.broadcast %cst : f32 to vector<512x16xf32>
    %8 = arith.maximumf %6, %7 : vector<512x16xf32>
    %9 = arith.truncf %8 : vector<512x16xf32> to vector<512x16xbf16>
    %c0_5 = arith.constant 0 : index
    %c0_6 = arith.constant 0 : index
    %10 = vector.load %arg4[%c0_5, %c0_6] : memref<512x16xbf16, #tpu.memory_space<vmem>>, vector<512x16xbf16>
    tpu.vector_store %arg4[%c0_5, %c0_6], %9 {strides = array<i32>} : memref<512x16xbf16, #tpu.memory_space<vmem>>, vector<512x16xbf16>,
    return
  }
  func.func @transform_0(%arg0: i32) -> (i32, i32) {
    %c0_i32 = arith.constant 0 : i32
    %c0_i32_0 = arith.constant 0 : i32
    return %arg0, %c0_i32 : i32, i32
  }
  func.func @transform_1(%arg0: i32) -> (i32, i32) {
    %c0_i32 = arith.constant 0 : i32
    %c0_i32_0 = arith.constant 0 : i32
    %c0_i32_1 = arith.constant 0 : i32
    return %c0_i32, %c0_i32_0 : i32, i32
  }
  func.func @transform_2(%arg0: i32) -> (i32, i32) {
    %c0_i32 = arith.constant 0 : i32
    %c0_i32_0 = arith.constant 0 : i32
    %c0_i32_1 = arith.constant 0 : i32
    return %c0_i32, %c0_i32_0 : i32, i32
  }
  func.func @transform_3(%arg0: i32) -> (i32, i32) {
    %c0_i32 = arith.constant 0 : i32
    %c0_i32_0 = arith.constant 0 : i32
    return %arg0, %c0_i32 : i32, i32
  }
}

module attributes {stable_mosaic.version = 11 : i64} {
  func.func @_matmul_stats_kernel(%arg0: i32, %arg1: memref<512x144xbf16, #tpu.memory_space<vmem>>, %arg2: memref<144x32xbf16, #tpu.memory_space<vmem>>, %arg3: memref<512x32xf32, #tpu.memory_space<vmem>>, %arg4: memref<8x32xf32, #tpu.memory_space<vmem>>) attributes {dimension_semantics = [#tpu.dimension_semantics<parallel>], iteration_bounds = array<i64: 1>, scalar_prefetch = 0 : i64, scratch_operands = 0 : i64, tpu.core_type = #tpu.core_type<tc>, window_params = [{transform_indices = @transform_0, window_bounds = array<i64: 512, 144>}, {pipeline_mode = #tpu.pipeline_mode<synchronous>, transform_indices = @transform_1, window_bounds = array<i64: 144, 32>}, {transform_indices = @transform_2, window_bounds = array<i64: 512, 32>}, {transform_indices = @transform_3, window_bounds = array<i64: 8, 32>}]} {
    %c0 = arith.constant 0 : index
    %c0_0 = arith.constant 0 : index
    %0 = vector.load %arg1[%c0, %c0_0] : memref<512x144xbf16, #tpu.memory_space<vmem>>, vector<512x144xbf16>
    %c0_1 = arith.constant 0 : index
    %c0_2 = arith.constant 0 : index
    %1 = vector.load %arg2[%c0_1, %c0_2] : memref<144x32xbf16, #tpu.memory_space<vmem>>, vector<144x32xbf16>
    %cst = arith.constant dense<0.000000e+00> : vector<512x32xf32>
    %2 = tpu.matmul %0, %1, %cst {dimension_numbers = #tpu.dot_dimension_numbers<[1], [0], [0], [1], [0, 0, 1, 1], [], []>} : vector<512x144xbf16>, vector<144x32xbf16>, vector<512x32xf32> -> vector<512x32xf32>
    %c0_3 = arith.constant 0 : index
    %c0_4 = arith.constant 0 : index
    %3 = vector.load %arg3[%c0_3, %c0_4] : memref<512x32xf32, #tpu.memory_space<vmem>>, vector<512x32xf32>
    tpu.vector_store %arg3[%c0_3, %c0_4], %2 {strides = array<i32>} : memref<512x32xf32, #tpu.memory_space<vmem>>, vector<512x32xf32>,
    %cst_5 = arith.constant dense<0.000000e+00> : vector<32xf32>
    %4 = vector.multi_reduction <add>, %2, %cst_5 [0] : vector<512x32xf32> to vector<32xf32>
    %5 = vector.shape_cast %4 : vector<32xf32> to vector<1x32xf32>
    %6 = arith.mulf %2, %2 : vector<512x32xf32>
    %cst_6 = arith.constant dense<0.000000e+00> : vector<32xf32>
    %7 = vector.multi_reduction <add>, %6, %cst_6 [0] : vector<512x32xf32> to vector<32xf32>
    %8 = vector.shape_cast %7 : vector<32xf32> to vector<1x32xf32>
    %cst_7 = arith.constant 0.000000e+00 : f32
    %9 = vector.broadcast %cst_7 : f32 to vector<6x32xf32>
    %10 = tpu.concatenate %5, %8, %9 in 0 : vector<1x32xf32>, vector<1x32xf32>, vector<6x32xf32> -> vector<8x32xf32>
    %c0_8 = arith.constant 0 : index
    %c0_9 = arith.constant 0 : index
    %11 = vector.load %arg4[%c0_8, %c0_9] : memref<8x32xf32, #tpu.memory_space<vmem>>, vector<8x32xf32>
    tpu.vector_store %arg4[%c0_8, %c0_9], %10 {strides = array<i32>} : memref<8x32xf32, #tpu.memory_space<vmem>>, vector<8x32xf32>,
    return
  }
  func.func @transform_0(%arg0: i32) -> (i32, i32) {
    %c0_i32 = arith.constant 0 : i32
    %c0_i32_0 = arith.constant 0 : i32
    return %arg0, %c0_i32 : i32, i32
  }
  func.func @transform_1(%arg0: i32) -> (i32, i32) {
    %c0_i32 = arith.constant 0 : i32
    %c0_i32_0 = arith.constant 0 : i32
    %c0_i32_1 = arith.constant 0 : i32
    return %c0_i32, %c0_i32_0 : i32, i32
  }
  func.func @transform_2(%arg0: i32) -> (i32, i32) {
    %c0_i32 = arith.constant 0 : i32
    %c0_i32_0 = arith.constant 0 : i32
    return %arg0, %c0_i32 : i32, i32
  }
  func.func @transform_3(%arg0: i32) -> (i32, i32) {
    %c0_i32 = arith.constant 0 : i32
    %c0_i32_0 = arith.constant 0 : i32
    return %arg0, %c0_i32 : i32, i32
  }
}

module attributes {stable_mosaic.version = 11 : i64} {
  func.func @_scale_shift_relu_kernel(%arg0: i32, %arg1: memref<512x32xf32, #tpu.memory_space<vmem>>, %arg2: memref<1x32xf32, #tpu.memory_space<vmem>>, %arg3: memref<1x32xf32, #tpu.memory_space<vmem>>, %arg4: memref<512x32xbf16, #tpu.memory_space<vmem>>) attributes {dimension_semantics = [#tpu.dimension_semantics<parallel>], iteration_bounds = array<i64: 1>, scalar_prefetch = 0 : i64, scratch_operands = 0 : i64, tpu.core_type = #tpu.core_type<tc>, window_params = [{transform_indices = @transform_0, window_bounds = array<i64: 512, 32>}, {pipeline_mode = #tpu.pipeline_mode<synchronous>, transform_indices = @transform_1, window_bounds = array<i64: 1, 32>}, {pipeline_mode = #tpu.pipeline_mode<synchronous>, transform_indices = @transform_2, window_bounds = array<i64: 1, 32>}, {transform_indices = @transform_3, window_bounds = array<i64: 512, 32>}]} {
    %c0 = arith.constant 0 : index
    %c0_0 = arith.constant 0 : index
    %0 = vector.load %arg1[%c0, %c0_0] : memref<512x32xf32, #tpu.memory_space<vmem>>, vector<512x32xf32>
    %c0_1 = arith.constant 0 : index
    %c0_2 = arith.constant 0 : index
    %1 = vector.load %arg2[%c0_1, %c0_2] : memref<1x32xf32, #tpu.memory_space<vmem>>, vector<1x32xf32>
    %2 = vector.broadcast %1 : vector<1x32xf32> to vector<512x32xf32>
    %3 = arith.mulf %0, %2 : vector<512x32xf32>
    %c0_3 = arith.constant 0 : index
    %c0_4 = arith.constant 0 : index
    %4 = vector.load %arg3[%c0_3, %c0_4] : memref<1x32xf32, #tpu.memory_space<vmem>>, vector<1x32xf32>
    %5 = vector.broadcast %4 : vector<1x32xf32> to vector<512x32xf32>
    %6 = arith.addf %3, %5 : vector<512x32xf32>
    %cst = arith.constant 0.000000e+00 : f32
    %7 = vector.broadcast %cst : f32 to vector<512x32xf32>
    %8 = arith.maximumf %6, %7 : vector<512x32xf32>
    %9 = arith.truncf %8 : vector<512x32xf32> to vector<512x32xbf16>
    %c0_5 = arith.constant 0 : index
    %c0_6 = arith.constant 0 : index
    %10 = vector.load %arg4[%c0_5, %c0_6] : memref<512x32xbf16, #tpu.memory_space<vmem>>, vector<512x32xbf16>
    tpu.vector_store %arg4[%c0_5, %c0_6], %9 {strides = array<i32>} : memref<512x32xbf16, #tpu.memory_space<vmem>>, vector<512x32xbf16>,
    return
  }
  func.func @transform_0(%arg0: i32) -> (i32, i32) {
    %c0_i32 = arith.constant 0 : i32
    %c0_i32_0 = arith.constant 0 : i32
    return %arg0, %c0_i32 : i32, i32
  }
  func.func @transform_1(%arg0: i32) -> (i32, i32) {
    %c0_i32 = arith.constant 0 : i32
    %c0_i32_0 = arith.constant 0 : i32
    %c0_i32_1 = arith.constant 0 : i32
    return %c0_i32, %c0_i32_0 : i32, i32
  }
  func.func @transform_2(%arg0: i32) -> (i32, i32) {
    %c0_i32 = arith.constant 0 : i32
    %c0_i32_0 = arith.constant 0 : i32
    %c0_i32_1 = arith.constant 0 : i32
    return %c0_i32, %c0_i32_0 : i32, i32
  }
  func.func @transform_3(%arg0: i32) -> (i32, i32) {
    %c0_i32 = arith.constant 0 : i32
    %c0_i32_0 = arith.constant 0 : i32
    return %arg0, %c0_i32 : i32, i32
  }
}

module attributes {stable_mosaic.version = 11 : i64} {
  func.func @_scale_shift_relu_kernel(%arg0: i32, %arg1: memref<128x32xf32, #tpu.memory_space<vmem>>, %arg2: memref<1x32xf32, #tpu.memory_space<vmem>>, %arg3: memref<1x32xf32, #tpu.memory_space<vmem>>, %arg4: memref<128x32xbf16, #tpu.memory_space<vmem>>) attributes {dimension_semantics = [#tpu.dimension_semantics<parallel>], iteration_bounds = array<i64: 1>, scalar_prefetch = 0 : i64, scratch_operands = 0 : i64, tpu.core_type = #tpu.core_type<tc>, window_params = [{transform_indices = @transform_0, window_bounds = array<i64: 128, 32>}, {pipeline_mode = #tpu.pipeline_mode<synchronous>, transform_indices = @transform_1, window_bounds = array<i64: 1, 32>}, {pipeline_mode = #tpu.pipeline_mode<synchronous>, transform_indices = @transform_2, window_bounds = array<i64: 1, 32>}, {transform_indices = @transform_3, window_bounds = array<i64: 128, 32>}]} {
    %c0 = arith.constant 0 : index
    %c0_0 = arith.constant 0 : index
    %0 = vector.load %arg1[%c0, %c0_0] : memref<128x32xf32, #tpu.memory_space<vmem>>, vector<128x32xf32>
    %c0_1 = arith.constant 0 : index
    %c0_2 = arith.constant 0 : index
    %1 = vector.load %arg2[%c0_1, %c0_2] : memref<1x32xf32, #tpu.memory_space<vmem>>, vector<1x32xf32>
    %2 = vector.broadcast %1 : vector<1x32xf32> to vector<128x32xf32>
    %3 = arith.mulf %0, %2 : vector<128x32xf32>
    %c0_3 = arith.constant 0 : index
    %c0_4 = arith.constant 0 : index
    %4 = vector.load %arg3[%c0_3, %c0_4] : memref<1x32xf32, #tpu.memory_space<vmem>>, vector<1x32xf32>
    %5 = vector.broadcast %4 : vector<1x32xf32> to vector<128x32xf32>
    %6 = arith.addf %3, %5 : vector<128x32xf32>
    %cst = arith.constant 0.000000e+00 : f32
    %7 = vector.broadcast %cst : f32 to vector<128x32xf32>
    %8 = arith.maximumf %6, %7 : vector<128x32xf32>
    %9 = arith.truncf %8 : vector<128x32xf32> to vector<128x32xbf16>
    %c0_5 = arith.constant 0 : index
    %c0_6 = arith.constant 0 : index
    %10 = vector.load %arg4[%c0_5, %c0_6] : memref<128x32xbf16, #tpu.memory_space<vmem>>, vector<128x32xbf16>
    tpu.vector_store %arg4[%c0_5, %c0_6], %9 {strides = array<i32>} : memref<128x32xbf16, #tpu.memory_space<vmem>>, vector<128x32xbf16>,
    return
  }
  func.func @transform_0(%arg0: i32) -> (i32, i32) {
    %c0_i32 = arith.constant 0 : i32
    %c0_i32_0 = arith.constant 0 : i32
    return %arg0, %c0_i32 : i32, i32
  }
  func.func @transform_1(%arg0: i32) -> (i32, i32) {
    %c0_i32 = arith.constant 0 : i32
    %c0_i32_0 = arith.constant 0 : i32
    %c0_i32_1 = arith.constant 0 : i32
    return %c0_i32, %c0_i32_0 : i32, i32
  }
  func.func @transform_2(%arg0: i32) -> (i32, i32) {
    %c0_i32 = arith.constant 0 : i32
    %c0_i32_0 = arith.constant 0 : i32
    %c0_i32_1 = arith.constant 0 : i32
    return %c0_i32, %c0_i32_0 : i32, i32
  }
  func.func @transform_3(%arg0: i32) -> (i32, i32) {
    %c0_i32 = arith.constant 0 : i32
    %c0_i32_0 = arith.constant 0 : i32
    return %arg0, %c0_i32 : i32, i32
  }
}

module attributes {stable_mosaic.version = 11 : i64} {
  func.func @_matmul_stats_kernel(%arg0: i32, %arg1: memref<128x288xbf16, #tpu.memory_space<vmem>>, %arg2: memref<288x32xbf16, #tpu.memory_space<vmem>>, %arg3: memref<128x32xf32, #tpu.memory_space<vmem>>, %arg4: memref<8x32xf32, #tpu.memory_space<vmem>>) attributes {dimension_semantics = [#tpu.dimension_semantics<parallel>], iteration_bounds = array<i64: 1>, scalar_prefetch = 0 : i64, scratch_operands = 0 : i64, tpu.core_type = #tpu.core_type<tc>, window_params = [{transform_indices = @transform_0, window_bounds = array<i64: 128, 288>}, {pipeline_mode = #tpu.pipeline_mode<synchronous>, transform_indices = @transform_1, window_bounds = array<i64: 288, 32>}, {transform_indices = @transform_2, window_bounds = array<i64: 128, 32>}, {transform_indices = @transform_3, window_bounds = array<i64: 8, 32>}]} {
    %c0 = arith.constant 0 : index
    %c0_0 = arith.constant 0 : index
    %0 = vector.load %arg1[%c0, %c0_0] : memref<128x288xbf16, #tpu.memory_space<vmem>>, vector<128x288xbf16>
    %c0_1 = arith.constant 0 : index
    %c0_2 = arith.constant 0 : index
    %1 = vector.load %arg2[%c0_1, %c0_2] : memref<288x32xbf16, #tpu.memory_space<vmem>>, vector<288x32xbf16>
    %cst = arith.constant dense<0.000000e+00> : vector<128x32xf32>
    %2 = tpu.matmul %0, %1, %cst {dimension_numbers = #tpu.dot_dimension_numbers<[1], [0], [0], [1], [0, 0, 1, 1], [], []>} : vector<128x288xbf16>, vector<288x32xbf16>, vector<128x32xf32> -> vector<128x32xf32>
    %c0_3 = arith.constant 0 : index
    %c0_4 = arith.constant 0 : index
    %3 = vector.load %arg3[%c0_3, %c0_4] : memref<128x32xf32, #tpu.memory_space<vmem>>, vector<128x32xf32>
    tpu.vector_store %arg3[%c0_3, %c0_4], %2 {strides = array<i32>} : memref<128x32xf32, #tpu.memory_space<vmem>>, vector<128x32xf32>,
    %cst_5 = arith.constant dense<0.000000e+00> : vector<32xf32>
    %4 = vector.multi_reduction <add>, %2, %cst_5 [0] : vector<128x32xf32> to vector<32xf32>
    %5 = vector.shape_cast %4 : vector<32xf32> to vector<1x32xf32>
    %6 = arith.mulf %2, %2 : vector<128x32xf32>
    %cst_6 = arith.constant dense<0.000000e+00> : vector<32xf32>
    %7 = vector.multi_reduction <add>, %6, %cst_6 [0] : vector<128x32xf32> to vector<32xf32>
    %8 = vector.shape_cast %7 : vector<32xf32> to vector<1x32xf32>
    %cst_7 = arith.constant 0.000000e+00 : f32
    %9 = vector.broadcast %cst_7 : f32 to vector<6x32xf32>
    %10 = tpu.concatenate %5, %8, %9 in 0 : vector<1x32xf32>, vector<1x32xf32>, vector<6x32xf32> -> vector<8x32xf32>
    %c0_8 = arith.constant 0 : index
    %c0_9 = arith.constant 0 : index
    %11 = vector.load %arg4[%c0_8, %c0_9] : memref<8x32xf32, #tpu.memory_space<vmem>>, vector<8x32xf32>
    tpu.vector_store %arg4[%c0_8, %c0_9], %10 {strides = array<i32>} : memref<8x32xf32, #tpu.memory_space<vmem>>, vector<8x32xf32>,
    return
  }
  func.func @transform_0(%arg0: i32) -> (i32, i32) {
    %c0_i32 = arith.constant 0 : i32
    %c0_i32_0 = arith.constant 0 : i32
    return %arg0, %c0_i32 : i32, i32
  }
  func.func @transform_1(%arg0: i32) -> (i32, i32) {
    %c0_i32 = arith.constant 0 : i32
    %c0_i32_0 = arith.constant 0 : i32
    %c0_i32_1 = arith.constant 0 : i32
    return %c0_i32, %c0_i32_0 : i32, i32
  }
  func.func @transform_2(%arg0: i32) -> (i32, i32) {
    %c0_i32 = arith.constant 0 : i32
    %c0_i32_0 = arith.constant 0 : i32
    return %arg0, %c0_i32 : i32, i32
  }
  func.func @transform_3(%arg0: i32) -> (i32, i32) {
    %c0_i32 = arith.constant 0 : i32
    %c0_i32_0 = arith.constant 0 : i32
    return %arg0, %c0_i32 : i32, i32
  }
}

module attributes {stable_mosaic.version = 11 : i64} {
  func.func @_scale_shift_relu_kernel(%arg0: i32, %arg1: memref<32x64xf32, #tpu.memory_space<vmem>>, %arg2: memref<1x64xf32, #tpu.memory_space<vmem>>, %arg3: memref<1x64xf32, #tpu.memory_space<vmem>>, %arg4: memref<32x64xbf16, #tpu.memory_space<vmem>>) attributes {dimension_semantics = [#tpu.dimension_semantics<parallel>], iteration_bounds = array<i64: 1>, scalar_prefetch = 0 : i64, scratch_operands = 0 : i64, tpu.core_type = #tpu.core_type<tc>, window_params = [{transform_indices = @transform_0, window_bounds = array<i64: 32, 64>}, {pipeline_mode = #tpu.pipeline_mode<synchronous>, transform_indices = @transform_1, window_bounds = array<i64: 1, 64>}, {pipeline_mode = #tpu.pipeline_mode<synchronous>, transform_indices = @transform_2, window_bounds = array<i64: 1, 64>}, {transform_indices = @transform_3, window_bounds = array<i64: 32, 64>}]} {
    %c0 = arith.constant 0 : index
    %c0_0 = arith.constant 0 : index
    %0 = vector.load %arg1[%c0, %c0_0] : memref<32x64xf32, #tpu.memory_space<vmem>>, vector<32x64xf32>
    %c0_1 = arith.constant 0 : index
    %c0_2 = arith.constant 0 : index
    %1 = vector.load %arg2[%c0_1, %c0_2] : memref<1x64xf32, #tpu.memory_space<vmem>>, vector<1x64xf32>
    %2 = vector.broadcast %1 : vector<1x64xf32> to vector<32x64xf32>
    %3 = arith.mulf %0, %2 : vector<32x64xf32>
    %c0_3 = arith.constant 0 : index
    %c0_4 = arith.constant 0 : index
    %4 = vector.load %arg3[%c0_3, %c0_4] : memref<1x64xf32, #tpu.memory_space<vmem>>, vector<1x64xf32>
    %5 = vector.broadcast %4 : vector<1x64xf32> to vector<32x64xf32>
    %6 = arith.addf %3, %5 : vector<32x64xf32>
    %cst = arith.constant 0.000000e+00 : f32
    %7 = vector.broadcast %cst : f32 to vector<32x64xf32>
    %8 = arith.maximumf %6, %7 : vector<32x64xf32>
    %9 = arith.truncf %8 : vector<32x64xf32> to vector<32x64xbf16>
    %c0_5 = arith.constant 0 : index
    %c0_6 = arith.constant 0 : index
    %10 = vector.load %arg4[%c0_5, %c0_6] : memref<32x64xbf16, #tpu.memory_space<vmem>>, vector<32x64xbf16>
    tpu.vector_store %arg4[%c0_5, %c0_6], %9 {strides = array<i32>} : memref<32x64xbf16, #tpu.memory_space<vmem>>, vector<32x64xbf16>,
    return
  }
  func.func @transform_0(%arg0: i32) -> (i32, i32) {
    %c0_i32 = arith.constant 0 : i32
    %c0_i32_0 = arith.constant 0 : i32
    return %arg0, %c0_i32 : i32, i32
  }
  func.func @transform_1(%arg0: i32) -> (i32, i32) {
    %c0_i32 = arith.constant 0 : i32
    %c0_i32_0 = arith.constant 0 : i32
    %c0_i32_1 = arith.constant 0 : i32
    return %c0_i32, %c0_i32_0 : i32, i32
  }
  func.func @transform_2(%arg0: i32) -> (i32, i32) {
    %c0_i32 = arith.constant 0 : i32
    %c0_i32_0 = arith.constant 0 : i32
    %c0_i32_1 = arith.constant 0 : i32
    return %c0_i32, %c0_i32_0 : i32, i32
  }
  func.func @transform_3(%arg0: i32) -> (i32, i32) {
    %c0_i32 = arith.constant 0 : i32
    %c0_i32_0 = arith.constant 0 : i32
    return %arg0, %c0_i32 : i32, i32
  }
}

module attributes {stable_mosaic.version = 11 : i64} {
  func.func @_matmul_stats_kernel(%arg0: i32, %arg1: memref<32x288xbf16, #tpu.memory_space<vmem>>, %arg2: memref<288x64xbf16, #tpu.memory_space<vmem>>, %arg3: memref<32x64xf32, #tpu.memory_space<vmem>>, %arg4: memref<8x64xf32, #tpu.memory_space<vmem>>) attributes {dimension_semantics = [#tpu.dimension_semantics<parallel>], iteration_bounds = array<i64: 1>, scalar_prefetch = 0 : i64, scratch_operands = 0 : i64, tpu.core_type = #tpu.core_type<tc>, window_params = [{transform_indices = @transform_0, window_bounds = array<i64: 32, 288>}, {pipeline_mode = #tpu.pipeline_mode<synchronous>, transform_indices = @transform_1, window_bounds = array<i64: 288, 64>}, {transform_indices = @transform_2, window_bounds = array<i64: 32, 64>}, {transform_indices = @transform_3, window_bounds = array<i64: 8, 64>}]} {
    %c0 = arith.constant 0 : index
    %c0_0 = arith.constant 0 : index
    %0 = vector.load %arg1[%c0, %c0_0] : memref<32x288xbf16, #tpu.memory_space<vmem>>, vector<32x288xbf16>
    %c0_1 = arith.constant 0 : index
    %c0_2 = arith.constant 0 : index
    %1 = vector.load %arg2[%c0_1, %c0_2] : memref<288x64xbf16, #tpu.memory_space<vmem>>, vector<288x64xbf16>
    %cst = arith.constant dense<0.000000e+00> : vector<32x64xf32>
    %2 = tpu.matmul %0, %1, %cst {dimension_numbers = #tpu.dot_dimension_numbers<[1], [0], [0], [1], [0, 0, 1, 1], [], []>} : vector<32x288xbf16>, vector<288x64xbf16>, vector<32x64xf32> -> vector<32x64xf32>
    %c0_3 = arith.constant 0 : index
    %c0_4 = arith.constant 0 : index
    %3 = vector.load %arg3[%c0_3, %c0_4] : memref<32x64xf32, #tpu.memory_space<vmem>>, vector<32x64xf32>
    tpu.vector_store %arg3[%c0_3, %c0_4], %2 {strides = array<i32>} : memref<32x64xf32, #tpu.memory_space<vmem>>, vector<32x64xf32>,
    %cst_5 = arith.constant dense<0.000000e+00> : vector<64xf32>
    %4 = vector.multi_reduction <add>, %2, %cst_5 [0] : vector<32x64xf32> to vector<64xf32>
    %5 = vector.shape_cast %4 : vector<64xf32> to vector<1x64xf32>
    %6 = arith.mulf %2, %2 : vector<32x64xf32>
    %cst_6 = arith.constant dense<0.000000e+00> : vector<64xf32>
    %7 = vector.multi_reduction <add>, %6, %cst_6 [0] : vector<32x64xf32> to vector<64xf32>
    %8 = vector.shape_cast %7 : vector<64xf32> to vector<1x64xf32>
    %cst_7 = arith.constant 0.000000e+00 : f32
    %9 = vector.broadcast %cst_7 : f32 to vector<6x64xf32>
    %10 = tpu.concatenate %5, %8, %9 in 0 : vector<1x64xf32>, vector<1x64xf32>, vector<6x64xf32> -> vector<8x64xf32>
    %c0_8 = arith.constant 0 : index
    %c0_9 = arith.constant 0 : index
    %11 = vector.load %arg4[%c0_8, %c0_9] : memref<8x64xf32, #tpu.memory_space<vmem>>, vector<8x64xf32>
    tpu.vector_store %arg4[%c0_8, %c0_9], %10 {strides = array<i32>} : memref<8x64xf32, #tpu.memory_space<vmem>>, vector<8x64xf32>,
    return
  }
  func.func @transform_0(%arg0: i32) -> (i32, i32) {
    %c0_i32 = arith.constant 0 : i32
    %c0_i32_0 = arith.constant 0 : i32
    return %arg0, %c0_i32 : i32, i32
  }
  func.func @transform_1(%arg0: i32) -> (i32, i32) {
    %c0_i32 = arith.constant 0 : i32
    %c0_i32_0 = arith.constant 0 : i32
    %c0_i32_1 = arith.constant 0 : i32
    return %c0_i32, %c0_i32_0 : i32, i32
  }
  func.func @transform_2(%arg0: i32) -> (i32, i32) {
    %c0_i32 = arith.constant 0 : i32
    %c0_i32_0 = arith.constant 0 : i32
    return %arg0, %c0_i32 : i32, i32
  }
  func.func @transform_3(%arg0: i32) -> (i32, i32) {
    %c0_i32 = arith.constant 0 : i32
    %c0_i32_0 = arith.constant 0 : i32
    return %arg0, %c0_i32 : i32, i32
  }
}

module attributes {stable_mosaic.version = 11 : i64} {
  func.func @_matmul_stats_kernel(%arg0: i32, %arg1: memref<32x576xbf16, #tpu.memory_space<vmem>>, %arg2: memref<576x64xbf16, #tpu.memory_space<vmem>>, %arg3: memref<32x64xf32, #tpu.memory_space<vmem>>, %arg4: memref<8x64xf32, #tpu.memory_space<vmem>>) attributes {dimension_semantics = [#tpu.dimension_semantics<parallel>], iteration_bounds = array<i64: 1>, scalar_prefetch = 0 : i64, scratch_operands = 0 : i64, tpu.core_type = #tpu.core_type<tc>, window_params = [{transform_indices = @transform_0, window_bounds = array<i64: 32, 576>}, {pipeline_mode = #tpu.pipeline_mode<synchronous>, transform_indices = @transform_1, window_bounds = array<i64: 576, 64>}, {transform_indices = @transform_2, window_bounds = array<i64: 32, 64>}, {transform_indices = @transform_3, window_bounds = array<i64: 8, 64>}]} {
    %c0 = arith.constant 0 : index
    %c0_0 = arith.constant 0 : index
    %0 = vector.load %arg1[%c0, %c0_0] : memref<32x576xbf16, #tpu.memory_space<vmem>>, vector<32x576xbf16>
    %c0_1 = arith.constant 0 : index
    %c0_2 = arith.constant 0 : index
    %1 = vector.load %arg2[%c0_1, %c0_2] : memref<576x64xbf16, #tpu.memory_space<vmem>>, vector<576x64xbf16>
    %cst = arith.constant dense<0.000000e+00> : vector<32x64xf32>
    %2 = tpu.matmul %0, %1, %cst {dimension_numbers = #tpu.dot_dimension_numbers<[1], [0], [0], [1], [0, 0, 1, 1], [], []>} : vector<32x576xbf16>, vector<576x64xbf16>, vector<32x64xf32> -> vector<32x64xf32>
    %c0_3 = arith.constant 0 : index
    %c0_4 = arith.constant 0 : index
    %3 = vector.load %arg3[%c0_3, %c0_4] : memref<32x64xf32, #tpu.memory_space<vmem>>, vector<32x64xf32>
    tpu.vector_store %arg3[%c0_3, %c0_4], %2 {strides = array<i32>} : memref<32x64xf32, #tpu.memory_space<vmem>>, vector<32x64xf32>,
    %cst_5 = arith.constant dense<0.000000e+00> : vector<64xf32>
    %4 = vector.multi_reduction <add>, %2, %cst_5 [0] : vector<32x64xf32> to vector<64xf32>
    %5 = vector.shape_cast %4 : vector<64xf32> to vector<1x64xf32>
    %6 = arith.mulf %2, %2 : vector<32x64xf32>
    %cst_6 = arith.constant dense<0.000000e+00> : vector<64xf32>
    %7 = vector.multi_reduction <add>, %6, %cst_6 [0] : vector<32x64xf32> to vector<64xf32>
    %8 = vector.shape_cast %7 : vector<64xf32> to vector<1x64xf32>
    %cst_7 = arith.constant 0.000000e+00 : f32
    %9 = vector.broadcast %cst_7 : f32 to vector<6x64xf32>
    %10 = tpu.concatenate %5, %8, %9 in 0 : vector<1x64xf32>, vector<1x64xf32>, vector<6x64xf32> -> vector<8x64xf32>
    %c0_8 = arith.constant 0 : index
    %c0_9 = arith.constant 0 : index
    %11 = vector.load %arg4[%c0_8, %c0_9] : memref<8x64xf32, #tpu.memory_space<vmem>>, vector<8x64xf32>
    tpu.vector_store %arg4[%c0_8, %c0_9], %10 {strides = array<i32>} : memref<8x64xf32, #tpu.memory_space<vmem>>, vector<8x64xf32>,
    return
  }
  func.func @transform_0(%arg0: i32) -> (i32, i32) {
    %c0_i32 = arith.constant 0 : i32
    %c0_i32_0 = arith.constant 0 : i32
    return %arg0, %c0_i32 : i32, i32
  }
  func.func @transform_1(%arg0: i32) -> (i32, i32) {
    %c0_i32 = arith.constant 0 : i32
    %c0_i32_0 = arith.constant 0 : i32
    %c0_i32_1 = arith.constant 0 : i32
    return %c0_i32, %c0_i32_0 : i32, i32
  }
  func.func @transform_2(%arg0: i32) -> (i32, i32) {
    %c0_i32 = arith.constant 0 : i32
    %c0_i32_0 = arith.constant 0 : i32
    return %arg0, %c0_i32 : i32, i32
  }
  func.func @transform_3(%arg0: i32) -> (i32, i32) {
    %c0_i32 = arith.constant 0 : i32
    %c0_i32_0 = arith.constant 0 : i32
    return %arg0, %c0_i32 : i32, i32
  }
}

module attributes {stable_mosaic.version = 11 : i64} {
  func.func @_matmul_stats_kernel(%arg0: i32, %arg1: memref<16x576xbf16, #tpu.memory_space<vmem>>, %arg2: memref<576x64xbf16, #tpu.memory_space<vmem>>, %arg3: memref<16x64xf32, #tpu.memory_space<vmem>>, %arg4: memref<8x64xf32, #tpu.memory_space<vmem>>) attributes {dimension_semantics = [#tpu.dimension_semantics<parallel>], iteration_bounds = array<i64: 1>, scalar_prefetch = 0 : i64, scratch_operands = 0 : i64, tpu.core_type = #tpu.core_type<tc>, window_params = [{transform_indices = @transform_0, window_bounds = array<i64: 16, 576>}, {pipeline_mode = #tpu.pipeline_mode<synchronous>, transform_indices = @transform_1, window_bounds = array<i64: 576, 64>}, {transform_indices = @transform_2, window_bounds = array<i64: 16, 64>}, {transform_indices = @transform_3, window_bounds = array<i64: 8, 64>}]} {
    %c0 = arith.constant 0 : index
    %c0_0 = arith.constant 0 : index
    %0 = vector.load %arg1[%c0, %c0_0] : memref<16x576xbf16, #tpu.memory_space<vmem>>, vector<16x576xbf16>
    %c0_1 = arith.constant 0 : index
    %c0_2 = arith.constant 0 : index
    %1 = vector.load %arg2[%c0_1, %c0_2] : memref<576x64xbf16, #tpu.memory_space<vmem>>, vector<576x64xbf16>
    %cst = arith.constant dense<0.000000e+00> : vector<16x64xf32>
    %2 = tpu.matmul %0, %1, %cst {dimension_numbers = #tpu.dot_dimension_numbers<[1], [0], [0], [1], [0, 0, 1, 1], [], []>} : vector<16x576xbf16>, vector<576x64xbf16>, vector<16x64xf32> -> vector<16x64xf32>
    %c0_3 = arith.constant 0 : index
    %c0_4 = arith.constant 0 : index
    %3 = vector.load %arg3[%c0_3, %c0_4] : memref<16x64xf32, #tpu.memory_space<vmem>>, vector<16x64xf32>
    tpu.vector_store %arg3[%c0_3, %c0_4], %2 {strides = array<i32>} : memref<16x64xf32, #tpu.memory_space<vmem>>, vector<16x64xf32>,
    %cst_5 = arith.constant dense<0.000000e+00> : vector<64xf32>
    %4 = vector.multi_reduction <add>, %2, %cst_5 [0] : vector<16x64xf32> to vector<64xf32>
    %5 = vector.shape_cast %4 : vector<64xf32> to vector<1x64xf32>
    %6 = arith.mulf %2, %2 : vector<16x64xf32>
    %cst_6 = arith.constant dense<0.000000e+00> : vector<64xf32>
    %7 = vector.multi_reduction <add>, %6, %cst_6 [0] : vector<16x64xf32> to vector<64xf32>
    %8 = vector.shape_cast %7 : vector<64xf32> to vector<1x64xf32>
    %cst_7 = arith.constant 0.000000e+00 : f32
    %9 = vector.broadcast %cst_7 : f32 to vector<6x64xf32>
    %10 = tpu.concatenate %5, %8, %9 in 0 : vector<1x64xf32>, vector<1x64xf32>, vector<6x64xf32> -> vector<8x64xf32>
    %c0_8 = arith.constant 0 : index
    %c0_9 = arith.constant 0 : index
    %11 = vector.load %arg4[%c0_8, %c0_9] : memref<8x64xf32, #tpu.memory_space<vmem>>, vector<8x64xf32>
    tpu.vector_store %arg4[%c0_8, %c0_9], %10 {strides = array<i32>} : memref<8x64xf32, #tpu.memory_space<vmem>>, vector<8x64xf32>,
    return
  }
  func.func @transform_0(%arg0: i32) -> (i32, i32) {
    %c0_i32 = arith.constant 0 : i32
    %c0_i32_0 = arith.constant 0 : i32
    return %arg0, %c0_i32 : i32, i32
  }
  func.func @transform_1(%arg0: i32) -> (i32, i32) {
    %c0_i32 = arith.constant 0 : i32
    %c0_i32_0 = arith.constant 0 : i32
    %c0_i32_1 = arith.constant 0 : i32
    return %c0_i32, %c0_i32_0 : i32, i32
  }
  func.func @transform_2(%arg0: i32) -> (i32, i32) {
    %c0_i32 = arith.constant 0 : i32
    %c0_i32_0 = arith.constant 0 : i32
    return %arg0, %c0_i32 : i32, i32
  }
  func.func @transform_3(%arg0: i32) -> (i32, i32) {
    %c0_i32 = arith.constant 0 : i32
    %c0_i32_0 = arith.constant 0 : i32
    return %arg0, %c0_i32 : i32, i32
  }
}

module attributes {stable_mosaic.version = 11 : i64} {
  func.func @_scale_shift_relu_kernel(%arg0: i32, %arg1: memref<16x64xf32, #tpu.memory_space<vmem>>, %arg2: memref<1x64xf32, #tpu.memory_space<vmem>>, %arg3: memref<1x64xf32, #tpu.memory_space<vmem>>, %arg4: memref<16x64xbf16, #tpu.memory_space<vmem>>) attributes {dimension_semantics = [#tpu.dimension_semantics<parallel>], iteration_bounds = array<i64: 1>, scalar_prefetch = 0 : i64, scratch_operands = 0 : i64, tpu.core_type = #tpu.core_type<tc>, window_params = [{transform_indices = @transform_0, window_bounds = array<i64: 16, 64>}, {pipeline_mode = #tpu.pipeline_mode<synchronous>, transform_indices = @transform_1, window_bounds = array<i64: 1, 64>}, {pipeline_mode = #tpu.pipeline_mode<synchronous>, transform_indices = @transform_2, window_bounds = array<i64: 1, 64>}, {transform_indices = @transform_3, window_bounds = array<i64: 16, 64>}]} {
    %c0 = arith.constant 0 : index
    %c0_0 = arith.constant 0 : index
    %0 = vector.load %arg1[%c0, %c0_0] : memref<16x64xf32, #tpu.memory_space<vmem>>, vector<16x64xf32>
    %c0_1 = arith.constant 0 : index
    %c0_2 = arith.constant 0 : index
    %1 = vector.load %arg2[%c0_1, %c0_2] : memref<1x64xf32, #tpu.memory_space<vmem>>, vector<1x64xf32>
    %2 = vector.broadcast %1 : vector<1x64xf32> to vector<16x64xf32>
    %3 = arith.mulf %0, %2 : vector<16x64xf32>
    %c0_3 = arith.constant 0 : index
    %c0_4 = arith.constant 0 : index
    %4 = vector.load %arg3[%c0_3, %c0_4] : memref<1x64xf32, #tpu.memory_space<vmem>>, vector<1x64xf32>
    %5 = vector.broadcast %4 : vector<1x64xf32> to vector<16x64xf32>
    %6 = arith.addf %3, %5 : vector<16x64xf32>
    %cst = arith.constant 0.000000e+00 : f32
    %7 = vector.broadcast %cst : f32 to vector<16x64xf32>
    %8 = arith.maximumf %6, %7 : vector<16x64xf32>
    %9 = arith.truncf %8 : vector<16x64xf32> to vector<16x64xbf16>
    %c0_5 = arith.constant 0 : index
    %c0_6 = arith.constant 0 : index
    %10 = vector.load %arg4[%c0_5, %c0_6] : memref<16x64xbf16, #tpu.memory_space<vmem>>, vector<16x64xbf16>
    tpu.vector_store %arg4[%c0_5, %c0_6], %9 {strides = array<i32>} : memref<16x64xbf16, #tpu.memory_space<vmem>>, vector<16x64xbf16>,
    return
  }
  func.func @transform_0(%arg0: i32) -> (i32, i32) {
    %c0_i32 = arith.constant 0 : i32
    %c0_i32_0 = arith.constant 0 : i32
    return %arg0, %c0_i32 : i32, i32
  }
  func.func @transform_1(%arg0: i32) -> (i32, i32) {
    %c0_i32 = arith.constant 0 : i32
    %c0_i32_0 = arith.constant 0 : i32
    %c0_i32_1 = arith.constant 0 : i32
    return %c0_i32, %c0_i32_0 : i32, i32
  }
  func.func @transform_2(%arg0: i32) -> (i32, i32) {
    %c0_i32 = arith.constant 0 : i32
    %c0_i32_0 = arith.constant 0 : i32
    %c0_i32_1 = arith.constant 0 : i32
    return %c0_i32, %c0_i32_0 : i32, i32
  }
  func.func @transform_3(%arg0: i32) -> (i32, i32) {
    %c0_i32 = arith.constant 0 : i32
    %c0_i32_0 = arith.constant 0 : i32
    return %arg0, %c0_i32 : i32, i32
  }
}

module attributes {stable_mosaic.version = 11 : i64} {
  func.func @_head_matmul_kernel(%arg0: i32, %arg1: memref<16x64xbf16, #tpu.memory_space<vmem>>, %arg2: memref<64x128xbf16, #tpu.memory_space<vmem>>, %arg3: memref<1x128xf32, #tpu.memory_space<vmem>>, %arg4: memref<16x128xf32, #tpu.memory_space<vmem>>) attributes {dimension_semantics = [#tpu.dimension_semantics<parallel>], iteration_bounds = array<i64: 1>, scalar_prefetch = 0 : i64, scratch_operands = 0 : i64, tpu.core_type = #tpu.core_type<tc>, window_params = [{transform_indices = @transform_0, window_bounds = array<i64: 16, 64>}, {pipeline_mode = #tpu.pipeline_mode<synchronous>, transform_indices = @transform_1, window_bounds = array<i64: 64, 128>}, {pipeline_mode = #tpu.pipeline_mode<synchronous>, transform_indices = @transform_2, window_bounds = array<i64: 1, 128>}, {transform_indices = @transform_3, window_bounds = array<i64: 16, 128>}]} {
    %c0 = arith.constant 0 : index
    %c0_0 = arith.constant 0 : index
    %0 = vector.load %arg1[%c0, %c0_0] : memref<16x64xbf16, #tpu.memory_space<vmem>>, vector<16x64xbf16>
    %c0_1 = arith.constant 0 : index
    %c0_2 = arith.constant 0 : index
    %1 = vector.load %arg2[%c0_1, %c0_2] : memref<64x128xbf16, #tpu.memory_space<vmem>>, vector<64x128xbf16>
    %cst = arith.constant dense<0.000000e+00> : vector<16x128xf32>
    %2 = tpu.matmul %0, %1, %cst {dimension_numbers = #tpu.dot_dimension_numbers<[1], [0], [0], [1], [0, 0, 1, 1], [], []>} : vector<16x64xbf16>, vector<64x128xbf16>, vector<16x128xf32> -> vector<16x128xf32>
    %c0_3 = arith.constant 0 : index
    %c0_4 = arith.constant 0 : index
    %3 = vector.load %arg3[%c0_3, %c0_4] : memref<1x128xf32, #tpu.memory_space<vmem>>, vector<1x128xf32>
    %4 = vector.broadcast %3 : vector<1x128xf32> to vector<16x128xf32>
    %5 = arith.addf %2, %4 : vector<16x128xf32>
    %c0_5 = arith.constant 0 : index
    %c0_6 = arith.constant 0 : index
    %6 = vector.load %arg4[%c0_5, %c0_6] : memref<16x128xf32, #tpu.memory_space<vmem>>, vector<16x128xf32>
    tpu.vector_store %arg4[%c0_5, %c0_6], %5 {strides = array<i32>} : memref<16x128xf32, #tpu.memory_space<vmem>>, vector<16x128xf32>,
    return
  }
  func.func @transform_0(%arg0: i32) -> (i32, i32) {
    %c0_i32 = arith.constant 0 : i32
    %c0_i32_0 = arith.constant 0 : i32
    return %arg0, %c0_i32 : i32, i32
  }
  func.func @transform_1(%arg0: i32) -> (i32, i32) {
    %c0_i32 = arith.constant 0 : i32
    %c0_i32_0 = arith.constant 0 : i32
    %c0_i32_1 = arith.constant 0 : i32
    return %c0_i32, %c0_i32_0 : i32, i32
  }
  func.func @transform_2(%arg0: i32) -> (i32, i32) {
    %c0_i32 = arith.constant 0 : i32
    %c0_i32_0 = arith.constant 0 : i32
    %c0_i32_1 = arith.constant 0 : i32
    return %c0_i32, %c0_i32_0 : i32, i32
  }
  func.func @transform_3(%arg0: i32) -> (i32, i32) {
    %c0_i32 = arith.constant 0 : i32
    %c0_i32_0 = arith.constant 0 : i32
    return %arg0, %c0_i32 : i32, i32
  }
}

module attributes {stable_mosaic.version = 11 : i64} {
  func.func @_head_matmul_kernel(%arg0: i32, %arg1: memref<32x64xbf16, #tpu.memory_space<vmem>>, %arg2: memref<64x128xbf16, #tpu.memory_space<vmem>>, %arg3: memref<1x128xf32, #tpu.memory_space<vmem>>, %arg4: memref<32x128xf32, #tpu.memory_space<vmem>>) attributes {dimension_semantics = [#tpu.dimension_semantics<parallel>], iteration_bounds = array<i64: 1>, scalar_prefetch = 0 : i64, scratch_operands = 0 : i64, tpu.core_type = #tpu.core_type<tc>, window_params = [{transform_indices = @transform_0, window_bounds = array<i64: 32, 64>}, {pipeline_mode = #tpu.pipeline_mode<synchronous>, transform_indices = @transform_1, window_bounds = array<i64: 64, 128>}, {pipeline_mode = #tpu.pipeline_mode<synchronous>, transform_indices = @transform_2, window_bounds = array<i64: 1, 128>}, {transform_indices = @transform_3, window_bounds = array<i64: 32, 128>}]} {
    %c0 = arith.constant 0 : index
    %c0_0 = arith.constant 0 : index
    %0 = vector.load %arg1[%c0, %c0_0] : memref<32x64xbf16, #tpu.memory_space<vmem>>, vector<32x64xbf16>
    %c0_1 = arith.constant 0 : index
    %c0_2 = arith.constant 0 : index
    %1 = vector.load %arg2[%c0_1, %c0_2] : memref<64x128xbf16, #tpu.memory_space<vmem>>, vector<64x128xbf16>
    %cst = arith.constant dense<0.000000e+00> : vector<32x128xf32>
    %2 = tpu.matmul %0, %1, %cst {dimension_numbers = #tpu.dot_dimension_numbers<[1], [0], [0], [1], [0, 0, 1, 1], [], []>} : vector<32x64xbf16>, vector<64x128xbf16>, vector<32x128xf32> -> vector<32x128xf32>
    %c0_3 = arith.constant 0 : index
    %c0_4 = arith.constant 0 : index
    %3 = vector.load %arg3[%c0_3, %c0_4] : memref<1x128xf32, #tpu.memory_space<vmem>>, vector<1x128xf32>
    %4 = vector.broadcast %3 : vector<1x128xf32> to vector<32x128xf32>
    %5 = arith.addf %2, %4 : vector<32x128xf32>
    %c0_5 = arith.constant 0 : index
    %c0_6 = arith.constant 0 : index
    %6 = vector.load %arg4[%c0_5, %c0_6] : memref<32x128xf32, #tpu.memory_space<vmem>>, vector<32x128xf32>
    tpu.vector_store %arg4[%c0_5, %c0_6], %5 {strides = array<i32>} : memref<32x128xf32, #tpu.memory_space<vmem>>, vector<32x128xf32>,
    return
  }
  func.func @transform_0(%arg0: i32) -> (i32, i32) {
    %c0_i32 = arith.constant 0 : i32
    %c0_i32_0 = arith.constant 0 : i32
    return %arg0, %c0_i32 : i32, i32
  }
  func.func @transform_1(%arg0: i32) -> (i32, i32) {
    %c0_i32 = arith.constant 0 : i32
    %c0_i32_0 = arith.constant 0 : i32
    %c0_i32_1 = arith.constant 0 : i32
    return %c0_i32, %c0_i32_0 : i32, i32
  }
  func.func @transform_2(%arg0: i32) -> (i32, i32) {
    %c0_i32 = arith.constant 0 : i32
    %c0_i32_0 = arith.constant 0 : i32
    %c0_i32_1 = arith.constant 0 : i32
    return %c0_i32, %c0_i32_0 : i32, i32
  }
  func.func @transform_3(%arg0: i32) -> (i32, i32) {
    %c0_i32 = arith.constant 0 : i32
    %c0_i32_0 = arith.constant 0 : i32
    return %arg0, %c0_i32 : i32, i32
  }
}

</mosaic_0001>

<llo_original>
// kernel: slim_forward.30
$region0: #{slim_forward.30}
  #allocation0 [shape = 'u32[]', space=smem, size = 0x4, offset = 0x4, fixed_abs, tag = 'smem constant byte address 0x4 - core index']
  #allocation1 [shape = 'u32[72,128]{1,0:T(1,128)}', space=vmem, size = 0x9000, scoped, tag = 'internal scratch']
  %s0 = inlined_call_operand.vmem [shape: f32[512,16], index: 0, kind: input, shape index: {}]
  %s1 = inlined_call_operand.vmem [shape: f32[1,16], index: 1, kind: input, shape index: {}]
  %s2 = inlined_call_operand.vmem [shape: f32[1,16], index: 2, kind: input, shape index: {}]
  %s3 = inlined_call_operand.vmem [shape: bf16[512,16], index: 3, kind: output, shape index: {}]
  %s4 = sld [smem:[#allocation0]]
  $region22: #{slim_forward.30} parent=0
    _
  %s6 = ssub.s32 1, %s4
  %s7 = scalar_select 0, %s6, %s4
  // Predicated region
  $region2: #{slim_forward.30} parent=0 // pred_check
    _
  $region3: #{slim_forward.30} parent=0 // pred_check_branch
    %9 = sbr.rel (0) target = $region5
  $region4: #{slim_forward.30} parent=0 // pred_region
    _
  $region5: #{slim_forward.30} parent=0 // pred_fallthru
    _
  // Predicated region
  $region6: #{slim_forward.30} parent=0 // pred_check
    _
  $region7: #{slim_forward.30} parent=0 // pred_check_branch
    %11 = sbr.rel (0) target = $region9
  $region8: #{slim_forward.30} parent=0 // pred_region
    _
  $region9: #{slim_forward.30} parent=0 // pred_fallthru
    _
  // Predicated region
  $region10: #{slim_forward.30} parent=0 // pred_check
    _
  $region11: #{slim_forward.30} parent=0 // pred_check_branch
    %13 = sbr.rel (0) target = $region13
  $region12: #{slim_forward.30} parent=0 // pred_region
    _
  $region13: #{slim_forward.30} parent=0 // pred_fallthru
    _
  %v14 = vld [vmem:[%s0] sm:$0xff]
  %v15 = vld [vmem:[%s0 + $0x8] sm:$0xff]
  %v16 = vld [vmem:[%s0 + $0x10] sm:$0xff]
  %v17 = vld [vmem:[%s0 + $0x18] sm:$0xff]
  %v18 = vld [vmem:[%s0 + $0x20] sm:$0xff]
  %v19 = vld [vmem:[%s0 + $0x28] sm:$0xff]
  %v20 = vld [vmem:[%s0 + $0x30] sm:$0xff]
  %v21 = vld [vmem:[%s0 + $0x38] sm:$0xff]
  %v22 = vld [vmem:[%s0 + $0x40] sm:$0xff]
  %v23 = vld [vmem:[%s0 + $0x48] sm:$0xff]
  %v24 = vld [vmem:[%s0 + $0x50] sm:$0xff]
  %v25 = vld [vmem:[%s0 + $0x58] sm:$0xff]
  %v26 = vld [vmem:[%s0 + $0x60] sm:$0xff]
  %v27 = vld [vmem:[%s0 + $0x68] sm:$0xff]
  %v28 = vld [vmem:[%s0 + $0x70] sm:$0xff]
  %v29 = vld [vmem:[%s0 + $0x78] sm:$0xff]
  %v30 = vld [vmem:[%s0 + $0x80] sm:$0xff]
  %v31 = vld [vmem:[%s0 + $0x88] sm:$0xff]
  %v32 = vld [vmem:[%s0 + $0x90] sm:$0xff]
  %v33 = vld [vmem:[%s0 + $0x98] sm:$0xff]
  %v34 = vld [vmem:[%s0 + $0xa0] sm:$0xff]
  %v35 = vld [vmem:[%s0 + $0xa8] sm:$0xff]
  %v36 = vld [vmem:[%s0 + $0xb0] sm:$0xff]
  %v37 = vld [vmem:[%s0 + $0xb8] sm:$0xff]
  %v38 = vld [vmem:[%s0 + $0xc0] sm:$0xff]
  %v39 = vld [vmem:[%s0 + $0xc8] sm:$0xff]
  %v40 = vld [vmem:[%s0 + $0xd0] sm:$0xff]
  %v41 = vld [vmem:[%s0 + $0xd8] sm:$0xff]
  %v42 = vld [vmem:[%s0 + $0xe0] sm:$0xff]
  %v43 = vld [vmem:[%s0 + $0xe8] sm:$0xff]
  %v44 = vld [vmem:[%s0 + $0xf0] sm:$0xff]
  %v45 = vld [vmem:[%s0 + $0xf8] sm:$0xff]
  %v46 = vld [vmem:[%s0 + $0x100] sm:$0xff]
  %v47 = vld [vmem:[%s0 + $0x108] sm:$0xff]
  %v48 = vld [vmem:[%s0 + $0x110] sm:$0xff]
  %v49 = vld [vmem:[%s0 + $0x118] sm:$0xff]
  %v50 = vld [vmem:[%s0 + $0x120] sm:$0xff]
  %v51 = vld [vmem:[%s0 + $0x128] sm:$0xff]
  %v52 = vld [vmem:[%s0 + $0x130] sm:$0xff]
  %v53 = vld [vmem:[%s0 + $0x138] sm:$0xff]
  %v54 = vld [vmem:[%s0 + $0x140] sm:$0xff]
  %v55 = vld [vmem:[%s0 + $0x148] sm:$0xff]
  %v56 = vld [vmem:[%s0 + $0x150] sm:$0xff]
  %v57 = vld [vmem:[%s0 + $0x158] sm:$0xff]
  %v58 = vld [vmem:[%s0 + $0x160] sm:$0xff]
  %v59 = vld [vmem:[%s0 + $0x168] sm:$0xff]
  %v60 = vld [vmem:[%s0 + $0x170] sm:$0xff]
  %v61 = vld [vmem:[%s0 + $0x178] sm:$0xff]
  %v62 = vld [vmem:[%s0 + $0x180] sm:$0xff]
  %v63 = vld [vmem:[%s0 + $0x188] sm:$0xff]
  %v64 = vld [vmem:[%s0 + $0x190] sm:$0xff]
  %v65 = vld [vmem:[%s0 + $0x198] sm:$0xff]
  %v66 = vld [vmem:[%s0 + $0x1a0] sm:$0xff]
  %v67 = vld [vmem:[%s0 + $0x1a8] sm:$0xff]
  %v68 = vld [vmem:[%s0 + $0x1b0] sm:$0xff]
  %v69 = vld [vmem:[%s0 + $0x1b8] sm:$0xff]
  %v70 = vld [vmem:[%s0 + $0x1c0] sm:$0xff]
  %v71 = vld [vmem:[%s0 + $0x1c8] sm:$0xff]
  %v72 = vld [vmem:[%s0 + $0x1d0] sm:$0xff]
  %v73 = vld [vmem:[%s0 + $0x1d8] sm:$0xff]
  %v74 = vld [vmem:[%s0 + $0x1e0] sm:$0xff]
  %v75 = vld [vmem:[%s0 + $0x1e8] sm:$0xff]
  %v76 = vld [vmem:[%s0 + $0x1f0] sm:$0xff]
  %v77 = vld [vmem:[%s0 + $0x1f8] sm:$0xff]
  %v78 = vld [vmem:[%s1] sm:$0x1]
  %v80 = vperm.slane %v78, 0
  %v82 = vmul.f32 %v14, %v80
  %v83 = vmul.f32 %v15, %v80
  %v84 = vmul.f32 %v16, %v80
  %v85 = vmul.f32 %v17, %v80
  %v86 = vmul.f32 %v18, %v80
  %v87 = vmul.f32 %v19, %v80
  %v88 = vmul.f32 %v20, %v80
  %v89 = vmul.f32 %v21, %v80
  %v90 = vmul.f32 %v22, %v80
  %v91 = vmul.f32 %v23, %v80
  %v92 = vmul.f32 %v24, %v80
  %v93 = vmul.f32 %v25, %v80
  %v94 = vmul.f32 %v26, %v80
  %v95 = vmul.f32 %v27, %v80
  %v96 = vmul.f32 %v28, %v80
  %v97 = vmul.f32 %v29, %v80
  %v98 = vmul.f32 %v30, %v80
  %v99 = vmul.f32 %v31, %v80
  %v100 = vmul.f32 %v32, %v80
  %v101 = vmul.f32 %v33, %v80
  %v102 = vmul.f32 %v34, %v80
  %v103 = vmul.f32 %v35, %v80
  %v104 = vmul.f32 %v36, %v80
  %v105 = vmul.f32 %v37, %v80
  %v106 = vmul.f32 %v38, %v80
  %v107 = vmul.f32 %v39, %v80
  %v108 = vmul.f32 %v40, %v80
  %v109 = vmul.f32 %v41, %v80
  %v110 = vmul.f32 %v42, %v80
  %v111 = vmul.f32 %v43, %v80
  %v112 = vmul.f32 %v44, %v80
  %v113 = vmul.f32 %v45, %v80
  %v114 = vmul.f32 %v46, %v80
  %v115 = vmul.f32 %v47, %v80
  %v116 = vmul.f32 %v48, %v80
  %v117 = vmul.f32 %v49, %v80
  %v118 = vmul.f32 %v50, %v80
  %v119 = vmul.f32 %v51, %v80
  %v120 = vmul.f32 %v52, %v80
  %v121 = vmul.f32 %v53, %v80
  %v122 = vmul.f32 %v54, %v80
  %v123 = vmul.f32 %v55, %v80
  %v124 = vmul.f32 %v56, %v80
  %v125 = vmul.f32 %v57, %v80
  %v126 = vmul.f32 %v58, %v80
  %v127 = vmul.f32 %v59, %v80
  %v128 = vmul.f32 %v60, %v80
  %v129 = vmul.f32 %v61, %v80
  %v130 = vmul.f32 %v62, %v80
  %v131 = vmul.f32 %v63, %v80
  %v132 = vmul.f32 %v64, %v80
  %v133 = vmul.f32 %v65, %v80
  %v134 = vmul.f32 %v66, %v80
  %v135 = vmul.f32 %v67, %v80
  %v136 = vmul.f32 %v68, %v80
  %v137 = vmul.f32 %v69, %v80
  %v138 = vmul.f32 %v70, %v80
  %v139 = vmul.f32 %v71, %v80
  %v140 = vmul.f32 %v72, %v80
  %v141 = vmul.f32 %v73, %v80
  %v142 = vmul.f32 %v74, %v80
  %v143 = vmul.f32 %v75, %v80
  %v144 = vmul.f32 %v76, %v80
  %v145 = vmul.f32 %v77, %v80
  %v146 = vld [vmem:[%s2] sm:$0x1]
  %v148 = vperm.slane %v146, 0
  %v150 = vadd.f32 %v82, %v148
  %v151 = vadd.f32 %v83, %v148
  %v152 = vadd.f32 %v84, %v148
  %v153 = vadd.f32 %v85, %v148
  %v154 = vadd.f32 %v86, %v148
  %v155 = vadd.f32 %v87, %v148
  %v156 = vadd.f32 %v88, %v148
  %v157 = vadd.f32 %v89, %v148
  %v158 = vadd.f32 %v90, %v148
  %v159 = vadd.f32 %v91, %v148
  %v160 = vadd.f32 %v92, %v148
  %v161 = vadd.f32 %v93, %v148
  %v162 = vadd.f32 %v94, %v148
  %v163 = vadd.f32 %v95, %v148
  %v164 = vadd.f32 %v96, %v148
  %v165 = vadd.f32 %v97, %v148
  %v166 = vadd.f32 %v98, %v148
  %v167 = vadd.f32 %v99, %v148
  %v168 = vadd.f32 %v100, %v148
  %v169 = vadd.f32 %v101, %v148
  %v170 = vadd.f32 %v102, %v148
  %v171 = vadd.f32 %v103, %v148
  %v172 = vadd.f32 %v104, %v148
  %v173 = vadd.f32 %v105, %v148
  %v174 = vadd.f32 %v106, %v148
  %v175 = vadd.f32 %v107, %v148
  %v176 = vadd.f32 %v108, %v148
  %v177 = vadd.f32 %v109, %v148
  %v178 = vadd.f32 %v110, %v148
  %v179 = vadd.f32 %v111, %v148
  %v180 = vadd.f32 %v112, %v148
  %v181 = vadd.f32 %v113, %v148
  %v182 = vadd.f32 %v114, %v148
  %v183 = vadd.f32 %v115, %v148
  %v184 = vadd.f32 %v116, %v148
  %v185 = vadd.f32 %v117, %v148
  %v186 = vadd.f32 %v118, %v148
  %v187 = vadd.f32 %v119, %v148
  %v188 = vadd.f32 %v120, %v148
  %v189 = vadd.f32 %v121, %v148
  %v190 = vadd.f32 %v122, %v148
  %v191 = vadd.f32 %v123, %v148
  %v192 = vadd.f32 %v124, %v148
  %v193 = vadd.f32 %v125, %v148
  %v194 = vadd.f32 %v126, %v148
  %v195 = vadd.f32 %v127, %v148
  %v196 = vadd.f32 %v128, %v148
  %v197 = vadd.f32 %v129, %v148
  %v198 = vadd.f32 %v130, %v148
  %v199 = vadd.f32 %v131, %v148
  %v200 = vadd.f32 %v132, %v148
  %v201 = vadd.f32 %v133, %v148
  %v202 = vadd.f32 %v134, %v148
  %v203 = vadd.f32 %v135, %v148
  %v204 = vadd.f32 %v136, %v148
  %v205 = vadd.f32 %v137, %v148
  %v206 = vadd.f32 %v138, %v148
  %v207 = vadd.f32 %v139, %v148
  %v208 = vadd.f32 %v140, %v148
  %v209 = vadd.f32 %v141, %v148
  %v210 = vadd.f32 %v142, %v148
  %v211 = vadd.f32 %v143, %v148
  %v212 = vadd.f32 %v144, %v148
  %v213 = vadd.f32 %v145, %v148
  %v214 = vmax.f32 %v150, 0.0
  %v215 = vmax.f32 %v151, 0.0
  %v216 = vmax.f32 %v152, 0.0
  %v217 = vmax.f32 %v153, 0.0
  %v218 = vmax.f32 %v154, 0.0
  %v219 = vmax.f32 %v155, 0.0
  %v220 = vmax.f32 %v156, 0.0
  %v221 = vmax.f32 %v157, 0.0
  %v222 = vmax.f32 %v158, 0.0
  %v223 = vmax.f32 %v159, 0.0
  %v224 = vmax.f32 %v160, 0.0
  %v225 = vmax.f32 %v161, 0.0
  %v226 = vmax.f32 %v162, 0.0
  %v227 = vmax.f32 %v163, 0.0
  %v228 = vmax.f32 %v164, 0.0
  %v229 = vmax.f32 %v165, 0.0
  %v230 = vmax.f32 %v166, 0.0
  %v231 = vmax.f32 %v167, 0.0
  %v232 = vmax.f32 %v168, 0.0
  %v233 = vmax.f32 %v169, 0.0
  %v234 = vmax.f32 %v170, 0.0
  %v235 = vmax.f32 %v171, 0.0
  %v236 = vmax.f32 %v172, 0.0
  %v237 = vmax.f32 %v173, 0.0
  %v238 = vmax.f32 %v174, 0.0
  %v239 = vmax.f32 %v175, 0.0
  %v240 = vmax.f32 %v176, 0.0
  %v241 = vmax.f32 %v177, 0.0
  %v242 = vmax.f32 %v178, 0.0
  %v243 = vmax.f32 %v179, 0.0
  %v244 = vmax.f32 %v180, 0.0
  %v245 = vmax.f32 %v181, 0.0
  %v246 = vmax.f32 %v182, 0.0
  %v247 = vmax.f32 %v183, 0.0
  %v248 = vmax.f32 %v184, 0.0
  %v249 = vmax.f32 %v185, 0.0
  %v250 = vmax.f32 %v186, 0.0
  %v251 = vmax.f32 %v187, 0.0
  %v252 = vmax.f32 %v188, 0.0
  %v253 = vmax.f32 %v189, 0.0
  %v254 = vmax.f32 %v190, 0.0
  %v255 = vmax.f32 %v191, 0.0
  %v256 = vmax.f32 %v192, 0.0
  %v257 = vmax.f32 %v193, 0.0
  %v258 = vmax.f32 %v194, 0.0
  %v259 = vmax.f32 %v195, 0.0
  %v260 = vmax.f32 %v196, 0.0
  %v261 = vmax.f32 %v197, 0.0
  %v262 = vmax.f32 %v198, 0.0
  %v263 = vmax.f32 %v199, 0.0
  %v264 = vmax.f32 %v200, 0.0
  %v265 = vmax.f32 %v201, 0.0
  %v266 = vmax.f32 %v202, 0.0
  %v267 = vmax.f32 %v203, 0.0
  %v268 = vmax.f32 %v204, 0.0
  %v269 = vmax.f32 %v205, 0.0
  %v270 = vmax.f32 %v206, 0.0
  %v271 = vmax.f32 %v207, 0.0
  %v272 = vmax.f32 %v208, 0.0
  %v273 = vmax.f32 %v209, 0.0
  %v274 = vmax.f32 %v210, 0.0
  %v275 = vmax.f32 %v211, 0.0
  %v276 = vmax.f32 %v212, 0.0
  %v277 = vmax.f32 %v213, 0.0
  %v278 = vpack.c.bf16 %v214, %v214
  %v279 = vpack.c.bf16 %v215, %v215
  %v280 = vpack.c.bf16 %v216, %v216
  %v281 = vpack.c.bf16 %v217, %v217
  %v282 = vpack.c.bf16 %v218, %v218
  %v283 = vpack.c.bf16 %v219, %v219
  %v284 = vpack.c.bf16 %v220, %v220
  %v285 = vpack.c.bf16 %v221, %v221
  %v286 = vpack.c.bf16 %v222, %v222
  %v287 = vpack.c.bf16 %v223, %v223
  %v288 = vpack.c.bf16 %v224, %v224
  %v289 = vpack.c.bf16 %v225, %v225
  %v290 = vpack.c.bf16 %v226, %v226
  %v291 = vpack.c.bf16 %v227, %v227
  %v292 = vpack.c.bf16 %v228, %v228
  %v293 = vpack.c.bf16 %v229, %v229
  %v294 = vpack.c.bf16 %v230, %v230
  %v295 = vpack.c.bf16 %v231, %v231
  %v296 = vpack.c.bf16 %v232, %v232
  %v297 = vpack.c.bf16 %v233, %v233
  %v298 = vpack.c.bf16 %v234, %v234
  %v299 = vpack.c.bf16 %v235, %v235
  %v300 = vpack.c.bf16 %v236, %v236
  %v301 = vpack.c.bf16 %v237, %v237
  %v302 = vpack.c.bf16 %v238, %v238
  %v303 = vpack.c.bf16 %v239, %v239
  %v304 = vpack.c.bf16 %v240, %v240
  %v305 = vpack.c.bf16 %v241, %v241
  %v306 = vpack.c.bf16 %v242, %v242
  %v307 = vpack.c.bf16 %v243, %v243
  %v308 = vpack.c.bf16 %v244, %v244
  %v309 = vpack.c.bf16 %v245, %v245
  %v310 = vpack.c.bf16 %v246, %v246
  %v311 = vpack.c.bf16 %v247, %v247
  %v312 = vpack.c.bf16 %v248, %v248
  %v313 = vpack.c.bf16 %v249, %v249
  %v314 = vpack.c.bf16 %v250, %v250
  %v315 = vpack.c.bf16 %v251, %v251
  %v316 = vpack.c.bf16 %v252, %v252
  %v317 = vpack.c.bf16 %v253, %v253
  %v318 = vpack.c.bf16 %v254, %v254
  %v319 = vpack.c.bf16 %v255, %v255
  %v320 = vpack.c.bf16 %v256, %v256
  %v321 = vpack.c.bf16 %v257, %v257
  %v322 = vpack.c.bf16 %v258, %v258
  %v323 = vpack.c.bf16 %v259, %v259
  %v324 = vpack.c.bf16 %v260, %v260
  %v325 = vpack.c.bf16 %v261, %v261
  %v326 = vpack.c.bf16 %v262, %v262
  %v327 = vpack.c.bf16 %v263, %v263
  %v328 = vpack.c.bf16 %v264, %v264
  %v329 = vpack.c.bf16 %v265, %v265
  %v330 = vpack.c.bf16 %v266, %v266
  %v331 = vpack.c.bf16 %v267, %v267
  %v332 = vpack.c.bf16 %v268, %v268
  %v333 = vpack.c.bf16 %v269, %v269
  %v334 = vpack.c.bf16 %v270, %v270
  %v335 = vpack.c.bf16 %v271, %v271
  %v336 = vpack.c.bf16 %v272, %v272
  %v337 = vpack.c.bf16 %v273, %v273
  %v338 = vpack.c.bf16 %v274, %v274
  %v339 = vpack.c.bf16 %v275, %v275
  %v340 = vpack.c.bf16 %v276, %v276
  %v341 = vpack.c.bf16 %v277, %v277
  %vm342 = vcmask 125952
  %343 = vst.msk [vmem:[%s3] sm:$0xf] %vm342, %v278
  %344 = vst.msk [vmem:[%s3 + $0x4] sm:$0xf] %vm342, %v279
  %345 = vst.msk [vmem:[%s3 + $0x8] sm:$0xf] %vm342, %v280
  %346 = vst.msk [vmem:[%s3 + $0xc] sm:$0xf] %vm342, %v281
  %347 = vst.msk [vmem:[%s3 + $0x10] sm:$0xf] %vm342, %v282
  %348 = vst.msk [vmem:[%s3 + $0x14] sm:$0xf] %vm342, %v283
  %349 = vst.msk [vmem:[%s3 + $0x18] sm:$0xf] %vm342, %v284
  %350 = vst.msk [vmem:[%s3 + $0x1c] sm:$0xf] %vm342, %v285
  %351 = vst.msk [vmem:[%s3 + $0x20] sm:$0xf] %vm342, %v286
  %352 = vst.msk [vmem:[%s3 + $0x24] sm:$0xf] %vm342, %v287
  %353 = vst.msk [vmem:[%s3 + $0x28] sm:$0xf] %vm342, %v288
  %354 = vst.msk [vmem:[%s3 + $0x2c] sm:$0xf] %vm342, %v289
  %355 = vst.msk [vmem:[%s3 + $0x30] sm:$0xf] %vm342, %v290
  %356 = vst.msk [vmem:[%s3 + $0x34] sm:$0xf] %vm342, %v291
  %357 = vst.msk [vmem:[%s3 + $0x38] sm:$0xf] %vm342, %v292
  %358 = vst.msk [vmem:[%s3 + $0x3c] sm:$0xf] %vm342, %v293
  %359 = vst.msk [vmem:[%s3 + $0x40] sm:$0xf] %vm342, %v294
  %360 = vst.msk [vmem:[%s3 + $0x44] sm:$0xf] %vm342, %v295
  %361 = vst.msk [vmem:[%s3 + $0x48] sm:$0xf] %vm342, %v296
  %362 = vst.msk [vmem:[%s3 + $0x4c] sm:$0xf] %vm342, %v297
  %363 = vst.msk [vmem:[%s3 + $0x50] sm:$0xf] %vm342, %v298
  %364 = vst.msk [vmem:[%s3 + $0x54] sm:$0xf] %vm342, %v299
  %365 = vst.msk [vmem:[%s3 + $0x58] sm:$0xf] %vm342, %v300
  %366 = vst.msk [vmem:[%s3 + $0x5c] sm:$0xf] %vm342, %v301
  %367 = vst.msk [vmem:[%s3 + $0x60] sm:$0xf] %vm342, %v302
  %368 = vst.msk [vmem:[%s3 + $0x64] sm:$0xf] %vm342, %v303
  %369 = vst.msk [vmem:[%s3 + $0x68] sm:$0xf] %vm342, %v304
  %370 = vst.msk [vmem:[%s3 + $0x6c] sm:$0xf] %vm342, %v305
  %371 = vst.msk [vmem:[%s3 + $0x70] sm:$0xf] %vm342, %v306
  %372 = vst.msk [vmem:[%s3 + $0x74] sm:$0xf] %vm342, %v307
  %373 = vst.msk [vmem:[%s3 + $0x78] sm:$0xf] %vm342, %v308
  %374 = vst.msk [vmem:[%s3 + $0x7c] sm:$0xf] %vm342, %v309
  %375 = vst.msk [vmem:[%s3 + $0x80] sm:$0xf] %vm342, %v310
  %376 = vst.msk [vmem:[%s3 + $0x84] sm:$0xf] %vm342, %v311
  %377 = vst.msk [vmem:[%s3 + $0x88] sm:$0xf] %vm342, %v312
  %378 = vst.msk [vmem:[%s3 + $0x8c] sm:$0xf] %vm342, %v313
  %379 = vst.msk [vmem:[%s3 + $0x90] sm:$0xf] %vm342, %v314
  %380 = vst.msk [vmem:[%s3 + $0x94] sm:$0xf] %vm342, %v315
  %381 = vst.msk [vmem:[%s3 + $0x98] sm:$0xf] %vm342, %v316
  %382 = vst.msk [vmem:[%s3 + $0x9c] sm:$0xf] %vm342, %v317
  %383 = vst.msk [vmem:[%s3 + $0xa0] sm:$0xf] %vm342, %v318
  %384 = vst.msk [vmem:[%s3 + $0xa4] sm:$0xf] %vm342, %v319
  %385 = vst.msk [vmem:[%s3 + $0xa8] sm:$0xf] %vm342, %v320
  %386 = vst.msk [vmem:[%s3 + $0xac] sm:$0xf] %vm342, %v321
  %387 = vst.msk [vmem:[%s3 + $0xb0] sm:$0xf] %vm342, %v322
  %388 = vst.msk [vmem:[%s3 + $0xb4] sm:$0xf] %vm342, %v323
  %389 = vst.msk [vmem:[%s3 + $0xb8] sm:$0xf] %vm342, %v324
  %390 = vst.msk [vmem:[%s3 + $0xbc] sm:$0xf] %vm342, %v325
  %391 = vst.msk [vmem:[%s3 + $0xc0] sm:$0xf] %vm342, %v326
  %392 = vst.msk [vmem:[%s3 + $0xc4] sm:$0xf] %vm342, %v327
  %393 = vst.msk [vmem:[%s3 + $0xc8] sm:$0xf] %vm342, %v328
  %394 = vst.msk [vmem:[%s3 + $0xcc] sm:$0xf] %vm342, %v329
  %395 = vst.msk [vmem:[%s3 + $0xd0] sm:$0xf] %vm342, %v330
  %396 = vst.msk [vmem:[%s3 + $0xd4] sm:$0xf] %vm342, %v331
  %397 = vst.msk [vmem:[%s3 + $0xd8] sm:$0xf] %vm342, %v332
  %398 = vst.msk [vmem:[%s3 + $0xdc] sm:$0xf] %vm342, %v333
  %399 = vst.msk [vmem:[%s3 + $0xe0] sm:$0xf] %vm342, %v334
  %400 = vst.msk [vmem:[%s3 + $0xe4] sm:$0xf] %vm342, %v335
  %401 = vst.msk [vmem:[%s3 + $0xe8] sm:$0xf] %vm342, %v336
  %402 = vst.msk [vmem:[%s3 + $0xec] sm:$0xf] %vm342, %v337
  %403 = vst.msk [vmem:[%s3 + $0xf0] sm:$0xf] %vm342, %v338
  %404 = vst.msk [vmem:[%s3 + $0xf4] sm:$0xf] %vm342, %v339
  %405 = vst.msk [vmem:[%s3 + $0xf8] sm:$0xf] %vm342, %v340
  %406 = vst.msk [vmem:[%s3 + $0xfc] sm:$0xf] %vm342, %v341
  // Predicated region
  $region14: #{slim_forward.30} parent=0 // pred_check
    _
  $region15: #{slim_forward.30} parent=0 // pred_check_branch
    %408 = sbr.rel (0) target = $region17
  $region16: #{slim_forward.30} parent=0 // pred_region
    _
  $region17: #{slim_forward.30} parent=0 // pred_fallthru
    _
  // Predicated region
  $region18: #{slim_forward.30} parent=0 // pred_check
    _
  $region19: #{slim_forward.30} parent=0 // pred_check_branch
    %410 = sbr.rel (0) target = $region21
  $region20: #{slim_forward.30} parent=0 // pred_region
    _
  $region21: #{slim_forward.30} parent=0 // pred_fallthru
    _

// kernel: slim_forward.29
$region0: #{slim_forward.29}
  #allocation0 [shape = 'u32[]', space=smem, size = 0x4, offset = 0x4, fixed_abs, tag = 'smem constant byte address 0x4 - core index']
  #allocation1 [shape = 'u32[72,128]{1,0:T(1,128)}', space=vmem, size = 0x9000, scoped, tag = 'internal scratch']
  %s0 = inlined_call_operand.vmem [shape: bf16[512,27], index: 0, kind: input, shape index: {}]
  %s1 = inlined_call_operand.vmem [shape: bf16[27,16], index: 1, kind: input, shape index: {}]
  %s2 = inlined_call_operand.vmem [shape: f32[512,16], index: 2, kind: output, shape index: {0}]
  %s3 = inlined_call_operand.vmem [shape: f32[8,16], index: 3, kind: output, shape index: {1}]
  %4 = xla_tuple %s2, %s3
  %s5 = sld [smem:[#allocation0]]
  $region26: #{slim_forward.29} parent=0
    _
  %s7 = ssub.s32 1, %s5
  %s8 = scalar_select 0, %s7, %s5
  // Predicated region
  $region2: #{slim_forward.29} parent=0 // pred_check
    _
  $region3: #{slim_forward.29} parent=0 // pred_check_branch
    %10 = sbr.rel (0) target = $region5
  $region4: #{slim_forward.29} parent=0 // pred_region
    _
  $region5: #{slim_forward.29} parent=0 // pred_fallthru
    _
  // Predicated region
  $region6: #{slim_forward.29} parent=0 // pred_check
    _
  $region7: #{slim_forward.29} parent=0 // pred_check_branch
    %12 = sbr.rel (0) target = $region9
  $region8: #{slim_forward.29} parent=0 // pred_region
    _
  $region9: #{slim_forward.29} parent=0 // pred_fallthru
    _
  %v14 = vld [vmem:[%s0] sm:$0xf]
  %v15 = vld [vmem:[%s0 + $0x4] sm:$0xf]
  %v16 = vld [vmem:[%s0 + $0x8] sm:$0xf]
  %v17 = vld [vmem:[%s0 + $0xc] sm:$0xf]
  %v18 = vld [vmem:[%s0 + $0x10] sm:$0xf]
  %v19 = vld [vmem:[%s0 + $0x14] sm:$0xf]
  %v20 = vld [vmem:[%s0 + $0x18] sm:$0xf]
  %v21 = vld [vmem:[%s0 + $0x1c] sm:$0xf]
  %v22 = vld [vmem:[%s0 + $0x20] sm:$0xf]
  %v23 = vld [vmem:[%s0 + $0x24] sm:$0xf]
  %v24 = vld [vmem:[%s0 + $0x28] sm:$0xf]
  %v25 = vld [vmem:[%s0 + $0x2c] sm:$0xf]
  %v26 = vld [vmem:[%s0 + $0x30] sm:$0xf]
  %v27 = vld [vmem:[%s0 + $0x34] sm:$0xf]
  %v28 = vld [vmem:[%s0 + $0x38] sm:$0xf]
  %v29 = vld [vmem:[%s0 + $0x3c] sm:$0xf]
  %v30 = vld [vmem:[%s0 + $0x40] sm:$0xf]
  %v31 = vld [vmem:[%s0 + $0x44] sm:$0xf]
  %v32 = vld [vmem:[%s0 + $0x48] sm:$0xf]
  %v33 = vld [vmem:[%s0 + $0x4c] sm:$0xf]
  %v34 = vld [vmem:[%s0 + $0x50] sm:$0xf]
  %v35 = vld [vmem:[%s0 + $0x54] sm:$0xf]
  %v36 = vld [vmem:[%s0 + $0x58] sm:$0xf]
  %v37 = vld [vmem:[%s0 + $0x5c] sm:$0xf]
  %v38 = vld [vmem:[%s0 + $0x60] sm:$0xf]
  %v39 = vld [vmem:[%s0 + $0x64] sm:$0xf]
  %v40 = vld [vmem:[%s0 + $0x68] sm:$0xf]
  %v41 = vld [vmem:[%s0 + $0x6c] sm:$0xf]
  %v42 = vld [vmem:[%s0 + $0x70] sm:$0xf]
  %v43 = vld [vmem:[%s0 + $0x74] sm:$0xf]
  %v44 = vld [vmem:[%s0 + $0x78] sm:$0xf]
  %v45 = vld [vmem:[%s0 + $0x7c] sm:$0xf]
  %v46 = vld [vmem:[%s0 + $0x80] sm:$0xf]
  %v47 = vld [vmem:[%s0 + $0x84] sm:$0xf]
  %v48 = vld [vmem:[%s0 + $0x88] sm:$0xf]
  %v49 = vld [vmem:[%s0 + $0x8c] sm:$0xf]
  %v50 = vld [vmem:[%s0 + $0x90] sm:$0xf]
  %v51 = vld [vmem:[%s0 + $0x94] sm:$0xf]
  %v52 = vld [vmem:[%s0 + $0x98] sm:$0xf]
  %v53 = vld [vmem:[%s0 + $0x9c] sm:$0xf]
  %v54 = vld [vmem:[%s0 + $0xa0] sm:$0xf]
  %v55 = vld [vmem:[%s0 + $0xa4] sm:$0xf]
  %v56 = vld [vmem:[%s0 + $0xa8] sm:$0xf]
  %v57 = vld [vmem:[%s0 + $0xac] sm:$0xf]
  %v58 = vld [vmem:[%s0 + $0xb0] sm:$0xf]
  %v59 = vld [vmem:[%s0 + $0xb4] sm:$0xf]
  %v60 = vld [vmem:[%s0 + $0xb8] sm:$0xf]
  %v61 = vld [vmem:[%s0 + $0xbc] sm:$0xf]
  %v62 = vld [vmem:[%s0 + $0xc0] sm:$0xf]
  %v63 = vld [vmem:[%s0 + $0xc4] sm:$0xf]
  %v64 = vld [vmem:[%s0 + $0xc8] sm:$0xf]
  %v65 = vld [vmem:[%s0 + $0xcc] sm:$0xf]
  %v66 = vld [vmem:[%s0 + $0xd0] sm:$0xf]
  %v67 = vld [vmem:[%s0 + $0xd4] sm:$0xf]
  %v68 = vld [vmem:[%s0 + $0xd8] sm:$0xf]
  %v69 = vld [vmem:[%s0 + $0xdc] sm:$0xf]
  %v70 = vld [vmem:[%s0 + $0xe0] sm:$0xf]
  %v71 = vld [vmem:[%s0 + $0xe4] sm:$0xf]
  %v72 = vld [vmem:[%s0 + $0xe8] sm:$0xf]
  %v73 = vld [vmem:[%s0 + $0xec] sm:$0xf]
  %v74 = vld [vmem:[%s0 + $0xf0] sm:$0xf]
  %v75 = vld [vmem:[%s0 + $0xf4] sm:$0xf]
  %v76 = vld [vmem:[%s0 + $0xf8] sm:$0xf]
  %v77 = vld [vmem:[%s0 + $0xfc] sm:$0xf]
  %v78 = vld [vmem:[%s1] sm:$0xf]
  %v79 = vld [vmem:[%s1 + $0x4] sm:$0xf]
  %v80 = vld [vmem:[%s1 + $0x8] sm:$0xf]
  %v81 = vld [vmem:[%s1 + $0xc] sm:$0x3]
  %v146 = vunpack.c.l.b16 %v14
  %v147 = vunpack.c.l.b16 %v15
  %v148 = vunpack.c.l.b16 %v16
  %v149 = vunpack.c.l.b16 %v17
  %v150 = vunpack.c.l.b16 %v18
  %v151 = vunpack.c.l.b16 %v19
  %v152 = vunpack.c.l.b16 %v20
  %v153 = vunpack.c.l.b16 %v21
  %v154 = vunpack.c.l.b16 %v22
  %v155 = vunpack.c.l.b16 %v23
  %v156 = vunpack.c.l.b16 %v24
  %v157 = vunpack.c.l.b16 %v25
  %v158 = vunpack.c.l.b16 %v26
  %v159 = vunpack.c.l.b16 %v27
  %v160 = vunpack.c.l.b16 %v28
  %v161 = vunpack.c.l.b16 %v29
  %v162 = vunpack.c.l.b16 %v30
  %v163 = vunpack.c.l.b16 %v31
  %v164 = vunpack.c.l.b16 %v32
  %v165 = vunpack.c.l.b16 %v33
  %v166 = vunpack.c.l.b16 %v34
  %v167 = vunpack.c.l.b16 %v35
  %v168 = vunpack.c.l.b16 %v36
  %v169 = vunpack.c.l.b16 %v37
  %v170 = vunpack.c.l.b16 %v38
  %v171 = vunpack.c.l.b16 %v39
  %v172 = vunpack.c.l.b16 %v40
  %v173 = vunpack.c.l.b16 %v41
  %v174 = vunpack.c.l.b16 %v42
  %v175 = vunpack.c.l.b16 %v43
  %v176 = vunpack.c.l.b16 %v44
  %v177 = vunpack.c.l.b16 %v45
  %v178 = vunpack.c.l.b16 %v46
  %v179 = vunpack.c.l.b16 %v47
  %v180 = vunpack.c.l.b16 %v48
  %v181 = vunpack.c.l.b16 %v49
  %v182 = vunpack.c.l.b16 %v50
  %v183 = vunpack.c.l.b16 %v51
  %v184 = vunpack.c.l.b16 %v52
  %v185 = vunpack.c.l.b16 %v53
  %v186 = vunpack.c.l.b16 %v54
  %v187 = vunpack.c.l.b16 %v55
  %v188 = vunpack.c.l.b16 %v56
  %v189 = vunpack.c.l.b16 %v57
  %v190 = vunpack.c.l.b16 %v58
  %v191 = vunpack.c.l.b16 %v59
  %v192 = vunpack.c.l.b16 %v60
  %v193 = vunpack.c.l.b16 %v61
  %v194 = vunpack.c.l.b16 %v62
  %v195 = vunpack.c.l.b16 %v63
  %v196 = vunpack.c.l.b16 %v64
  %v197 = vunpack.c.l.b16 %v65
  %v198 = vunpack.c.l.b16 %v66
  %v199 = vunpack.c.l.b16 %v67
  %v200 = vunpack.c.l.b16 %v68
  %v201 = vunpack.c.l.b16 %v69
  %v202 = vunpack.c.l.b16 %v70
  %v203 = vunpack.c.l.b16 %v71
  %v204 = vunpack.c.l.b16 %v72
  %v205 = vunpack.c.l.b16 %v73
  %v206 = vunpack.c.l.b16 %v74
  %v207 = vunpack.c.l.b16 %v75
  %v208 = vunpack.c.l.b16 %v76
  %v209 = vunpack.c.l.b16 %v77
  %v210 = vpack.c.b16 %v147, %v146
  %v211 = vpack.c.b16 %v149, %v148
  %v212 = vpack.c.b16 %v151, %v150
  %v213 = vpack.c.b16 %v153, %v152
  %v214 = vpack.c.b16 %v155, %v154
  %v215 = vpack.c.b16 %v157, %v156
  %v216 = vpack.c.b16 %v159, %v158
  %v217 = vpack.c.b16 %v161, %v160
  %v218 = vpack.c.b16 %v163, %v162
  %v219 = vpack.c.b16 %v165, %v164
  %v220 = vpack.c.b16 %v167, %v166
  %v221 = vpack.c.b16 %v169, %v168
  %v222 = vpack.c.b16 %v171, %v170
  %v223 = vpack.c.b16 %v173, %v172
  %v224 = vpack.c.b16 %v175, %v174
  %v225 = vpack.c.b16 %v177, %v176
  %v226 = vpack.c.b16 %v179, %v178
  %v227 = vpack.c.b16 %v181, %v180
  %v228 = vpack.c.b16 %v183, %v182
  %v229 = vpack.c.b16 %v185, %v184
  %v230 = vpack.c.b16 %v187, %v186
  %v231 = vpack.c.b16 %v189, %v188
  %v232 = vpack.c.b16 %v191, %v190
  %v233 = vpack.c.b16 %v193, %v192
  %v234 = vpack.c.b16 %v195, %v194
  %v235 = vpack.c.b16 %v197, %v196
  %v236 = vpack.c.b16 %v199, %v198
  %v237 = vpack.c.b16 %v201, %v200
  %v238 = vpack.c.b16 %v203, %v202
  %v239 = vpack.c.b16 %v205, %v204
  %v240 = vpack.c.b16 %v207, %v206
  %v241 = vpack.c.b16 %v209, %v208
  %v246 = vunpack.c.l.b16 %v78
  %v247 = vunpack.c.l.b16 %v79
  %v248 = vunpack.c.l.b16 %v80
  %v249 = vunpack.c.l.b16 %v81
  %v250 = vpack.c.b16 %v247, %v246
  %v251 = vpack.c.b16 %v249, %v248
  %vm253 = vcmask 220160
  %v255 = vsel %vm253, %v210, 0
  %v258 = vsel %vm253, %v211, 0
  %v261 = vsel %vm253, %v212, 0
  %v264 = vsel %vm253, %v213, 0
  %v267 = vsel %vm253, %v214, 0
  %v270 = vsel %vm253, %v215, 0
  %v273 = vsel %vm253, %v216, 0
  %v276 = vsel %vm253, %v217, 0
  %v279 = vsel %vm253, %v218, 0
  %v282 = vsel %vm253, %v219, 0
  %v285 = vsel %vm253, %v220, 0
  %v288 = vsel %vm253, %v221, 0
  %v291 = vsel %vm253, %v222, 0
  %v294 = vsel %vm253, %v223, 0
  %v297 = vsel %vm253, %v224, 0
  %v300 = vsel %vm253, %v225, 0
  %v303 = vsel %vm253, %v226, 0
  %v306 = vsel %vm253, %v227, 0
  %v309 = vsel %vm253, %v228, 0
  %v312 = vsel %vm253, %v229, 0
  %v315 = vsel %vm253, %v230, 0
  %v318 = vsel %vm253, %v231, 0
  %v321 = vsel %vm253, %v232, 0
  %v324 = vsel %vm253, %v233, 0
  %v327 = vsel %vm253, %v234, 0
  %v330 = vsel %vm253, %v235, 0
  %v333 = vsel %vm253, %v236, 0
  %v336 = vsel %vm253, %v237, 0
  %v339 = vsel %vm253, %v238, 0
  %v342 = vsel %vm253, %v239, 0
  %v345 = vsel %vm253, %v240, 0
  %v348 = vsel %vm253, %v241, 0
  %vm350 = vcmask 1044480
  %vm351 = vcmask 1045504
  %v352 = vsel %vm350, 4294967295, 65535
  %v353 = vsel %vm351, %v352, 0
  %v355 = vand.u32 %v251, %v353
  %357 = vmatpush.bf16.msra.mxu0 0
  %358 = vmatpush.bf16.msra.mxu0 0
  %359 = vmatpush.bf16.msra.mxu0 0
  %360 = vmatpush.bf16.msra.mxu0 0
  %361 = vmatpush.bf16.msra.mxu0 0
  %362 = vmatpush.bf16.msra.mxu0 0
  %363 = vmatpush.bf16.msra.mxu0 %v355
  %364 = vmatpush.bf16.msra.mxu0 %v250
  %365 = vmatmul.bf16.gmra.mxu0 %v255
  %v366 = vpop.f32.mrf.mxu0
  %v367 = vadd.f32 0.0, %v366
  %v368 = vpop.f32.mrf.mxu0
  %v369 = vadd.f32 0.0, %v368
  %370 = vmatmul.bf16.gmra.mxu0 %v258
  %v371 = vpop.f32.mrf.mxu0
  %v372 = vadd.f32 0.0, %v371
  %v373 = vpop.f32.mrf.mxu0
  %v374 = vadd.f32 0.0, %v373
  %375 = vmatmul.bf16.gmra.mxu0 %v261
  %v376 = vpop.f32.mrf.mxu0
  %v377 = vadd.f32 0.0, %v376
  %v378 = vpop.f32.mrf.mxu0
  %v379 = vadd.f32 0.0, %v378
  %380 = vmatmul.bf16.gmra.mxu0 %v264
  %v381 = vpop.f32.mrf.mxu0
  %v382 = vadd.f32 0.0, %v381
  %v383 = vpop.f32.mrf.mxu0
  %v384 = vadd.f32 0.0, %v383
  %385 = vmatmul.bf16.gmra.mxu0 %v267
  %v386 = vpop.f32.mrf.mxu0
  %v387 = vadd.f32 0.0, %v386
  %v388 = vpop.f32.mrf.mxu0
  %v389 = vadd.f32 0.0, %v388
  %390 = vmatmul.bf16.gmra.mxu0 %v270
  %v391 = vpop.f32.mrf.mxu0
  %v392 = vadd.f32 0.0, %v391
  %v393 = vpop.f32.mrf.mxu0
  %v394 = vadd.f32 0.0, %v393
  %395 = vmatmul.bf16.gmra.mxu0 %v273
  %v396 = vpop.f32.mrf.mxu0
  %v397 = vadd.f32 0.0, %v396
  %v398 = vpop.f32.mrf.mxu0
  %v399 = vadd.f32 0.0, %v398
  %400 = vmatmul.bf16.gmra.mxu0 %v276
  %v401 = vpop.f32.mrf.mxu0
  %v402 = vadd.f32 0.0, %v401
  %v403 = vpop.f32.mrf.mxu0
  %v404 = vadd.f32 0.0, %v403
  %405 = vmatmul.bf16.gmra.mxu0 %v279
  %v406 = vpop.f32.mrf.mxu0
  %v407 = vadd.f32 0.0, %v406
  %v408 = vpop.f32.mrf.mxu0
  %v409 = vadd.f32 0.0, %v408
  %410 = vmatmul.bf16.gmra.mxu0 %v282
  %v411 = vpop.f32.mrf.mxu0
  %v412 = vadd.f32 0.0, %v411
  %v413 = vpop.f32.mrf.mxu0
  %v414 = vadd.f32 0.0, %v413
  %415 = vmatmul.bf16.gmra.mxu0 %v285
  %v416 = vpop.f32.mrf.mxu0
  %v417 = vadd.f32 0.0, %v416
  %v418 = vpop.f32.mrf.mxu0
  %v419 = vadd.f32 0.0, %v418
  %420 = vmatmul.bf16.gmra.mxu0 %v288
  %v421 = vpop.f32.mrf.mxu0
  %v422 = vadd.f32 0.0, %v421
  %v423 = vpop.f32.mrf.mxu0
  %v424 = vadd.f32 0.0, %v423
  %425 = vmatmul.bf16.gmra.mxu0 %v291
  %v426 = vpop.f32.mrf.mxu0
  %v427 = vadd.f32 0.0, %v426
  %v428 = vpop.f32.mrf.mxu0
  %v429 = vadd.f32 0.0, %v428
  %430 = vmatmul.bf16.gmra.mxu0 %v294
  %v431 = vpop.f32.mrf.mxu0
  %v432 = vadd.f32 0.0, %v431
  %v433 = vpop.f32.mrf.mxu0
  %v434 = vadd.f32 0.0, %v433
  %435 = vmatmul.bf16.gmra.mxu0 %v297
  %v436 = vpop.f32.mrf.mxu0
  %v437 = vadd.f32 0.0, %v436
  %v438 = vpop.f32.mrf.mxu0
  %v439 = vadd.f32 0.0, %v438
  %440 = vmatmul.bf16.gmra.mxu0 %v300
  %v441 = vpop.f32.mrf.mxu0
  %v442 = vadd.f32 0.0, %v441
  %v443 = vpop.f32.mrf.mxu0
  %v444 = vadd.f32 0.0, %v443
  %445 = vmatmul.bf16.gmra.mxu0 %v303
  %v446 = vpop.f32.mrf.mxu0
  %v447 = vadd.f32 0.0, %v446
  %v448 = vpop.f32.mrf.mxu0
  %v449 = vadd.f32 0.0, %v448
  %450 = vmatmul.bf16.gmra.mxu0 %v306
  %v451 = vpop.f32.mrf.mxu0
  %v452 = vadd.f32 0.0, %v451
  %v453 = vpop.f32.mrf.mxu0
  %v454 = vadd.f32 0.0, %v453
  %455 = vmatmul.bf16.gmra.mxu0 %v309
  %v456 = vpop.f32.mrf.mxu0
  %v457 = vadd.f32 0.0, %v456
  %v458 = vpop.f32.mrf.mxu0
  %v459 = vadd.f32 0.0, %v458
  %460 = vmatmul.bf16.gmra.mxu0 %v312
  %v461 = vpop.f32.mrf.mxu0
  %v462 = vadd.f32 0.0, %v461
  %v463 = vpop.f32.mrf.mxu0
  %v464 = vadd.f32 0.0, %v463
  %465 = vmatmul.bf16.gmra.mxu0 %v315
  %v466 = vpop.f32.mrf.mxu0
  %v467 = vadd.f32 0.0, %v466
  %v468 = vpop.f32.mrf.mxu0
  %v469 = vadd.f32 0.0, %v468
  %470 = vmatmul.bf16.gmra.mxu0 %v318
  %v471 = vpop.f32.mrf.mxu0
  %v472 = vadd.f32 0.0, %v471
  %v473 = vpop.f32.mrf.mxu0
  %v474 = vadd.f32 0.0, %v473
  %475 = vmatmul.bf16.gmra.mxu0 %v321
  %v476 = vpop.f32.mrf.mxu0
  %v477 = vadd.f32 0.0, %v476
  %v478 = vpop.f32.mrf.mxu0
  %v479 = vadd.f32 0.0, %v478
  %480 = vmatmul.bf16.gmra.mxu0 %v324
  %v481 = vpop.f32.mrf.mxu0
  %v482 = vadd.f32 0.0, %v481
  %v483 = vpop.f32.mrf.mxu0
  %v484 = vadd.f32 0.0, %v483
  %485 = vmatmul.bf16.gmra.mxu0 %v327
  %v486 = vpop.f32.mrf.mxu0
  %v487 = vadd.f32 0.0, %v486
  %v488 = vpop.f32.mrf.mxu0
  %v489 = vadd.f32 0.0, %v488
  %490 = vmatmul.bf16.gmra.mxu0 %v330
  %v491 = vpop.f32.mrf.mxu0
  %v492 = vadd.f32 0.0, %v491
  %v493 = vpop.f32.mrf.mxu0
  %v494 = vadd.f32 0.0, %v493
  %495 = vmatmul.bf16.gmra.mxu0 %v333
  %v496 = vpop.f32.mrf.mxu0
  %v497 = vadd.f32 0.0, %v496
  %v498 = vpop.f32.mrf.mxu0
  %v499 = vadd.f32 0.0, %v498
  %500 = vmatmul.bf16.gmra.mxu0 %v336
  %v501 = vpop.f32.mrf.mxu0
  %v502 = vadd.f32 0.0, %v501
  %v503 = vpop.f32.mrf.mxu0
  %v504 = vadd.f32 0.0, %v503
  %505 = vmatmul.bf16.gmra.mxu0 %v339
  %v506 = vpop.f32.mrf.mxu0
  %v507 = vadd.f32 0.0, %v506
  %v508 = vpop.f32.mrf.mxu0
  %v509 = vadd.f32 0.0, %v508
  %510 = vmatmul.bf16.gmra.mxu0 %v342
  %v511 = vpop.f32.mrf.mxu0
  %v512 = vadd.f32 0.0, %v511
  %v513 = vpop.f32.mrf.mxu0
  %v514 = vadd.f32 0.0, %v513
  %515 = vmatmul.bf16.gmra.mxu0 %v345
  %v516 = vpop.f32.mrf.mxu0
  %v517 = vadd.f32 0.0, %v516
  %v518 = vpop.f32.mrf.mxu0
  %v519 = vadd.f32 0.0, %v518
  %520 = vmatmul.bf16.gmra.mxu0 %v348
  %v521 = vpop.f32.mrf.mxu0
  %v522 = vadd.f32 0.0, %v521
  %v523 = vpop.f32.mrf.mxu0
  %v524 = vadd.f32 0.0, %v523
  %525 = vdwg.mxu0
  %vm526 = vcmask 130048
  %527 = vst.msk [vmem:[%s2] sm:$0xff] %vm526, %v367
  %528 = vst.msk [vmem:[%s2 + $0x8] sm:$0xff] %vm526, %v369
  %529 = vst.msk [vmem:[%s2 + $0x10] sm:$0xff] %vm526, %v372
  %530 = vst.msk [vmem:[%s2 + $0x18] sm:$0xff] %vm526, %v374
  %531 = vst.msk [vmem:[%s2 + $0x20] sm:$0xff] %vm526, %v377
  %532 = vst.msk [vmem:[%s2 + $0x28] sm:$0xff] %vm526, %v379
  %533 = vst.msk [vmem:[%s2 + $0x30] sm:$0xff] %vm526, %v382
  %534 = vst.msk [vmem:[%s2 + $0x38] sm:$0xff] %vm526, %v384
  %535 = vst.msk [vmem:[%s2 + $0x40] sm:$0xff] %vm526, %v387
  %536 = vst.msk [vmem:[%s2 + $0x48] sm:$0xff] %vm526, %v389
  %537 = vst.msk [vmem:[%s2 + $0x50] sm:$0xff] %vm526, %v392
  %538 = vst.msk [vmem:[%s2 + $0x58] sm:$0xff] %vm526, %v394
  %539 = vst.msk [vmem:[%s2 + $0x60] sm:$0xff] %vm526, %v397
  %540 = vst.msk [vmem:[%s2 + $0x68] sm:$0xff] %vm526, %v399
  %541 = vst.msk [vmem:[%s2 + $0x70] sm:$0xff] %vm526, %v402
  %542 = vst.msk [vmem:[%s2 + $0x78] sm:$0xff] %vm526, %v404
  %543 = vst.msk [vmem:[%s2 + $0x80] sm:$0xff] %vm526, %v407
  %544 = vst.msk [vmem:[%s2 + $0x88] sm:$0xff] %vm526, %v409
  %545 = vst.msk [vmem:[%s2 + $0x90] sm:$0xff] %vm526, %v412
  %546 = vst.msk [vmem:[%s2 + $0x98] sm:$0xff] %vm526, %v414
  %547 = vst.msk [vmem:[%s2 + $0xa0] sm:$0xff] %vm526, %v417
  %548 = vst.msk [vmem:[%s2 + $0xa8] sm:$0xff] %vm526, %v419
  %549 = vst.msk [vmem:[%s2 + $0xb0] sm:$0xff] %vm526, %v422
  %550 = vst.msk [vmem:[%s2 + $0xb8] sm:$0xff] %vm526, %v424
  %551 = vst.msk [vmem:[%s2 + $0xc0] sm:$0xff] %vm526, %v427
  %552 = vst.msk [vmem:[%s2 + $0xc8] sm:$0xff] %vm526, %v429
  %553 = vst.msk [vmem:[%s2 + $0xd0] sm:$0xff] %vm526, %v432
  %554 = vst.msk [vmem:[%s2 + $0xd8] sm:$0xff] %vm526, %v434
  %555 = vst.msk [vmem:[%s2 + $0xe0] sm:$0xff] %vm526, %v437
  %556 = vst.msk [vmem:[%s2 + $0xe8] sm:$0xff] %vm526, %v439
  %557 = vst.msk [vmem:[%s2 + $0xf0] sm:$0xff] %vm526, %v442
  %558 = vst.msk [vmem:[%s2 + $0xf8] sm:$0xff] %vm526, %v444
  %559 = vst.msk [vmem:[%s2 + $0x100] sm:$0xff] %vm526, %v447
  %560 = vst.msk [vmem:[%s2 + $0x108] sm:$0xff] %vm526, %v449
  %561 = vst.msk [vmem:[%s2 + $0x110] sm:$0xff] %vm526, %v452
  %562 = vst.msk [vmem:[%s2 + $0x118] sm:$0xff] %vm526, %v454
  %563 = vst.msk [vmem:[%s2 + $0x120] sm:$0xff] %vm526, %v457
  %564 = vst.msk [vmem:[%s2 + $0x128] sm:$0xff] %vm526, %v459
  %565 = vst.msk [vmem:[%s2 + $0x130] sm:$0xff] %vm526, %v462
  %566 = vst.msk [vmem:[%s2 + $0x138] sm:$0xff] %vm526, %v464
  %567 = vst.msk [vmem:[%s2 + $0x140] sm:$0xff] %vm526, %v467
  %568 = vst.msk [vmem:[%s2 + $0x148] sm:$0xff] %vm526, %v469
  %569 = vst.msk [vmem:[%s2 + $0x150] sm:$0xff] %vm526, %v472
  %570 = vst.msk [vmem:[%s2 + $0x158] sm:$0xff] %vm526, %v474
  %571 = vst.msk [vmem:[%s2 + $0x160] sm:$0xff] %vm526, %v477
  %572 = vst.msk [vmem:[%s2 + $0x168] sm:$0xff] %vm526, %v479
  %573 = vst.msk [vmem:[%s2 + $0x170] sm:$0xff] %vm526, %v482
  %574 = vst.msk [vmem:[%s2 + $0x178] sm:$0xff] %vm526, %v484
  %575 = vst.msk [vmem:[%s2 + $0x180] sm:$0xff] %vm526, %v487
  %576 = vst.msk [vmem:[%s2 + $0x188] sm:$0xff] %vm526, %v489
  %577 = vst.msk [vmem:[%s2 + $0x190] sm:$0xff] %vm526, %v492
  %578 = vst.msk [vmem:[%s2 + $0x198] sm:$0xff] %vm526, %v494
  %579 = vst.msk [vmem:[%s2 + $0x1a0] sm:$0xff] %vm526, %v497
  %580 = vst.msk [vmem:[%s2 + $0x1a8] sm:$0xff] %vm526, %v499
  %581 = vst.msk [vmem:[%s2 + $0x1b0] sm:$0xff] %vm526, %v502
  %582 = vst.msk [vmem:[%s2 + $0x1b8] sm:$0xff] %vm526, %v504
  %583 = vst.msk [vmem:[%s2 + $0x1c0] sm:$0xff] %vm526, %v507
  %584 = vst.msk [vmem:[%s2 + $0x1c8] sm:$0xff] %vm526, %v509
  %585 = vst.msk [vmem:[%s2 + $0x1d0] sm:$0xff] %vm526, %v512
  %586 = vst.msk [vmem:[%s2 + $0x1d8] sm:$0xff] %vm526, %v514
  %587 = vst.msk [vmem:[%s2 + $0x1e0] sm:$0xff] %vm526, %v517
  %588 = vst.msk [vmem:[%s2 + $0x1e8] sm:$0xff] %vm526, %v519
  %589 = vst.msk [vmem:[%s2 + $0x1f0] sm:$0xff] %vm526, %v522
  %590 = vst.msk [vmem:[%s2 + $0x1f8] sm:$0xff] %vm526, %v524
  %v591 = vsel %vm526, %v367, 0.0
  %v592 = vsel %vm526, %v369, 0.0
  %v593 = vadd.f32 %v591, %v592
  %v594 = vsel %vm526, %v372, 0.0
  %v595 = vadd.f32 %v593, %v594
  %v596 = vsel %vm526, %v374, 0.0
  %v597 = vadd.f32 %v595, %v596
  %v598 = vsel %vm526, %v377, 0.0
  %v599 = vadd.f32 %v597, %v598
  %v600 = vsel %vm526, %v379, 0.0
  %v601 = vadd.f32 %v599, %v600
  %v602 = vsel %vm526, %v382, 0.0
  %v603 = vadd.f32 %v601, %v602
  %v604 = vsel %vm526, %v384, 0.0
  %v605 = vadd.f32 %v603, %v604
  %v606 = vsel %vm526, %v387, 0.0
  %v607 = vadd.f32 %v605, %v606
  %v608 = vsel %vm526, %v389, 0.0
  %v609 = vadd.f32 %v607, %v608
  %v610 = vsel %vm526, %v392, 0.0
  %v611 = vadd.f32 %v609, %v610
  %v612 = vsel %vm526, %v394, 0.0
  %v613 = vadd.f32 %v611, %v612
  %v614 = vsel %vm526, %v397, 0.0
  %v615 = vadd.f32 %v613, %v614
  %v616 = vsel %vm526, %v399, 0.0
  %v617 = vadd.f32 %v615, %v616
  %v618 = vsel %vm526, %v402, 0.0
  %v619 = vadd.f32 %v617, %v618
  %v620 = vsel %vm526, %v404, 0.0
  %v621 = vadd.f32 %v619, %v620
  %v622 = vsel %vm526, %v407, 0.0
  %v623 = vadd.f32 %v621, %v622
  %v624 = vsel %vm526, %v409, 0.0
  %v625 = vadd.f32 %v623, %v624
  %v626 = vsel %vm526, %v412, 0.0
  %v627 = vadd.f32 %v625, %v626
  %v628 = vsel %vm526, %v414, 0.0
  %v629 = vadd.f32 %v627, %v628
  %v630 = vsel %vm526, %v417, 0.0
  %v631 = vadd.f32 %v629, %v630
  %v632 = vsel %vm526, %v419, 0.0
  %v633 = vadd.f32 %v631, %v632
  %v634 = vsel %vm526, %v422, 0.0
  %v635 = vadd.f32 %v633, %v634
  %v636 = vsel %vm526, %v424, 0.0
  %v637 = vadd.f32 %v635, %v636
  %v638 = vsel %vm526, %v427, 0.0
  %v639 = vadd.f32 %v637, %v638
  %v640 = vsel %vm526, %v429, 0.0
  %v641 = vadd.f32 %v639, %v640
  %v642 = vsel %vm526, %v432, 0.0
  %v643 = vadd.f32 %v641, %v642
  %v644 = vsel %vm526, %v434, 0.0
  %v645 = vadd.f32 %v643, %v644
  %v646 = vsel %vm526, %v437, 0.0
  %v647 = vadd.f32 %v645, %v646
  %v648 = vsel %vm526, %v439, 0.0
  %v649 = vadd.f32 %v647, %v648
  %v650 = vsel %vm526, %v442, 0.0
  %v651 = vadd.f32 %v649, %v650
  %v652 = vsel %vm526, %v444, 0.0
  %v653 = vadd.f32 %v651, %v652
  %v654 = vsel %vm526, %v447, 0.0
  %v655 = vadd.f32 %v653, %v654
  %v656 = vsel %vm526, %v449, 0.0
  %v657 = vadd.f32 %v655, %v656
  %v658 = vsel %vm526, %v452, 0.0
  %v659 = vadd.f32 %v657, %v658
  %v660 = vsel %vm526, %v454, 0.0
  %v661 = vadd.f32 %v659, %v660
  %v662 = vsel %vm526, %v457, 0.0
  %v663 = vadd.f32 %v661, %v662
  %v664 = vsel %vm526, %v459, 0.0
  %v665 = vadd.f32 %v663, %v664
  %v666 = vsel %vm526, %v462, 0.0
  %v667 = vadd.f32 %v665, %v666
  %v668 = vsel %vm526, %v464, 0.0
  %v669 = vadd.f32 %v667, %v668
  %v670 = vsel %vm526, %v467, 0.0
  %v671 = vadd.f32 %v669, %v670
  %v672 = vsel %vm526, %v469, 0.0
  %v673 = vadd.f32 %v671, %v672
  %v674 = vsel %vm526, %v472, 0.0
  %v675 = vadd.f32 %v673, %v674
  %v676 = vsel %vm526, %v474, 0.0
  %v677 = vadd.f32 %v675, %v676
  %v678 = vsel %vm526, %v477, 0.0
  %v679 = vadd.f32 %v677, %v678
  %v680 = vsel %vm526, %v479, 0.0
  %v681 = vadd.f32 %v679, %v680
  %v682 = vsel %vm526, %v482, 0.0
  %v683 = vadd.f32 %v681, %v682
  %v684 = vsel %vm526, %v484, 0.0
  %v685 = vadd.f32 %v683, %v684
  %v686 = vsel %vm526, %v487, 0.0
  %v687 = vadd.f32 %v685, %v686
  %v688 = vsel %vm526, %v489, 0.0
  %v689 = vadd.f32 %v687, %v688
  %v690 = vsel %vm526, %v492, 0.0
  %v691 = vadd.f32 %v689, %v690
  %v692 = vsel %vm526, %v494, 0.0
  %v693 = vadd.f32 %v691, %v692
  %v694 = vsel %vm526, %v497, 0.0
  %v695 = vadd.f32 %v693, %v694
  %v696 = vsel %vm526, %v499, 0.0
  %v697 = vadd.f32 %v695, %v696
  %v698 = vsel %vm526, %v502, 0.0
  %v699 = vadd.f32 %v697, %v698
  %v700 = vsel %vm526, %v504, 0.0
  %v701 = vadd.f32 %v699, %v700
  %v702 = vsel %vm526, %v507, 0.0
  %v703 = vadd.f32 %v701, %v702
  %v704 = vsel %vm526, %v509, 0.0
  %v705 = vadd.f32 %v703, %v704
  %v706 = vsel %vm526, %v512, 0.0
  %v707 = vadd.f32 %v705, %v706
  %v708 = vsel %vm526, %v514, 0.0
  %v709 = vadd.f32 %v707, %v708
  %v710 = vsel %vm526, %v517, 0.0
  %v711 = vadd.f32 %v709, %v710
  %v712 = vsel %vm526, %v519, 0.0
  %v713 = vadd.f32 %v711, %v712
  %v714 = vsel %vm526, %v522, 0.0
  %v715 = vadd.f32 %v713, %v714
  %v716 = vsel %vm526, %v524, 0.0
  %v717 = vadd.f32 %v715, %v716
  %v718 = vrot.slane %v717, 4
  %v719 = vadd.f32 %v717, %v718
  %v720 = vrot.slane %v719, 2
  %v721 = vadd.f32 %v719, %v720
  %v722 = vrot.slane %v721, 1
  %v723 = vadd.f32 %v721, %v722
  %v724 = vmul.f32 %v367, %v367
  %v725 = vmul.f32 %v369, %v369
  %v726 = vmul.f32 %v372, %v372
  %v727 = vmul.f32 %v374, %v374
  %v728 = vmul.f32 %v377, %v377
  %v729 = vmul.f32 %v379, %v379
  %v730 = vmul.f32 %v382, %v382
  %v731 = vmul.f32 %v384, %v384
  %v732 = vmul.f32 %v387, %v387
  %v733 = vmul.f32 %v389, %v389
  %v734 = vmul.f32 %v392, %v392
  %v735 = vmul.f32 %v394, %v394
  %v736 = vmul.f32 %v397, %v397
  %v737 = vmul.f32 %v399, %v399
  %v738 = vmul.f32 %v402, %v402
  %v739 = vmul.f32 %v404, %v404
  %v740 = vmul.f32 %v407, %v407
  %v741 = vmul.f32 %v409, %v409
  %v742 = vmul.f32 %v412, %v412
  %v743 = vmul.f32 %v414, %v414
  %v744 = vmul.f32 %v417, %v417
  %v745 = vmul.f32 %v419, %v419
  %v746 = vmul.f32 %v422, %v422
  %v747 = vmul.f32 %v424, %v424
  %v748 = vmul.f32 %v427, %v427
  %v749 = vmul.f32 %v429, %v429
  %v750 = vmul.f32 %v432, %v432
  %v751 = vmul.f32 %v434, %v434
  %v752 = vmul.f32 %v437, %v437
  %v753 = vmul.f32 %v439, %v439
  %v754 = vmul.f32 %v442, %v442
  %v755 = vmul.f32 %v444, %v444
  %v756 = vmul.f32 %v447, %v447
  %v757 = vmul.f32 %v449, %v449
  %v758 = vmul.f32 %v452, %v452
  %v759 = vmul.f32 %v454, %v454
  %v760 = vmul.f32 %v457, %v457
  %v761 = vmul.f32 %v459, %v459
  %v762 = vmul.f32 %v462, %v462
  %v763 = vmul.f32 %v464, %v464
  %v764 = vmul.f32 %v467, %v467
  %v765 = vmul.f32 %v469, %v469
  %v766 = vmul.f32 %v472, %v472
  %v767 = vmul.f32 %v474, %v474
  %v768 = vmul.f32 %v477, %v477
  %v769 = vmul.f32 %v479, %v479
  %v770 = vmul.f32 %v482, %v482
  %v771 = vmul.f32 %v484, %v484
  %v772 = vmul.f32 %v487, %v487
  %v773 = vmul.f32 %v489, %v489
  %v774 = vmul.f32 %v492, %v492
  %v775 = vmul.f32 %v494, %v494
  %v776 = vmul.f32 %v497, %v497
  %v777 = vmul.f32 %v499, %v499
  %v778 = vmul.f32 %v502, %v502
  %v779 = vmul.f32 %v504, %v504
  %v780 = vmul.f32 %v507, %v507
  %v781 = vmul.f32 %v509, %v509
  %v782 = vmul.f32 %v512, %v512
  %v783 = vmul.f32 %v514, %v514
  %v784 = vmul.f32 %v517, %v517
  %v785 = vmul.f32 %v519, %v519
  %v786 = vmul.f32 %v522, %v522
  %v787 = vmul.f32 %v524, %v524
  %v788 = vsel %vm526, %v724, 0.0
  %v789 = vsel %vm526, %v725, 0.0
  %v790 = vadd.f32 %v788, %v789
  %v791 = vsel %vm526, %v726, 0.0
  %v792 = vadd.f32 %v790, %v791
  %v793 = vsel %vm526, %v727, 0.0
  %v794 = vadd.f32 %v792, %v793
  %v795 = vsel %vm526, %v728, 0.0
  %v796 = vadd.f32 %v794, %v795
  %v797 = vsel %vm526, %v729, 0.0
  %v798 = vadd.f32 %v796, %v797
  %v799 = vsel %vm526, %v730, 0.0
  %v800 = vadd.f32 %v798, %v799
  %v801 = vsel %vm526, %v731, 0.0
  %v802 = vadd.f32 %v800, %v801
  %v803 = vsel %vm526, %v732, 0.0
  %v804 = vadd.f32 %v802, %v803
  %v805 = vsel %vm526, %v733, 0.0
  %v806 = vadd.f32 %v804, %v805
  %v807 = vsel %vm526, %v734, 0.0
  %v808 = vadd.f32 %v806, %v807
  %v809 = vsel %vm526, %v735, 0.0
  %v810 = vadd.f32 %v808, %v809
  %v811 = vsel %vm526, %v736, 0.0
  %v812 = vadd.f32 %v810, %v811
  %v813 = vsel %vm526, %v737, 0.0
  %v814 = vadd.f32 %v812, %v813
  %v815 = vsel %vm526, %v738, 0.0
  %v816 = vadd.f32 %v814, %v815
  %v817 = vsel %vm526, %v739, 0.0
  %v818 = vadd.f32 %v816, %v817
  %v819 = vsel %vm526, %v740, 0.0
  %v820 = vadd.f32 %v818, %v819
  %v821 = vsel %vm526, %v741, 0.0
  %v822 = vadd.f32 %v820, %v821
  %v823 = vsel %vm526, %v742, 0.0
  %v824 = vadd.f32 %v822, %v823
  %v825 = vsel %vm526, %v743, 0.0
  %v826 = vadd.f32 %v824, %v825
  %v827 = vsel %vm526, %v744, 0.0
  %v828 = vadd.f32 %v826, %v827
  %v829 = vsel %vm526, %v745, 0.0
  %v830 = vadd.f32 %v828, %v829
  %v831 = vsel %vm526, %v746, 0.0
  %v832 = vadd.f32 %v830, %v831
  %v833 = vsel %vm526, %v747, 0.0
  %v834 = vadd.f32 %v832, %v833
  %v835 = vsel %vm526, %v748, 0.0
  %v836 = vadd.f32 %v834, %v835
  %v837 = vsel %vm526, %v749, 0.0
  %v838 = vadd.f32 %v836, %v837
  %v839 = vsel %vm526, %v750, 0.0
  %v840 = vadd.f32 %v838, %v839
  %v841 = vsel %vm526, %v751, 0.0
  %v842 = vadd.f32 %v840, %v841
  %v843 = vsel %vm526, %v752, 0.0
  %v844 = vadd.f32 %v842, %v843
  %v845 = vsel %vm526, %v753, 0.0
  %v846 = vadd.f32 %v844, %v845
  %v847 = vsel %vm526, %v754, 0.0
  %v848 = vadd.f32 %v846, %v847
  %v849 = vsel %vm526, %v755, 0.0
  %v850 = vadd.f32 %v848, %v849
  %v851 = vsel %vm526, %v756, 0.0
  %v852 = vadd.f32 %v850, %v851
  %v853 = vsel %vm526, %v757, 0.0
  %v854 = vadd.f32 %v852, %v853
  %v855 = vsel %vm526, %v758, 0.0
  %v856 = vadd.f32 %v854, %v855
  %v857 = vsel %vm526, %v759, 0.0
  %v858 = vadd.f32 %v856, %v857
  %v859 = vsel %vm526, %v760, 0.0
  %v860 = vadd.f32 %v858, %v859
  %v861 = vsel %vm526, %v761, 0.0
  %v862 = vadd.f32 %v860, %v861
  %v863 = vsel %vm526, %v762, 0.0
  %v864 = vadd.f32 %v862, %v863
  %v865 = vsel %vm526, %v763, 0.0
  %v866 = vadd.f32 %v864, %v865
  %v867 = vsel %vm526, %v764, 0.0
  %v868 = vadd.f32 %v866, %v867
  %v869 = vsel %vm526, %v765, 0.0
  %v870 = vadd.f32 %v868, %v869
  %v871 = vsel %vm526, %v766, 0.0
  %v872 = vadd.f32 %v870, %v871
  %v873 = vsel %vm526, %v767, 0.0
  %v874 = vadd.f32 %v872, %v873
  %v875 = vsel %vm526, %v768, 0.0
  %v876 = vadd.f32 %v874, %v875
  %v877 = vsel %vm526, %v769, 0.0
  %v878 = vadd.f32 %v876, %v877
  %v879 = vsel %vm526, %v770, 0.0
  %v880 = vadd.f32 %v878, %v879
  %v881 = vsel %vm526, %v771, 0.0
  %v882 = vadd.f32 %v880, %v881
  %v883 = vsel %vm526, %v772, 0.0
  %v884 = vadd.f32 %v882, %v883
  %v885 = vsel %vm526, %v773, 0.0
  %v886 = vadd.f32 %v884, %v885
  %v887 = vsel %vm526, %v774, 0.0
  %v888 = vadd.f32 %v886, %v887
  %v889 = vsel %vm526, %v775, 0.0
  %v890 = vadd.f32 %v888, %v889
  %v891 = vsel %vm526, %v776, 0.0
  %v892 = vadd.f32 %v890, %v891
  %v893 = vsel %vm526, %v777, 0.0
  %v894 = vadd.f32 %v892, %v893
  %v895 = vsel %vm526, %v778, 0.0
  %v896 = vadd.f32 %v894, %v895
  %v897 = vsel %vm526, %v779, 0.0
  %v898 = vadd.f32 %v896, %v897
  %v899 = vsel %vm526, %v780, 0.0
  %v900 = vadd.f32 %v898, %v899
  %v901 = vsel %vm526, %v781, 0.0
  %v902 = vadd.f32 %v900, %v901
  %v903 = vsel %vm526, %v782, 0.0
  %v904 = vadd.f32 %v902, %v903
  %v905 = vsel %vm526, %v783, 0.0
  %v906 = vadd.f32 %v904, %v905
  %v907 = vsel %vm526, %v784, 0.0
  %v908 = vadd.f32 %v906, %v907
  %v909 = vsel %vm526, %v785, 0.0
  %v910 = vadd.f32 %v908, %v909
  %v911 = vsel %vm526, %v786, 0.0
  %v912 = vadd.f32 %v910, %v911
  %v913 = vsel %vm526, %v787, 0.0
  %v914 = vadd.f32 %v912, %v913
  %v915 = vrot.slane %v914, 4
  %v916 = vadd.f32 %v914, %v915
  %v917 = vrot.slane %v916, 2
  %v918 = vadd.f32 %v916, %v917
  %v919 = vrot.slane %v918, 1
  %v920 = vadd.f32 %v918, %v919
  %vm921 = vcmask 1040384
  %v922 = vsel %vm921, %v723, %v920
  %vm923 = vcmask 1041408
  %v924 = vsel %vm923, %v922, 0.0
  %925 = vst.msk [vmem:[%s3] sm:$0xff] %vm526, %v924
  // Predicated region
  $region10: #{slim_forward.29} parent=0 // pred_check
    _
  $region11: #{slim_forward.29} parent=0 // pred_check_branch
    %927 = sbr.rel (0) target = $region13
  $region12: #{slim_forward.29} parent=0 // pred_region
    _
  $region13: #{slim_forward.29} parent=0 // pred_fallthru
    _
  // Predicated region
  $region14: #{slim_forward.29} parent=0 // pred_check
    _
  $region15: #{slim_forward.29} parent=0 // pred_check_branch
    %929 = sbr.rel (0) target = $region17
  $region16: #{slim_forward.29} parent=0 // pred_region
    _
  $region17: #{slim_forward.29} parent=0 // pred_fallthru
    _
  // Predicated region
  $region18: #{slim_forward.29} parent=0 // pred_check
    _
  $region19: #{slim_forward.29} parent=0 // pred_check_branch
    %931 = sbr.rel (0) target = $region21
  $region20: #{slim_forward.29} parent=0 // pred_region
    _
  $region21: #{slim_forward.29} parent=0 // pred_fallthru
    _
  // Predicated region
  $region22: #{slim_forward.29} parent=0 // pred_check
    _
  $region23: #{slim_forward.29} parent=0 // pred_check_branch
    %933 = sbr.rel (0) target = $region25
  $region24: #{slim_forward.29} parent=0 // pred_region
    _
  $region25: #{slim_forward.29} parent=0 // pred_fallthru
    _

// kernel: slim_forward.32
$region0: #{slim_forward.32}
  #allocation0 [shape = 'u32[]', space=smem, size = 0x4, offset = 0x4, fixed_abs, tag = 'smem constant byte address 0x4 - core index']
  #allocation1 [shape = 'u32[72,128]{1,0:T(1,128)}', space=vmem, size = 0x9000, scoped, tag = 'internal scratch']
  %s0 = inlined_call_operand.vmem [shape: f32[512,32], index: 0, kind: input, shape index: {}]
  %s1 = inlined_call_operand.vmem [shape: f32[1,32], index: 1, kind: input, shape index: {}]
  %s2 = inlined_call_operand.vmem [shape: f32[1,32], index: 2, kind: input, shape index: {}]
  %s3 = inlined_call_operand.vmem [shape: bf16[512,32], index: 3, kind: output, shape index: {}]
  %s4 = sld [smem:[#allocation0]]
  $region22: #{slim_forward.32} parent=0
    _
  %s6 = ssub.s32 1, %s4
  %s7 = scalar_select 0, %s6, %s4
  // Predicated region
  $region2: #{slim_forward.32} parent=0 // pred_check
    _
  $region3: #{slim_forward.32} parent=0 // pred_check_branch
    %9 = sbr.rel (0) target = $region5
  $region4: #{slim_forward.32} parent=0 // pred_region
    _
  $region5: #{slim_forward.32} parent=0 // pred_fallthru
    _
  // Predicated region
  $region6: #{slim_forward.32} parent=0 // pred_check
    _
  $region7: #{slim_forward.32} parent=0 // pred_check_branch
    %11 = sbr.rel (0) target = $region9
  $region8: #{slim_forward.32} parent=0 // pred_region
    _
  $region9: #{slim_forward.32} parent=0 // pred_fallthru
    _
  // Predicated region
  $region10: #{slim_forward.32} parent=0 // pred_check
    _
  $region11: #{slim_forward.32} parent=0 // pred_check_branch
    %13 = sbr.rel (0) target = $region13
  $region12: #{slim_forward.32} parent=0 // pred_region
    _
  $region13: #{slim_forward.32} parent=0 // pred_fallthru
    _
  %v14 = vld [vmem:[%s0] sm:$0xff]
  %v15 = vld [vmem:[%s0 + $0x8] sm:$0xff]
  %v16 = vld [vmem:[%s0 + $0x10] sm:$0xff]
  %v17 = vld [vmem:[%s0 + $0x18] sm:$0xff]
  %v18 = vld [vmem:[%s0 + $0x20] sm:$0xff]
  %v19 = vld [vmem:[%s0 + $0x28] sm:$0xff]
  %v20 = vld [vmem:[%s0 + $0x30] sm:$0xff]
  %v21 = vld [vmem:[%s0 + $0x38] sm:$0xff]
  %v22 = vld [vmem:[%s0 + $0x40] sm:$0xff]
  %v23 = vld [vmem:[%s0 + $0x48] sm:$0xff]
  %v24 = vld [vmem:[%s0 + $0x50] sm:$0xff]
  %v25 = vld [vmem:[%s0 + $0x58] sm:$0xff]
  %v26 = vld [vmem:[%s0 + $0x60] sm:$0xff]
  %v27 = vld [vmem:[%s0 + $0x68] sm:$0xff]
  %v28 = vld [vmem:[%s0 + $0x70] sm:$0xff]
  %v29 = vld [vmem:[%s0 + $0x78] sm:$0xff]
  %v30 = vld [vmem:[%s0 + $0x80] sm:$0xff]
  %v31 = vld [vmem:[%s0 + $0x88] sm:$0xff]
  %v32 = vld [vmem:[%s0 + $0x90] sm:$0xff]
  %v33 = vld [vmem:[%s0 + $0x98] sm:$0xff]
  %v34 = vld [vmem:[%s0 + $0xa0] sm:$0xff]
  %v35 = vld [vmem:[%s0 + $0xa8] sm:$0xff]
  %v36 = vld [vmem:[%s0 + $0xb0] sm:$0xff]
  %v37 = vld [vmem:[%s0 + $0xb8] sm:$0xff]
  %v38 = vld [vmem:[%s0 + $0xc0] sm:$0xff]
  %v39 = vld [vmem:[%s0 + $0xc8] sm:$0xff]
  %v40 = vld [vmem:[%s0 + $0xd0] sm:$0xff]
  %v41 = vld [vmem:[%s0 + $0xd8] sm:$0xff]
  %v42 = vld [vmem:[%s0 + $0xe0] sm:$0xff]
  %v43 = vld [vmem:[%s0 + $0xe8] sm:$0xff]
  %v44 = vld [vmem:[%s0 + $0xf0] sm:$0xff]
  %v45 = vld [vmem:[%s0 + $0xf8] sm:$0xff]
  %v46 = vld [vmem:[%s0 + $0x100] sm:$0xff]
  %v47 = vld [vmem:[%s0 + $0x108] sm:$0xff]
  %v48 = vld [vmem:[%s0 + $0x110] sm:$0xff]
  %v49 = vld [vmem:[%s0 + $0x118] sm:$0xff]
  %v50 = vld [vmem:[%s0 + $0x120] sm:$0xff]
  %v51 = vld [vmem:[%s0 + $0x128] sm:$0xff]
  %v52 = vld [vmem:[%s0 + $0x130] sm:$0xff]
  %v53 = vld [vmem:[%s0 + $0x138] sm:$0xff]
  %v54 = vld [vmem:[%s0 + $0x140] sm:$0xff]
  %v55 = vld [vmem:[%s0 + $0x148] sm:$0xff]
  %v56 = vld [vmem:[%s0 + $0x150] sm:$0xff]
  %v57 = vld [vmem:[%s0 + $0x158] sm:$0xff]
  %v58 = vld [vmem:[%s0 + $0x160] sm:$0xff]
  %v59 = vld [vmem:[%s0 + $0x168] sm:$0xff]
  %v60 = vld [vmem:[%s0 + $0x170] sm:$0xff]
  %v61 = vld [vmem:[%s0 + $0x178] sm:$0xff]
  %v62 = vld [vmem:[%s0 + $0x180] sm:$0xff]
  %v63 = vld [vmem:[%s0 + $0x188] sm:$0xff]
  %v64 = vld [vmem:[%s0 + $0x190] sm:$0xff]
  %v65 = vld [vmem:[%s0 + $0x198] sm:$0xff]
  %v66 = vld [vmem:[%s0 + $0x1a0] sm:$0xff]
  %v67 = vld [vmem:[%s0 + $0x1a8] sm:$0xff]
  %v68 = vld [vmem:[%s0 + $0x1b0] sm:$0xff]
  %v69 = vld [vmem:[%s0 + $0x1b8] sm:$0xff]
  %v70 = vld [vmem:[%s0 + $0x1c0] sm:$0xff]
  %v71 = vld [vmem:[%s0 + $0x1c8] sm:$0xff]
  %v72 = vld [vmem:[%s0 + $0x1d0] sm:$0xff]
  %v73 = vld [vmem:[%s0 + $0x1d8] sm:$0xff]
  %v74 = vld [vmem:[%s0 + $0x1e0] sm:$0xff]
  %v75 = vld [vmem:[%s0 + $0x1e8] sm:$0xff]
  %v76 = vld [vmem:[%s0 + $0x1f0] sm:$0xff]
  %v77 = vld [vmem:[%s0 + $0x1f8] sm:$0xff]
  %v78 = vld [vmem:[%s1] sm:$0x1]
  %v80 = vperm.slane %v78, 0
  %v82 = vmul.f32 %v14, %v80
  %v83 = vmul.f32 %v15, %v80
  %v84 = vmul.f32 %v16, %v80
  %v85 = vmul.f32 %v17, %v80
  %v86 = vmul.f32 %v18, %v80
  %v87 = vmul.f32 %v19, %v80
  %v88 = vmul.f32 %v20, %v80
  %v89 = vmul.f32 %v21, %v80
  %v90 = vmul.f32 %v22, %v80
  %v91 = vmul.f32 %v23, %v80
  %v92 = vmul.f32 %v24, %v80
  %v93 = vmul.f32 %v25, %v80
  %v94 = vmul.f32 %v26, %v80
  %v95 = vmul.f32 %v27, %v80
  %v96 = vmul.f32 %v28, %v80
  %v97 = vmul.f32 %v29, %v80
  %v98 = vmul.f32 %v30, %v80
  %v99 = vmul.f32 %v31, %v80
  %v100 = vmul.f32 %v32, %v80
  %v101 = vmul.f32 %v33, %v80
  %v102 = vmul.f32 %v34, %v80
  %v103 = vmul.f32 %v35, %v80
  %v104 = vmul.f32 %v36, %v80
  %v105 = vmul.f32 %v37, %v80
  %v106 = vmul.f32 %v38, %v80
  %v107 = vmul.f32 %v39, %v80
  %v108 = vmul.f32 %v40, %v80
  %v109 = vmul.f32 %v41, %v80
  %v110 = vmul.f32 %v42, %v80
  %v111 = vmul.f32 %v43, %v80
  %v112 = vmul.f32 %v44, %v80
  %v113 = vmul.f32 %v45, %v80
  %v114 = vmul.f32 %v46, %v80
  %v115 = vmul.f32 %v47, %v80
  %v116 = vmul.f32 %v48, %v80
  %v117 = vmul.f32 %v49, %v80
  %v118 = vmul.f32 %v50, %v80
  %v119 = vmul.f32 %v51, %v80
  %v120 = vmul.f32 %v52, %v80
  %v121 = vmul.f32 %v53, %v80
  %v122 = vmul.f32 %v54, %v80
  %v123 = vmul.f32 %v55, %v80
  %v124 = vmul.f32 %v56, %v80
  %v125 = vmul.f32 %v57, %v80
  %v126 = vmul.f32 %v58, %v80
  %v127 = vmul.f32 %v59, %v80
  %v128 = vmul.f32 %v60, %v80
  %v129 = vmul.f32 %v61, %v80
  %v130 = vmul.f32 %v62, %v80
  %v131 = vmul.f32 %v63, %v80
  %v132 = vmul.f32 %v64, %v80
  %v133 = vmul.f32 %v65, %v80
  %v134 = vmul.f32 %v66, %v80
  %v135 = vmul.f32 %v67, %v80
  %v136 = vmul.f32 %v68, %v80
  %v137 = vmul.f32 %v69, %v80
  %v138 = vmul.f32 %v70, %v80
  %v139 = vmul.f32 %v71, %v80
  %v140 = vmul.f32 %v72, %v80
  %v141 = vmul.f32 %v73, %v80
  %v142 = vmul.f32 %v74, %v80
  %v143 = vmul.f32 %v75, %v80
  %v144 = vmul.f32 %v76, %v80
  %v145 = vmul.f32 %v77, %v80
  %v146 = vld [vmem:[%s2] sm:$0x1]
  %v148 = vperm.slane %v146, 0
  %v150 = vadd.f32 %v82, %v148
  %v151 = vadd.f32 %v83, %v148
  %v152 = vadd.f32 %v84, %v148
  %v153 = vadd.f32 %v85, %v148
  %v154 = vadd.f32 %v86, %v148
  %v155 = vadd.f32 %v87, %v148
  %v156 = vadd.f32 %v88, %v148
  %v157 = vadd.f32 %v89, %v148
  %v158 = vadd.f32 %v90, %v148
  %v159 = vadd.f32 %v91, %v148
  %v160 = vadd.f32 %v92, %v148
  %v161 = vadd.f32 %v93, %v148
  %v162 = vadd.f32 %v94, %v148
  %v163 = vadd.f32 %v95, %v148
  %v164 = vadd.f32 %v96, %v148
  %v165 = vadd.f32 %v97, %v148
  %v166 = vadd.f32 %v98, %v148
  %v167 = vadd.f32 %v99, %v148
  %v168 = vadd.f32 %v100, %v148
  %v169 = vadd.f32 %v101, %v148
  %v170 = vadd.f32 %v102, %v148
  %v171 = vadd.f32 %v103, %v148
  %v172 = vadd.f32 %v104, %v148
  %v173 = vadd.f32 %v105, %v148
  %v174 = vadd.f32 %v106, %v148
  %v175 = vadd.f32 %v107, %v148
  %v176 = vadd.f32 %v108, %v148
  %v177 = vadd.f32 %v109, %v148
  %v178 = vadd.f32 %v110, %v148
  %v179 = vadd.f32 %v111, %v148
  %v180 = vadd.f32 %v112, %v148
  %v181 = vadd.f32 %v113, %v148
  %v182 = vadd.f32 %v114, %v148
  %v183 = vadd.f32 %v115, %v148
  %v184 = vadd.f32 %v116, %v148
  %v185 = vadd.f32 %v117, %v148
  %v186 = vadd.f32 %v118, %v148
  %v187 = vadd.f32 %v119, %v148
  %v188 = vadd.f32 %v120, %v148
  %v189 = vadd.f32 %v121, %v148
  %v190 = vadd.f32 %v122, %v148
  %v191 = vadd.f32 %v123, %v148
  %v192 = vadd.f32 %v124, %v148
  %v193 = vadd.f32 %v125, %v148
  %v194 = vadd.f32 %v126, %v148
  %v195 = vadd.f32 %v127, %v148
  %v196 = vadd.f32 %v128, %v148
  %v197 = vadd.f32 %v129, %v148
  %v198 = vadd.f32 %v130, %v148
  %v199 = vadd.f32 %v131, %v148
  %v200 = vadd.f32 %v132, %v148
  %v201 = vadd.f32 %v133, %v148
  %v202 = vadd.f32 %v134, %v148
  %v203 = vadd.f32 %v135, %v148
  %v204 = vadd.f32 %v136, %v148
  %v205 = vadd.f32 %v137, %v148
  %v206 = vadd.f32 %v138, %v148
  %v207 = vadd.f32 %v139, %v148
  %v208 = vadd.f32 %v140, %v148
  %v209 = vadd.f32 %v141, %v148
  %v210 = vadd.f32 %v142, %v148
  %v211 = vadd.f32 %v143, %v148
  %v212 = vadd.f32 %v144, %v148
  %v213 = vadd.f32 %v145, %v148
  %v214 = vmax.f32 %v150, 0.0
  %v215 = vmax.f32 %v151, 0.0
  %v216 = vmax.f32 %v152, 0.0
  %v217 = vmax.f32 %v153, 0.0
  %v218 = vmax.f32 %v154, 0.0
  %v219 = vmax.f32 %v155, 0.0
  %v220 = vmax.f32 %v156, 0.0
  %v221 = vmax.f32 %v157, 0.0
  %v222 = vmax.f32 %v158, 0.0
  %v223 = vmax.f32 %v159, 0.0
  %v224 = vmax.f32 %v160, 0.0
  %v225 = vmax.f32 %v161, 0.0
  %v226 = vmax.f32 %v162, 0.0
  %v227 = vmax.f32 %v163, 0.0
  %v228 = vmax.f32 %v164, 0.0
  %v229 = vmax.f32 %v165, 0.0
  %v230 = vmax.f32 %v166, 0.0
  %v231 = vmax.f32 %v167, 0.0
  %v232 = vmax.f32 %v168, 0.0
  %v233 = vmax.f32 %v169, 0.0
  %v234 = vmax.f32 %v170, 0.0
  %v235 = vmax.f32 %v171, 0.0
  %v236 = vmax.f32 %v172, 0.0
  %v237 = vmax.f32 %v173, 0.0
  %v238 = vmax.f32 %v174, 0.0
  %v239 = vmax.f32 %v175, 0.0
  %v240 = vmax.f32 %v176, 0.0
  %v241 = vmax.f32 %v177, 0.0
  %v242 = vmax.f32 %v178, 0.0
  %v243 = vmax.f32 %v179, 0.0
  %v244 = vmax.f32 %v180, 0.0
  %v245 = vmax.f32 %v181, 0.0
  %v246 = vmax.f32 %v182, 0.0
  %v247 = vmax.f32 %v183, 0.0
  %v248 = vmax.f32 %v184, 0.0
  %v249 = vmax.f32 %v185, 0.0
  %v250 = vmax.f32 %v186, 0.0
  %v251 = vmax.f32 %v187, 0.0
  %v252 = vmax.f32 %v188, 0.0
  %v253 = vmax.f32 %v189, 0.0
  %v254 = vmax.f32 %v190, 0.0
  %v255 = vmax.f32 %v191, 0.0
  %v256 = vmax.f32 %v192, 0.0
  %v257 = vmax.f32 %v193, 0.0
  %v258 = vmax.f32 %v194, 0.0
  %v259 = vmax.f32 %v195, 0.0
  %v260 = vmax.f32 %v196, 0.0
  %v261 = vmax.f32 %v197, 0.0
  %v262 = vmax.f32 %v198, 0.0
  %v263 = vmax.f32 %v199, 0.0
  %v264 = vmax.f32 %v200, 0.0
  %v265 = vmax.f32 %v201, 0.0
  %v266 = vmax.f32 %v202, 0.0
  %v267 = vmax.f32 %v203, 0.0
  %v268 = vmax.f32 %v204, 0.0
  %v269 = vmax.f32 %v205, 0.0
  %v270 = vmax.f32 %v206, 0.0
  %v271 = vmax.f32 %v207, 0.0
  %v272 = vmax.f32 %v208, 0.0
  %v273 = vmax.f32 %v209, 0.0
  %v274 = vmax.f32 %v210, 0.0
  %v275 = vmax.f32 %v211, 0.0
  %v276 = vmax.f32 %v212, 0.0
  %v277 = vmax.f32 %v213, 0.0
  %v278 = vpack.c.bf16 %v214, %v214
  %v279 = vpack.c.bf16 %v215, %v215
  %v280 = vpack.c.bf16 %v216, %v216
  %v281 = vpack.c.bf16 %v217, %v217
  %v282 = vpack.c.bf16 %v218, %v218
  %v283 = vpack.c.bf16 %v219, %v219
  %v284 = vpack.c.bf16 %v220, %v220
  %v285 = vpack.c.bf16 %v221, %v221
  %v286 = vpack.c.bf16 %v222, %v222
  %v287 = vpack.c.bf16 %v223, %v223
  %v288 = vpack.c.bf16 %v224, %v224
  %v289 = vpack.c.bf16 %v225, %v225
  %v290 = vpack.c.bf16 %v226, %v226
  %v291 = vpack.c.bf16 %v227, %v227
  %v292 = vpack.c.bf16 %v228, %v228
  %v293 = vpack.c.bf16 %v229, %v229
  %v294 = vpack.c.bf16 %v230, %v230
  %v295 = vpack.c.bf16 %v231, %v231
  %v296 = vpack.c.bf16 %v232, %v232
  %v297 = vpack.c.bf16 %v233, %v233
  %v298 = vpack.c.bf16 %v234, %v234
  %v299 = vpack.c.bf16 %v235, %v235
  %v300 = vpack.c.bf16 %v236, %v236
  %v301 = vpack.c.bf16 %v237, %v237
  %v302 = vpack.c.bf16 %v238, %v238
  %v303 = vpack.c.bf16 %v239, %v239
  %v304 = vpack.c.bf16 %v240, %v240
  %v305 = vpack.c.bf16 %v241, %v241
  %v306 = vpack.c.bf16 %v242, %v242
  %v307 = vpack.c.bf16 %v243, %v243
  %v308 = vpack.c.bf16 %v244, %v244
  %v309 = vpack.c.bf16 %v245, %v245
  %v310 = vpack.c.bf16 %v246, %v246
  %v311 = vpack.c.bf16 %v247, %v247
  %v312 = vpack.c.bf16 %v248, %v248
  %v313 = vpack.c.bf16 %v249, %v249
  %v314 = vpack.c.bf16 %v250, %v250
  %v315 = vpack.c.bf16 %v251, %v251
  %v316 = vpack.c.bf16 %v252, %v252
  %v317 = vpack.c.bf16 %v253, %v253
  %v318 = vpack.c.bf16 %v254, %v254
  %v319 = vpack.c.bf16 %v255, %v255
  %v320 = vpack.c.bf16 %v256, %v256
  %v321 = vpack.c.bf16 %v257, %v257
  %v322 = vpack.c.bf16 %v258, %v258
  %v323 = vpack.c.bf16 %v259, %v259
  %v324 = vpack.c.bf16 %v260, %v260
  %v325 = vpack.c.bf16 %v261, %v261
  %v326 = vpack.c.bf16 %v262, %v262
  %v327 = vpack.c.bf16 %v263, %v263
  %v328 = vpack.c.bf16 %v264, %v264
  %v329 = vpack.c.bf16 %v265, %v265
  %v330 = vpack.c.bf16 %v266, %v266
  %v331 = vpack.c.bf16 %v267, %v267
  %v332 = vpack.c.bf16 %v268, %v268
  %v333 = vpack.c.bf16 %v269, %v269
  %v334 = vpack.c.bf16 %v270, %v270
  %v335 = vpack.c.bf16 %v271, %v271
  %v336 = vpack.c.bf16 %v272, %v272
  %v337 = vpack.c.bf16 %v273, %v273
  %v338 = vpack.c.bf16 %v274, %v274
  %v339 = vpack.c.bf16 %v275, %v275
  %v340 = vpack.c.bf16 %v276, %v276
  %v341 = vpack.c.bf16 %v277, %v277
  %vm342 = vcmask 257024
  %343 = vst.msk [vmem:[%s3] sm:$0xf] %vm342, %v278
  %344 = vst.msk [vmem:[%s3 + $0x4] sm:$0xf] %vm342, %v279
  %345 = vst.msk [vmem:[%s3 + $0x8] sm:$0xf] %vm342, %v280
  %346 = vst.msk [vmem:[%s3 + $0xc] sm:$0xf] %vm342, %v281
  %347 = vst.msk [vmem:[%s3 + $0x10] sm:$0xf] %vm342, %v282
  %348 = vst.msk [vmem:[%s3 + $0x14] sm:$0xf] %vm342, %v283
  %349 = vst.msk [vmem:[%s3 + $0x18] sm:$0xf] %vm342, %v284
  %350 = vst.msk [vmem:[%s3 + $0x1c] sm:$0xf] %vm342, %v285
  %351 = vst.msk [vmem:[%s3 + $0x20] sm:$0xf] %vm342, %v286
  %352 = vst.msk [vmem:[%s3 + $0x24] sm:$0xf] %vm342, %v287
  %353 = vst.msk [vmem:[%s3 + $0x28] sm:$0xf] %vm342, %v288
  %354 = vst.msk [vmem:[%s3 + $0x2c] sm:$0xf] %vm342, %v289
  %355 = vst.msk [vmem:[%s3 + $0x30] sm:$0xf] %vm342, %v290
  %356 = vst.msk [vmem:[%s3 + $0x34] sm:$0xf] %vm342, %v291
  %357 = vst.msk [vmem:[%s3 + $0x38] sm:$0xf] %vm342, %v292
  %358 = vst.msk [vmem:[%s3 + $0x3c] sm:$0xf] %vm342, %v293
  %359 = vst.msk [vmem:[%s3 + $0x40] sm:$0xf] %vm342, %v294
  %360 = vst.msk [vmem:[%s3 + $0x44] sm:$0xf] %vm342, %v295
  %361 = vst.msk [vmem:[%s3 + $0x48] sm:$0xf] %vm342, %v296
  %362 = vst.msk [vmem:[%s3 + $0x4c] sm:$0xf] %vm342, %v297
  %363 = vst.msk [vmem:[%s3 + $0x50] sm:$0xf] %vm342, %v298
  %364 = vst.msk [vmem:[%s3 + $0x54] sm:$0xf] %vm342, %v299
  %365 = vst.msk [vmem:[%s3 + $0x58] sm:$0xf] %vm342, %v300
  %366 = vst.msk [vmem:[%s3 + $0x5c] sm:$0xf] %vm342, %v301
  %367 = vst.msk [vmem:[%s3 + $0x60] sm:$0xf] %vm342, %v302
  %368 = vst.msk [vmem:[%s3 + $0x64] sm:$0xf] %vm342, %v303
  %369 = vst.msk [vmem:[%s3 + $0x68] sm:$0xf] %vm342, %v304
  %370 = vst.msk [vmem:[%s3 + $0x6c] sm:$0xf] %vm342, %v305
  %371 = vst.msk [vmem:[%s3 + $0x70] sm:$0xf] %vm342, %v306
  %372 = vst.msk [vmem:[%s3 + $0x74] sm:$0xf] %vm342, %v307
  %373 = vst.msk [vmem:[%s3 + $0x78] sm:$0xf] %vm342, %v308
  %374 = vst.msk [vmem:[%s3 + $0x7c] sm:$0xf] %vm342, %v309
  %375 = vst.msk [vmem:[%s3 + $0x80] sm:$0xf] %vm342, %v310
  %376 = vst.msk [vmem:[%s3 + $0x84] sm:$0xf] %vm342, %v311
  %377 = vst.msk [vmem:[%s3 + $0x88] sm:$0xf] %vm342, %v312
  %378 = vst.msk [vmem:[%s3 + $0x8c] sm:$0xf] %vm342, %v313
  %379 = vst.msk [vmem:[%s3 + $0x90] sm:$0xf] %vm342, %v314
  %380 = vst.msk [vmem:[%s3 + $0x94] sm:$0xf] %vm342, %v315
  %381 = vst.msk [vmem:[%s3 + $0x98] sm:$0xf] %vm342, %v316
  %382 = vst.msk [vmem:[%s3 + $0x9c] sm:$0xf] %vm342, %v317
  %383 = vst.msk [vmem:[%s3 + $0xa0] sm:$0xf] %vm342, %v318
  %384 = vst.msk [vmem:[%s3 + $0xa4] sm:$0xf] %vm342, %v319
  %385 = vst.msk [vmem:[%s3 + $0xa8] sm:$0xf] %vm342, %v320
  %386 = vst.msk [vmem:[%s3 + $0xac] sm:$0xf] %vm342, %v321
  %387 = vst.msk [vmem:[%s3 + $0xb0] sm:$0xf] %vm342, %v322
  %388 = vst.msk [vmem:[%s3 + $0xb4] sm:$0xf] %vm342, %v323
  %389 = vst.msk [vmem:[%s3 + $0xb8] sm:$0xf] %vm342, %v324
  %390 = vst.msk [vmem:[%s3 + $0xbc] sm:$0xf] %vm342, %v325
  %391 = vst.msk [vmem:[%s3 + $0xc0] sm:$0xf] %vm342, %v326
  %392 = vst.msk [vmem:[%s3 + $0xc4] sm:$0xf] %vm342, %v327
  %393 = vst.msk [vmem:[%s3 + $0xc8] sm:$0xf] %vm342, %v328
  %394 = vst.msk [vmem:[%s3 + $0xcc] sm:$0xf] %vm342, %v329
  %395 = vst.msk [vmem:[%s3 + $0xd0] sm:$0xf] %vm342, %v330
  %396 = vst.msk [vmem:[%s3 + $0xd4] sm:$0xf] %vm342, %v331
  %397 = vst.msk [vmem:[%s3 + $0xd8] sm:$0xf] %vm342, %v332
  %398 = vst.msk [vmem:[%s3 + $0xdc] sm:$0xf] %vm342, %v333
  %399 = vst.msk [vmem:[%s3 + $0xe0] sm:$0xf] %vm342, %v334
  %400 = vst.msk [vmem:[%s3 + $0xe4] sm:$0xf] %vm342, %v335
  %401 = vst.msk [vmem:[%s3 + $0xe8] sm:$0xf] %vm342, %v336
  %402 = vst.msk [vmem:[%s3 + $0xec] sm:$0xf] %vm342, %v337
  %403 = vst.msk [vmem:[%s3 + $0xf0] sm:$0xf] %vm342, %v338
  %404 = vst.msk [vmem:[%s3 + $0xf4] sm:$0xf] %vm342, %v339
  %405 = vst.msk [vmem:[%s3 + $0xf8] sm:$0xf] %vm342, %v340
  %406 = vst.msk [vmem:[%s3 + $0xfc] sm:$0xf] %vm342, %v341
  // Predicated region
  $region14: #{slim_forward.32} parent=0 // pred_check
    _
  $region15: #{slim_forward.32} parent=0 // pred_check_branch
    %408 = sbr.rel (0) target = $region17
  $region16: #{slim_forward.32} parent=0 // pred_region
    _
  $region17: #{slim_forward.32} parent=0 // pred_fallthru
    _
  // Predicated region
  $region18: #{slim_forward.32} parent=0 // pred_check
    _
  $region19: #{slim_forward.32} parent=0 // pred_check_branch
    %410 = sbr.rel (0) target = $region21
  $region20: #{slim_forward.32} parent=0 // pred_region
    _
  $region21: #{slim_forward.32} parent=0 // pred_fallthru
    _

// kernel: slim_forward.31
$region0: #{slim_forward.31}
  #allocation0 [shape = 'u32[]', space=smem, size = 0x4, offset = 0x4, fixed_abs, tag = 'smem constant byte address 0x4 - core index']
  #allocation1 [shape = 'u32[72,128]{1,0:T(1,128)}', space=vmem, size = 0x9000, scoped, tag = 'internal scratch']
  %s0 = inlined_call_operand.vmem [shape: bf16[512,144], index: 0, kind: input, shape index: {}]
  %s1 = inlined_call_operand.vmem [shape: bf16[144,32], index: 1, kind: input, shape index: {}]
  %s2 = inlined_call_operand.vmem [shape: f32[512,32], index: 2, kind: output, shape index: {0}]
  %s3 = inlined_call_operand.vmem [shape: f32[8,32], index: 3, kind: output, shape index: {1}]
  %4 = xla_tuple %s2, %s3
  %s5 = sld [smem:[#allocation0]]
  $region26: #{slim_forward.31} parent=0
    _
  %s7 = ssub.s32 1, %s5
  %s8 = scalar_select 0, %s7, %s5
  // Predicated region
  $region2: #{slim_forward.31} parent=0 // pred_check
    _
  $region3: #{slim_forward.31} parent=0 // pred_check_branch
    %10 = sbr.rel (0) target = $region5
  $region4: #{slim_forward.31} parent=0 // pred_region
    _
  $region5: #{slim_forward.31} parent=0 // pred_fallthru
    _
  // Predicated region
  $region6: #{slim_forward.31} parent=0 // pred_check
    _
  $region7: #{slim_forward.31} parent=0 // pred_check_branch
    %12 = sbr.rel (0) target = $region9
  $region8: #{slim_forward.31} parent=0 // pred_region
    _
  $region9: #{slim_forward.31} parent=0 // pred_fallthru
    _
  %v14 = vld [vmem:[%s0] sm:$0xff]
  %v15 = vld [vmem:[%s0 + $0x8] sm:$0xff]
  %v16 = vld [vmem:[%s0 + $0x10] sm:$0xff]
  %v17 = vld [vmem:[%s0 + $0x18] sm:$0xff]
  %v18 = vld [vmem:[%s0 + $0x20] sm:$0xff]
  %v19 = vld [vmem:[%s0 + $0x28] sm:$0xff]
  %v20 = vld [vmem:[%s0 + $0x30] sm:$0xff]
  %v21 = vld [vmem:[%s0 + $0x38] sm:$0xff]
  %v22 = vld [vmem:[%s0 + $0x40] sm:$0xff]
  %v23 = vld [vmem:[%s0 + $0x48] sm:$0xff]
  %v24 = vld [vmem:[%s0 + $0x50] sm:$0xff]
  %v25 = vld [vmem:[%s0 + $0x58] sm:$0xff]
  %v26 = vld [vmem:[%s0 + $0x60] sm:$0xff]
  %v27 = vld [vmem:[%s0 + $0x68] sm:$0xff]
  %v28 = vld [vmem:[%s0 + $0x70] sm:$0xff]
  %v29 = vld [vmem:[%s0 + $0x78] sm:$0xff]
  %v30 = vld [vmem:[%s0 + $0x80] sm:$0xff]
  %v31 = vld [vmem:[%s0 + $0x88] sm:$0xff]
  %v32 = vld [vmem:[%s0 + $0x90] sm:$0xff]
  %v33 = vld [vmem:[%s0 + $0x98] sm:$0xff]
  %v34 = vld [vmem:[%s0 + $0xa0] sm:$0xff]
  %v35 = vld [vmem:[%s0 + $0xa8] sm:$0xff]
  %v36 = vld [vmem:[%s0 + $0xb0] sm:$0xff]
  %v37 = vld [vmem:[%s0 + $0xb8] sm:$0xff]
  %v38 = vld [vmem:[%s0 + $0xc0] sm:$0xff]
  %v39 = vld [vmem:[%s0 + $0xc8] sm:$0xff]
  %v40 = vld [vmem:[%s0 + $0xd0] sm:$0xff]
  %v41 = vld [vmem:[%s0 + $0xd8] sm:$0xff]
  %v42 = vld [vmem:[%s0 + $0xe0] sm:$0xff]
  %v43 = vld [vmem:[%s0 + $0xe8] sm:$0xff]
  %v44 = vld [vmem:[%s0 + $0xf0] sm:$0xff]
  %v45 = vld [vmem:[%s0 + $0xf8] sm:$0xff]
  %v46 = vld [vmem:[%s0 + $0x100] sm:$0xff]
  %v47 = vld [vmem:[%s0 + $0x108] sm:$0xff]
  %v48 = vld [vmem:[%s0 + $0x110] sm:$0xff]
  %v49 = vld [vmem:[%s0 + $0x118] sm:$0xff]
  %v50 = vld [vmem:[%s0 + $0x120] sm:$0xff]
  %v51 = vld [vmem:[%s0 + $0x128] sm:$0xff]
  %v52 = vld [vmem:[%s0 + $0x130] sm:$0xff]
  %v53 = vld [vmem:[%s0 + $0x138] sm:$0xff]
  %v54 = vld [vmem:[%s0 + $0x140] sm:$0xff]
  %v55 = vld [vmem:[%s0 + $0x148] sm:$0xff]
  %v56 = vld [vmem:[%s0 + $0x150] sm:$0xff]
  %v57 = vld [vmem:[%s0 + $0x158] sm:$0xff]
  %v58 = vld [vmem:[%s0 + $0x160] sm:$0xff]
  %v59 = vld [vmem:[%s0 + $0x168] sm:$0xff]
  %v60 = vld [vmem:[%s0 + $0x170] sm:$0xff]
  %v61 = vld [vmem:[%s0 + $0x178] sm:$0xff]
  %v62 = vld [vmem:[%s0 + $0x180] sm:$0xff]
  %v63 = vld [vmem:[%s0 + $0x188] sm:$0xff]
  %v64 = vld [vmem:[%s0 + $0x190] sm:$0xff]
  %v65 = vld [vmem:[%s0 + $0x198] sm:$0xff]
  %v66 = vld [vmem:[%s0 + $0x1a0] sm:$0xff]
  %v67 = vld [vmem:[%s0 + $0x1a8] sm:$0xff]
  %v68 = vld [vmem:[%s0 + $0x1b0] sm:$0xff]
  %v69 = vld [vmem:[%s0 + $0x1b8] sm:$0xff]
  %v70 = vld [vmem:[%s0 + $0x1c0] sm:$0xff]
  %v71 = vld [vmem:[%s0 + $0x1c8] sm:$0xff]
  %v72 = vld [vmem:[%s0 + $0x1d0] sm:$0xff]
  %v73 = vld [vmem:[%s0 + $0x1d8] sm:$0xff]
  %v74 = vld [vmem:[%s0 + $0x1e0] sm:$0xff]
  %v75 = vld [vmem:[%s0 + $0x1e8] sm:$0xff]
  %v76 = vld [vmem:[%s0 + $0x1f0] sm:$0xff]
  %v77 = vld [vmem:[%s0 + $0x1f8] sm:$0xff]
  %v78 = vld [vmem:[%s1] sm:$0xf]
  %v79 = vld [vmem:[%s1 + $0x4] sm:$0xf]
  %v80 = vld [vmem:[%s1 + $0x8] sm:$0xf]
  %v81 = vld [vmem:[%s1 + $0xc] sm:$0xf]
  %v82 = vld [vmem:[%s1 + $0x10] sm:$0xf]
  %v83 = vld [vmem:[%s1 + $0x14] sm:$0xf]
  %v84 = vld [vmem:[%s1 + $0x18] sm:$0xf]
  %v85 = vld [vmem:[%s1 + $0x1c] sm:$0xf]
  %v86 = vld [vmem:[%s1 + $0x20] sm:$0xf]
  %v87 = vld [vmem:[%s1 + $0x24] sm:$0xf]
  %v88 = vld [vmem:[%s1 + $0x28] sm:$0xf]
  %v89 = vld [vmem:[%s1 + $0x2c] sm:$0xf]
  %v90 = vld [vmem:[%s1 + $0x30] sm:$0xf]
  %v91 = vld [vmem:[%s1 + $0x34] sm:$0xf]
  %v92 = vld [vmem:[%s1 + $0x38] sm:$0xf]
  %v93 = vld [vmem:[%s1 + $0x3c] sm:$0xf]
  %v94 = vld [vmem:[%s1 + $0x40] sm:$0xf]
  %v95 = vld [vmem:[%s1 + $0x44] sm:$0xf]
  %v160 = vunpack.c.l.b16 %v14
  %v161 = vunpack.c.h.b16 %v14
  %v162 = vunpack.c.l.b16 %v15
  %v163 = vunpack.c.h.b16 %v15
  %v164 = vunpack.c.l.b16 %v16
  %v165 = vunpack.c.h.b16 %v16
  %v166 = vunpack.c.l.b16 %v17
  %v167 = vunpack.c.h.b16 %v17
  %v168 = vunpack.c.l.b16 %v18
  %v169 = vunpack.c.h.b16 %v18
  %v170 = vunpack.c.l.b16 %v19
  %v171 = vunpack.c.h.b16 %v19
  %v172 = vunpack.c.l.b16 %v20
  %v173 = vunpack.c.h.b16 %v20
  %v174 = vunpack.c.l.b16 %v21
  %v175 = vunpack.c.h.b16 %v21
  %v176 = vunpack.c.l.b16 %v22
  %v177 = vunpack.c.h.b16 %v22
  %v178 = vunpack.c.l.b16 %v23
  %v179 = vunpack.c.h.b16 %v23
  %v180 = vunpack.c.l.b16 %v24
  %v181 = vunpack.c.h.b16 %v24
  %v182 = vunpack.c.l.b16 %v25
  %v183 = vunpack.c.h.b16 %v25
  %v184 = vunpack.c.l.b16 %v26
  %v185 = vunpack.c.h.b16 %v26
  %v186 = vunpack.c.l.b16 %v27
  %v187 = vunpack.c.h.b16 %v27
  %v188 = vunpack.c.l.b16 %v28
  %v189 = vunpack.c.h.b16 %v28
  %v190 = vunpack.c.l.b16 %v29
  %v191 = vunpack.c.h.b16 %v29
  %v192 = vunpack.c.l.b16 %v30
  %v193 = vunpack.c.h.b16 %v30
  %v194 = vunpack.c.l.b16 %v31
  %v195 = vunpack.c.h.b16 %v31
  %v196 = vunpack.c.l.b16 %v32
  %v197 = vunpack.c.h.b16 %v32
  %v198 = vunpack.c.l.b16 %v33
  %v199 = vunpack.c.h.b16 %v33
  %v200 = vunpack.c.l.b16 %v34
  %v201 = vunpack.c.h.b16 %v34
  %v202 = vunpack.c.l.b16 %v35
  %v203 = vunpack.c.h.b16 %v35
  %v204 = vunpack.c.l.b16 %v36
  %v205 = vunpack.c.h.b16 %v36
  %v206 = vunpack.c.l.b16 %v37
  %v207 = vunpack.c.h.b16 %v37
  %v208 = vunpack.c.l.b16 %v38
  %v209 = vunpack.c.h.b16 %v38
  %v210 = vunpack.c.l.b16 %v39
  %v211 = vunpack.c.h.b16 %v39
  %v212 = vunpack.c.l.b16 %v40
  %v213 = vunpack.c.h.b16 %v40
  %v214 = vunpack.c.l.b16 %v41
  %v215 = vunpack.c.h.b16 %v41
  %v216 = vunpack.c.l.b16 %v42
  %v217 = vunpack.c.h.b16 %v42
  %v218 = vunpack.c.l.b16 %v43
  %v219 = vunpack.c.h.b16 %v43
  %v220 = vunpack.c.l.b16 %v44
  %v221 = vunpack.c.h.b16 %v44
  %v222 = vunpack.c.l.b16 %v45
  %v223 = vunpack.c.h.b16 %v45
  %v224 = vunpack.c.l.b16 %v46
  %v225 = vunpack.c.h.b16 %v46
  %v226 = vunpack.c.l.b16 %v47
  %v227 = vunpack.c.h.b16 %v47
  %v228 = vunpack.c.l.b16 %v48
  %v229 = vunpack.c.h.b16 %v48
  %v230 = vunpack.c.l.b16 %v49
  %v231 = vunpack.c.h.b16 %v49
  %v232 = vunpack.c.l.b16 %v50
  %v233 = vunpack.c.h.b16 %v50
  %v234 = vunpack.c.l.b16 %v51
  %v235 = vunpack.c.h.b16 %v51
  %v236 = vunpack.c.l.b16 %v52
  %v237 = vunpack.c.h.b16 %v52
  %v238 = vunpack.c.l.b16 %v53
  %v239 = vunpack.c.h.b16 %v53
  %v240 = vunpack.c.l.b16 %v54
  %v241 = vunpack.c.h.b16 %v54
  %v242 = vunpack.c.l.b16 %v55
  %v243 = vunpack.c.h.b16 %v55
  %v244 = vunpack.c.l.b16 %v56
  %v245 = vunpack.c.h.b16 %v56
  %v246 = vunpack.c.l.b16 %v57
  %v247 = vunpack.c.h.b16 %v57
  %v248 = vunpack.c.l.b16 %v58
  %v249 = vunpack.c.h.b16 %v58
  %v250 = vunpack.c.l.b16 %v59
  %v251 = vunpack.c.h.b16 %v59
  %v252 = vunpack.c.l.b16 %v60
  %v253 = vunpack.c.h.b16 %v60
  %v254 = vunpack.c.l.b16 %v61
  %v255 = vunpack.c.h.b16 %v61
  %v256 = vunpack.c.l.b16 %v62
  %v257 = vunpack.c.h.b16 %v62
  %v258 = vunpack.c.l.b16 %v63
  %v259 = vunpack.c.h.b16 %v63
  %v260 = vunpack.c.l.b16 %v64
  %v261 = vunpack.c.h.b16 %v64
  %v262 = vunpack.c.l.b16 %v65
  %v263 = vunpack.c.h.b16 %v65
  %v264 = vunpack.c.l.b16 %v66
  %v265 = vunpack.c.h.b16 %v66
  %v266 = vunpack.c.l.b16 %v67
  %v267 = vunpack.c.h.b16 %v67
  %v268 = vunpack.c.l.b16 %v68
  %v269 = vunpack.c.h.b16 %v68
  %v270 = vunpack.c.l.b16 %v69
  %v271 = vunpack.c.h.b16 %v69
  %v272 = vunpack.c.l.b16 %v70
  %v273 = vunpack.c.h.b16 %v70
  %v274 = vunpack.c.l.b16 %v71
  %v275 = vunpack.c.h.b16 %v71
  %v276 = vunpack.c.l.b16 %v72
  %v277 = vunpack.c.h.b16 %v72
  %v278 = vunpack.c.l.b16 %v73
  %v279 = vunpack.c.h.b16 %v73
  %v280 = vunpack.c.l.b16 %v74
  %v281 = vunpack.c.h.b16 %v74
  %v282 = vunpack.c.l.b16 %v75
  %v283 = vunpack.c.h.b16 %v75
  %v284 = vunpack.c.l.b16 %v76
  %v285 = vunpack.c.h.b16 %v76
  %v286 = vunpack.c.l.b16 %v77
  %v287 = vunpack.c.h.b16 %v77
  %v288 = vpack.c.b16 %v162, %v160
  %v289 = vpack.c.b16 %v163, %v161
  %v290 = vpack.c.b16 %v166, %v164
  %v291 = vpack.c.b16 %v167, %v165
  %v292 = vpack.c.b16 %v170, %v168
  %v293 = vpack.c.b16 %v171, %v169
  %v294 = vpack.c.b16 %v174, %v172
  %v295 = vpack.c.b16 %v175, %v173
  %v296 = vpack.c.b16 %v178, %v176
  %v297 = vpack.c.b16 %v179, %v177
  %v298 = vpack.c.b16 %v182, %v180
  %v299 = vpack.c.b16 %v183, %v181
  %v300 = vpack.c.b16 %v186, %v184
  %v301 = vpack.c.b16 %v187, %v185
  %v302 = vpack.c.b16 %v190, %v188
  %v303 = vpack.c.b16 %v191, %v189
  %v304 = vpack.c.b16 %v194, %v192
  %v305 = vpack.c.b16 %v195, %v193
  %v306 = vpack.c.b16 %v198, %v196
  %v307 = vpack.c.b16 %v199, %v197
  %v308 = vpack.c.b16 %v202, %v200
  %v309 = vpack.c.b16 %v203, %v201
  %v310 = vpack.c.b16 %v206, %v204
  %v311 = vpack.c.b16 %v207, %v205
  %v312 = vpack.c.b16 %v210, %v208
  %v313 = vpack.c.b16 %v211, %v209
  %v314 = vpack.c.b16 %v214, %v212
  %v315 = vpack.c.b16 %v215, %v213
  %v316 = vpack.c.b16 %v218, %v216
  %v317 = vpack.c.b16 %v219, %v217
  %v318 = vpack.c.b16 %v222, %v220
  %v319 = vpack.c.b16 %v223, %v221
  %v320 = vpack.c.b16 %v226, %v224
  %v321 = vpack.c.b16 %v227, %v225
  %v322 = vpack.c.b16 %v230, %v228
  %v323 = vpack.c.b16 %v231, %v229
  %v324 = vpack.c.b16 %v234, %v232
  %v325 = vpack.c.b16 %v235, %v233
  %v326 = vpack.c.b16 %v238, %v236
  %v327 = vpack.c.b16 %v239, %v237
  %v328 = vpack.c.b16 %v242, %v240
  %v329 = vpack.c.b16 %v243, %v241
  %v330 = vpack.c.b16 %v246, %v244
  %v331 = vpack.c.b16 %v247, %v245
  %v332 = vpack.c.b16 %v250, %v248
  %v333 = vpack.c.b16 %v251, %v249
  %v334 = vpack.c.b16 %v254, %v252
  %v335 = vpack.c.b16 %v255, %v253
  %v336 = vpack.c.b16 %v258, %v256
  %v337 = vpack.c.b16 %v259, %v257
  %v338 = vpack.c.b16 %v262, %v260
  %v339 = vpack.c.b16 %v263, %v261
  %v340 = vpack.c.b16 %v266, %v264
  %v341 = vpack.c.b16 %v267, %v265
  %v342 = vpack.c.b16 %v270, %v268
  %v343 = vpack.c.b16 %v271, %v269
  %v344 = vpack.c.b16 %v274, %v272
  %v345 = vpack.c.b16 %v275, %v273
  %v346 = vpack.c.b16 %v278, %v276
  %v347 = vpack.c.b16 %v279, %v277
  %v348 = vpack.c.b16 %v282, %v280
  %v349 = vpack.c.b16 %v283, %v281
  %v350 = vpack.c.b16 %v286, %v284
  %v351 = vpack.c.b16 %v287, %v285
  %v402 = vunpack.c.l.b16 %v78
  %v403 = vunpack.c.l.b16 %v79
  %v404 = vunpack.c.l.b16 %v80
  %v405 = vunpack.c.l.b16 %v81
  %v406 = vunpack.c.l.b16 %v82
  %v407 = vunpack.c.l.b16 %v83
  %v408 = vunpack.c.l.b16 %v84
  %v409 = vunpack.c.l.b16 %v85
  %v410 = vunpack.c.l.b16 %v86
  %v411 = vunpack.c.l.b16 %v87
  %v412 = vunpack.c.l.b16 %v88
  %v413 = vunpack.c.l.b16 %v89
  %v414 = vunpack.c.l.b16 %v90
  %v415 = vunpack.c.l.b16 %v91
  %v416 = vunpack.c.l.b16 %v92
  %v417 = vunpack.c.l.b16 %v93
  %v418 = vunpack.c.l.b16 %v94
  %v419 = vunpack.c.l.b16 %v95
  %v420 = vpack.c.b16 %v403, %v402
  %v421 = vpack.c.b16 %v405, %v404
  %v422 = vpack.c.b16 %v407, %v406
  %v423 = vpack.c.b16 %v409, %v408
  %v424 = vpack.c.b16 %v411, %v410
  %v425 = vpack.c.b16 %v413, %v412
  %v426 = vpack.c.b16 %v415, %v414
  %v427 = vpack.c.b16 %v417, %v416
  %v428 = vpack.c.b16 %v419, %v418
  %vm438 = vcmask 130048
  %v440 = vsel %vm438, %v289, 0
  %v443 = vsel %vm438, %v291, 0
  %v446 = vsel %vm438, %v293, 0
  %v449 = vsel %vm438, %v295, 0
  %v452 = vsel %vm438, %v297, 0
  %v455 = vsel %vm438, %v299, 0
  %v458 = vsel %vm438, %v301, 0
  %v461 = vsel %vm438, %v303, 0
  %v464 = vsel %vm438, %v305, 0
  %v467 = vsel %vm438, %v307, 0
  %v470 = vsel %vm438, %v309, 0
  %v473 = vsel %vm438, %v311, 0
  %v476 = vsel %vm438, %v313, 0
  %v479 = vsel %vm438, %v315, 0
  %v482 = vsel %vm438, %v317, 0
  %v485 = vsel %vm438, %v319, 0
  %v488 = vsel %vm438, %v321, 0
  %v491 = vsel %vm438, %v323, 0
  %v494 = vsel %vm438, %v325, 0
  %v497 = vsel %vm438, %v327, 0
  %v500 = vsel %vm438, %v329, 0
  %v503 = vsel %vm438, %v331, 0
  %v506 = vsel %vm438, %v333, 0
  %v509 = vsel %vm438, %v335, 0
  %v512 = vsel %vm438, %v337, 0
  %v515 = vsel %vm438, %v339, 0
  %v518 = vsel %vm438, %v341, 0
  %v521 = vsel %vm438, %v343, 0
  %v524 = vsel %vm438, %v345, 0
  %v527 = vsel %vm438, %v347, 0
  %v530 = vsel %vm438, %v349, 0
  %v533 = vsel %vm438, %v351, 0
  %535 = vmatpush.bf16.msra.mxu0 %v427
  %536 = vmatpush.bf16.msra.mxu0 %v426
  %537 = vmatpush.bf16.msra.mxu0 %v425
  %538 = vmatpush.bf16.msra.mxu0 %v424
  %539 = vmatpush.bf16.msra.mxu0 %v423
  %540 = vmatpush.bf16.msra.mxu0 %v422
  %541 = vmatpush.bf16.msra.mxu0 %v421
  %542 = vmatpush.bf16.msra.mxu0 %v420
  %543 = vmatmul.bf16.gmra.mxu0 %v288
  %v544 = vpop.f32.mrf.mxu0
  %v545 = vadd.f32 0.0, %v544
  %v546 = vpop.f32.mrf.mxu0
  %v547 = vadd.f32 0.0, %v546
  %548 = vmatmul.bf16.gmra.mxu0 %v290
  %v549 = vpop.f32.mrf.mxu0
  %v550 = vadd.f32 0.0, %v549
  %v551 = vpop.f32.mrf.mxu0
  %v552 = vadd.f32 0.0, %v551
  %553 = vmatmul.bf16.gmra.mxu0 %v292
  %v554 = vpop.f32.mrf.mxu0
  %v555 = vadd.f32 0.0, %v554
  %v556 = vpop.f32.mrf.mxu0
  %v557 = vadd.f32 0.0, %v556
  %558 = vmatmul.bf16.gmra.mxu0 %v294
  %v559 = vpop.f32.mrf.mxu0
  %v560 = vadd.f32 0.0, %v559
  %v561 = vpop.f32.mrf.mxu0
  %v562 = vadd.f32 0.0, %v561
  %563 = vmatmul.bf16.gmra.mxu0 %v296
  %v564 = vpop.f32.mrf.mxu0
  %v565 = vadd.f32 0.0, %v564
  %v566 = vpop.f32.mrf.mxu0
  %v567 = vadd.f32 0.0, %v566
  %568 = vmatmul.bf16.gmra.mxu0 %v298
  %v569 = vpop.f32.mrf.mxu0
  %v570 = vadd.f32 0.0, %v569
  %v571 = vpop.f32.mrf.mxu0
  %v572 = vadd.f32 0.0, %v571
  %573 = vmatmul.bf16.gmra.mxu0 %v300
  %v574 = vpop.f32.mrf.mxu0
  %v575 = vadd.f32 0.0, %v574
  %v576 = vpop.f32.mrf.mxu0
  %v577 = vadd.f32 0.0, %v576
  %578 = vmatmul.bf16.gmra.mxu0 %v302
  %v579 = vpop.f32.mrf.mxu0
  %v580 = vadd.f32 0.0, %v579
  %v581 = vpop.f32.mrf.mxu0
  %v582 = vadd.f32 0.0, %v581
  %583 = vmatmul.bf16.gmra.mxu0 %v304
  %v584 = vpop.f32.mrf.mxu0
  %v585 = vadd.f32 0.0, %v584
  %v586 = vpop.f32.mrf.mxu0
  %v587 = vadd.f32 0.0, %v586
  %588 = vmatmul.bf16.gmra.mxu0 %v306
  %v589 = vpop.f32.mrf.mxu0
  %v590 = vadd.f32 0.0, %v589
  %v591 = vpop.f32.mrf.mxu0
  %v592 = vadd.f32 0.0, %v591
  %593 = vmatmul.bf16.gmra.mxu0 %v308
  %v594 = vpop.f32.mrf.mxu0
  %v595 = vadd.f32 0.0, %v594
  %v596 = vpop.f32.mrf.mxu0
  %v597 = vadd.f32 0.0, %v596
  %598 = vmatmul.bf16.gmra.mxu0 %v310
  %v599 = vpop.f32.mrf.mxu0
  %v600 = vadd.f32 0.0, %v599
  %v601 = vpop.f32.mrf.mxu0
  %v602 = vadd.f32 0.0, %v601
  %603 = vmatmul.bf16.gmra.mxu0 %v312
  %v604 = vpop.f32.mrf.mxu0
  %v605 = vadd.f32 0.0, %v604
  %v606 = vpop.f32.mrf.mxu0
  %v607 = vadd.f32 0.0, %v606
  %608 = vmatmul.bf16.gmra.mxu0 %v314
  %v609 = vpop.f32.mrf.mxu0
  %v610 = vadd.f32 0.0, %v609
  %v611 = vpop.f32.mrf.mxu0
  %v612 = vadd.f32 0.0, %v611
  %613 = vmatmul.bf16.gmra.mxu0 %v316
  %v614 = vpop.f32.mrf.mxu0
  %v615 = vadd.f32 0.0, %v614
  %v616 = vpop.f32.mrf.mxu0
  %v617 = vadd.f32 0.0, %v616
  %618 = vmatmul.bf16.gmra.mxu0 %v318
  %v619 = vpop.f32.mrf.mxu0
  %v620 = vadd.f32 0.0, %v619
  %v621 = vpop.f32.mrf.mxu0
  %v622 = vadd.f32 0.0, %v621
  %623 = vmatmul.bf16.gmra.mxu0 %v320
  %v624 = vpop.f32.mrf.mxu0
  %v625 = vadd.f32 0.0, %v624
  %v626 = vpop.f32.mrf.mxu0
  %v627 = vadd.f32 0.0, %v626
  %628 = vmatmul.bf16.gmra.mxu0 %v322
  %v629 = vpop.f32.mrf.mxu0
  %v630 = vadd.f32 0.0, %v629
  %v631 = vpop.f32.mrf.mxu0
  %v632 = vadd.f32 0.0, %v631
  %633 = vmatmul.bf16.gmra.mxu0 %v324
  %v634 = vpop.f32.mrf.mxu0
  %v635 = vadd.f32 0.0, %v634
  %v636 = vpop.f32.mrf.mxu0
  %v637 = vadd.f32 0.0, %v636
  %638 = vmatmul.bf16.gmra.mxu0 %v326
  %v639 = vpop.f32.mrf.mxu0
  %v640 = vadd.f32 0.0, %v639
  %v641 = vpop.f32.mrf.mxu0
  %v642 = vadd.f32 0.0, %v641
  %643 = vmatmul.bf16.gmra.mxu0 %v328
  %v644 = vpop.f32.mrf.mxu0
  %v645 = vadd.f32 0.0, %v644
  %v646 = vpop.f32.mrf.mxu0
  %v647 = vadd.f32 0.0, %v646
  %648 = vmatmul.bf16.gmra.mxu0 %v330
  %v649 = vpop.f32.mrf.mxu0
  %v650 = vadd.f32 0.0, %v649
  %v651 = vpop.f32.mrf.mxu0
  %v652 = vadd.f32 0.0, %v651
  %653 = vmatmul.bf16.gmra.mxu0 %v332
  %v654 = vpop.f32.mrf.mxu0
  %v655 = vadd.f32 0.0, %v654
  %v656 = vpop.f32.mrf.mxu0
  %v657 = vadd.f32 0.0, %v656
  %658 = vmatmul.bf16.gmra.mxu0 %v334
  %v659 = vpop.f32.mrf.mxu0
  %v660 = vadd.f32 0.0, %v659
  %v661 = vpop.f32.mrf.mxu0
  %v662 = vadd.f32 0.0, %v661
  %663 = vmatmul.bf16.gmra.mxu0 %v336
  %v664 = vpop.f32.mrf.mxu0
  %v665 = vadd.f32 0.0, %v664
  %v666 = vpop.f32.mrf.mxu0
  %v667 = vadd.f32 0.0, %v666
  %668 = vmatmul.bf16.gmra.mxu0 %v338
  %v669 = vpop.f32.mrf.mxu0
  %v670 = vadd.f32 0.0, %v669
  %v671 = vpop.f32.mrf.mxu0
  %v672 = vadd.f32 0.0, %v671
  %673 = vmatmul.bf16.gmra.mxu0 %v340
  %v674 = vpop.f32.mrf.mxu0
  %v675 = vadd.f32 0.0, %v674
  %v676 = vpop.f32.mrf.mxu0
  %v677 = vadd.f32 0.0, %v676
  %678 = vmatmul.bf16.gmra.mxu0 %v342
  %v679 = vpop.f32.mrf.mxu0
  %v680 = vadd.f32 0.0, %v679
  %v681 = vpop.f32.mrf.mxu0
  %v682 = vadd.f32 0.0, %v681
  %683 = vmatmul.bf16.gmra.mxu0 %v344
  %v684 = vpop.f32.mrf.mxu0
  %v685 = vadd.f32 0.0, %v684
  %v686 = vpop.f32.mrf.mxu0
  %v687 = vadd.f32 0.0, %v686
  %688 = vmatmul.bf16.gmra.mxu0 %v346
  %v689 = vpop.f32.mrf.mxu0
  %v690 = vadd.f32 0.0, %v689
  %v691 = vpop.f32.mrf.mxu0
  %v692 = vadd.f32 0.0, %v691
  %693 = vmatmul.bf16.gmra.mxu0 %v348
  %v694 = vpop.f32.mrf.mxu0
  %v695 = vadd.f32 0.0, %v694
  %v696 = vpop.f32.mrf.mxu0
  %v697 = vadd.f32 0.0, %v696
  %698 = vmatmul.bf16.gmra.mxu0 %v350
  %v699 = vpop.f32.mrf.mxu0
  %v700 = vadd.f32 0.0, %v699
  %v701 = vpop.f32.mrf.mxu0
  %v702 = vadd.f32 0.0, %v701
  %703 = vdwg.mxu0
  %704 = vmatpush.bf16.msra.mxu0 0
  %705 = vmatpush.bf16.msra.mxu0 0
  %706 = vmatpush.bf16.msra.mxu0 0
  %707 = vmatpush.bf16.msra.mxu0 0
  %708 = vmatpush.bf16.msra.mxu0 0
  %709 = vmatpush.bf16.msra.mxu0 0
  %710 = vmatpush.bf16.msra.mxu0 0
  %711 = vmatpush.bf16.msra.mxu0 %v428
  %712 = vmatmul.bf16.gmra.mxu0 %v440
  %v713 = vpop.f32.mrf.mxu0
  %v714 = vadd.f32 %v545, %v713
  %v715 = vpop.f32.mrf.mxu0
  %v716 = vadd.f32 %v547, %v715
  %717 = vmatmul.bf16.gmra.mxu0 %v443
  %v718 = vpop.f32.mrf.mxu0
  %v719 = vadd.f32 %v550, %v718
  %v720 = vpop.f32.mrf.mxu0
  %v721 = vadd.f32 %v552, %v720
  %722 = vmatmul.bf16.gmra.mxu0 %v446
  %v723 = vpop.f32.mrf.mxu0
  %v724 = vadd.f32 %v555, %v723
  %v725 = vpop.f32.mrf.mxu0
  %v726 = vadd.f32 %v557, %v725
  %727 = vmatmul.bf16.gmra.mxu0 %v449
  %v728 = vpop.f32.mrf.mxu0
  %v729 = vadd.f32 %v560, %v728
  %v730 = vpop.f32.mrf.mxu0
  %v731 = vadd.f32 %v562, %v730
  %732 = vmatmul.bf16.gmra.mxu0 %v452
  %v733 = vpop.f32.mrf.mxu0
  %v734 = vadd.f32 %v565, %v733
  %v735 = vpop.f32.mrf.mxu0
  %v736 = vadd.f32 %v567, %v735
  %737 = vmatmul.bf16.gmra.mxu0 %v455
  %v738 = vpop.f32.mrf.mxu0
  %v739 = vadd.f32 %v570, %v738
  %v740 = vpop.f32.mrf.mxu0
  %v741 = vadd.f32 %v572, %v740
  %742 = vmatmul.bf16.gmra.mxu0 %v458
  %v743 = vpop.f32.mrf.mxu0
  %v744 = vadd.f32 %v575, %v743
  %v745 = vpop.f32.mrf.mxu0
  %v746 = vadd.f32 %v577, %v745
  %747 = vmatmul.bf16.gmra.mxu0 %v461
  %v748 = vpop.f32.mrf.mxu0
  %v749 = vadd.f32 %v580, %v748
  %v750 = vpop.f32.mrf.mxu0
  %v751 = vadd.f32 %v582, %v750
  %752 = vmatmul.bf16.gmra.mxu0 %v464
  %v753 = vpop.f32.mrf.mxu0
  %v754 = vadd.f32 %v585, %v753
  %v755 = vpop.f32.mrf.mxu0
  %v756 = vadd.f32 %v587, %v755
  %757 = vmatmul.bf16.gmra.mxu0 %v467
  %v758 = vpop.f32.mrf.mxu0
  %v759 = vadd.f32 %v590, %v758
  %v760 = vpop.f32.mrf.mxu0
  %v761 = vadd.f32 %v592, %v760
  %762 = vmatmul.bf16.gmra.mxu0 %v470
  %v763 = vpop.f32.mrf.mxu0
  %v764 = vadd.f32 %v595, %v763
  %v765 = vpop.f32.mrf.mxu0
  %v766 = vadd.f32 %v597, %v765
  %767 = vmatmul.bf16.gmra.mxu0 %v473
  %v768 = vpop.f32.mrf.mxu0
  %v769 = vadd.f32 %v600, %v768
  %v770 = vpop.f32.mrf.mxu0
  %v771 = vadd.f32 %v602, %v770
  %772 = vmatmul.bf16.gmra.mxu0 %v476
  %v773 = vpop.f32.mrf.mxu0
  %v774 = vadd.f32 %v605, %v773
  %v775 = vpop.f32.mrf.mxu0
  %v776 = vadd.f32 %v607, %v775
  %777 = vmatmul.bf16.gmra.mxu0 %v479
  %v778 = vpop.f32.mrf.mxu0
  %v779 = vadd.f32 %v610, %v778
  %v780 = vpop.f32.mrf.mxu0
  %v781 = vadd.f32 %v612, %v780
  %782 = vmatmul.bf16.gmra.mxu0 %v482
  %v783 = vpop.f32.mrf.mxu0
  %v784 = vadd.f32 %v615, %v783
  %v785 = vpop.f32.mrf.mxu0
  %v786 = vadd.f32 %v617, %v785
  %787 = vmatmul.bf16.gmra.mxu0 %v485
  %v788 = vpop.f32.mrf.mxu0
  %v789 = vadd.f32 %v620, %v788
  %v790 = vpop.f32.mrf.mxu0
  %v791 = vadd.f32 %v622, %v790
  %792 = vmatmul.bf16.gmra.mxu0 %v488
  %v793 = vpop.f32.mrf.mxu0
  %v794 = vadd.f32 %v625, %v793
  %v795 = vpop.f32.mrf.mxu0
  %v796 = vadd.f32 %v627, %v795
  %797 = vmatmul.bf16.gmra.mxu0 %v491
  %v798 = vpop.f32.mrf.mxu0
  %v799 = vadd.f32 %v630, %v798
  %v800 = vpop.f32.mrf.mxu0
  %v801 = vadd.f32 %v632, %v800
  %802 = vmatmul.bf16.gmra.mxu0 %v494
  %v803 = vpop.f32.mrf.mxu0
  %v804 = vadd.f32 %v635, %v803
  %v805 = vpop.f32.mrf.mxu0
  %v806 = vadd.f32 %v637, %v805
  %807 = vmatmul.bf16.gmra.mxu0 %v497
  %v808 = vpop.f32.mrf.mxu0
  %v809 = vadd.f32 %v640, %v808
  %v810 = vpop.f32.mrf.mxu0
  %v811 = vadd.f32 %v642, %v810
  %812 = vmatmul.bf16.gmra.mxu0 %v500
  %v813 = vpop.f32.mrf.mxu0
  %v814 = vadd.f32 %v645, %v813
  %v815 = vpop.f32.mrf.mxu0
  %v816 = vadd.f32 %v647, %v815
  %817 = vmatmul.bf16.gmra.mxu0 %v503
  %v818 = vpop.f32.mrf.mxu0
  %v819 = vadd.f32 %v650, %v818
  %v820 = vpop.f32.mrf.mxu0
  %v821 = vadd.f32 %v652, %v820
  %822 = vmatmul.bf16.gmra.mxu0 %v506
  %v823 = vpop.f32.mrf.mxu0
  %v824 = vadd.f32 %v655, %v823
  %v825 = vpop.f32.mrf.mxu0
  %v826 = vadd.f32 %v657, %v825
  %827 = vmatmul.bf16.gmra.mxu0 %v509
  %v828 = vpop.f32.mrf.mxu0
  %v829 = vadd.f32 %v660, %v828
  %v830 = vpop.f32.mrf.mxu0
  %v831 = vadd.f32 %v662, %v830
  %832 = vmatmul.bf16.gmra.mxu0 %v512
  %v833 = vpop.f32.mrf.mxu0
  %v834 = vadd.f32 %v665, %v833
  %v835 = vpop.f32.mrf.mxu0
  %v836 = vadd.f32 %v667, %v835
  %837 = vmatmul.bf16.gmra.mxu0 %v515
  %v838 = vpop.f32.mrf.mxu0
  %v839 = vadd.f32 %v670, %v838
  %v840 = vpop.f32.mrf.mxu0
  %v841 = vadd.f32 %v672, %v840
  %842 = vmatmul.bf16.gmra.mxu0 %v518
  %v843 = vpop.f32.mrf.mxu0
  %v844 = vadd.f32 %v675, %v843
  %v845 = vpop.f32.mrf.mxu0
  %v846 = vadd.f32 %v677, %v845
  %847 = vmatmul.bf16.gmra.mxu0 %v521
  %v848 = vpop.f32.mrf.mxu0
  %v849 = vadd.f32 %v680, %v848
  %v850 = vpop.f32.mrf.mxu0
  %v851 = vadd.f32 %v682, %v850
  %852 = vmatmul.bf16.gmra.mxu0 %v524
  %v853 = vpop.f32.mrf.mxu0
  %v854 = vadd.f32 %v685, %v853
  %v855 = vpop.f32.mrf.mxu0
  %v856 = vadd.f32 %v687, %v855
  %857 = vmatmul.bf16.gmra.mxu0 %v527
  %v858 = vpop.f32.mrf.mxu0
  %v859 = vadd.f32 %v690, %v858
  %v860 = vpop.f32.mrf.mxu0
  %v861 = vadd.f32 %v692, %v860
  %862 = vmatmul.bf16.gmra.mxu0 %v530
  %v863 = vpop.f32.mrf.mxu0
  %v864 = vadd.f32 %v695, %v863
  %v865 = vpop.f32.mrf.mxu0
  %v866 = vadd.f32 %v697, %v865
  %867 = vmatmul.bf16.gmra.mxu0 %v533
  %v868 = vpop.f32.mrf.mxu0
  %v869 = vadd.f32 %v700, %v868
  %v870 = vpop.f32.mrf.mxu0
  %v871 = vadd.f32 %v702, %v870
  %872 = vdwg.mxu0
  %vm873 = vcmask 261120
  %874 = vst.msk [vmem:[%s2] sm:$0xff] %vm873, %v714
  %875 = vst.msk [vmem:[%s2 + $0x8] sm:$0xff] %vm873, %v716
  %876 = vst.msk [vmem:[%s2 + $0x10] sm:$0xff] %vm873, %v719
  %877 = vst.msk [vmem:[%s2 + $0x18] sm:$0xff] %vm873, %v721
  %878 = vst.msk [vmem:[%s2 + $0x20] sm:$0xff] %vm873, %v724
  %879 = vst.msk [vmem:[%s2 + $0x28] sm:$0xff] %vm873, %v726
  %880 = vst.msk [vmem:[%s2 + $0x30] sm:$0xff] %vm873, %v729
  %881 = vst.msk [vmem:[%s2 + $0x38] sm:$0xff] %vm873, %v731
  %882 = vst.msk [vmem:[%s2 + $0x40] sm:$0xff] %vm873, %v734
  %883 = vst.msk [vmem:[%s2 + $0x48] sm:$0xff] %vm873, %v736
  %884 = vst.msk [vmem:[%s2 + $0x50] sm:$0xff] %vm873, %v739
  %885 = vst.msk [vmem:[%s2 + $0x58] sm:$0xff] %vm873, %v741
  %886 = vst.msk [vmem:[%s2 + $0x60] sm:$0xff] %vm873, %v744
  %887 = vst.msk [vmem:[%s2 + $0x68] sm:$0xff] %vm873, %v746
  %888 = vst.msk [vmem:[%s2 + $0x70] sm:$0xff] %vm873, %v749
  %889 = vst.msk [vmem:[%s2 + $0x78] sm:$0xff] %vm873, %v751
  %890 = vst.msk [vmem:[%s2 + $0x80] sm:$0xff] %vm873, %v754
  %891 = vst.msk [vmem:[%s2 + $0x88] sm:$0xff] %vm873, %v756
  %892 = vst.msk [vmem:[%s2 + $0x90] sm:$0xff] %vm873, %v759
  %893 = vst.msk [vmem:[%s2 + $0x98] sm:$0xff] %vm873, %v761
  %894 = vst.msk [vmem:[%s2 + $0xa0] sm:$0xff] %vm873, %v764
  %895 = vst.msk [vmem:[%s2 + $0xa8] sm:$0xff] %vm873, %v766
  %896 = vst.msk [vmem:[%s2 + $0xb0] sm:$0xff] %vm873, %v769
  %897 = vst.msk [vmem:[%s2 + $0xb8] sm:$0xff] %vm873, %v771
  %898 = vst.msk [vmem:[%s2 + $0xc0] sm:$0xff] %vm873, %v774
  %899 = vst.msk [vmem:[%s2 + $0xc8] sm:$0xff] %vm873, %v776
  %900 = vst.msk [vmem:[%s2 + $0xd0] sm:$0xff] %vm873, %v779
  %901 = vst.msk [vmem:[%s2 + $0xd8] sm:$0xff] %vm873, %v781
  %902 = vst.msk [vmem:[%s2 + $0xe0] sm:$0xff] %vm873, %v784
  %903 = vst.msk [vmem:[%s2 + $0xe8] sm:$0xff] %vm873, %v786
  %904 = vst.msk [vmem:[%s2 + $0xf0] sm:$0xff] %vm873, %v789
  %905 = vst.msk [vmem:[%s2 + $0xf8] sm:$0xff] %vm873, %v791
  %906 = vst.msk [vmem:[%s2 + $0x100] sm:$0xff] %vm873, %v794
  %907 = vst.msk [vmem:[%s2 + $0x108] sm:$0xff] %vm873, %v796
  %908 = vst.msk [vmem:[%s2 + $0x110] sm:$0xff] %vm873, %v799
  %909 = vst.msk [vmem:[%s2 + $0x118] sm:$0xff] %vm873, %v801
  %910 = vst.msk [vmem:[%s2 + $0x120] sm:$0xff] %vm873, %v804
  %911 = vst.msk [vmem:[%s2 + $0x128] sm:$0xff] %vm873, %v806
  %912 = vst.msk [vmem:[%s2 + $0x130] sm:$0xff] %vm873, %v809
  %913 = vst.msk [vmem:[%s2 + $0x138] sm:$0xff] %vm873, %v811
  %914 = vst.msk [vmem:[%s2 + $0x140] sm:$0xff] %vm873, %v814
  %915 = vst.msk [vmem:[%s2 + $0x148] sm:$0xff] %vm873, %v816
  %916 = vst.msk [vmem:[%s2 + $0x150] sm:$0xff] %vm873, %v819
  %917 = vst.msk [vmem:[%s2 + $0x158] sm:$0xff] %vm873, %v821
  %918 = vst.msk [vmem:[%s2 + $0x160] sm:$0xff] %vm873, %v824
  %919 = vst.msk [vmem:[%s2 + $0x168] sm:$0xff] %vm873, %v826
  %920 = vst.msk [vmem:[%s2 + $0x170] sm:$0xff] %vm873, %v829
  %921 = vst.msk [vmem:[%s2 + $0x178] sm:$0xff] %vm873, %v831
  %922 = vst.msk [vmem:[%s2 + $0x180] sm:$0xff] %vm873, %v834
  %923 = vst.msk [vmem:[%s2 + $0x188] sm:$0xff] %vm873, %v836
  %924 = vst.msk [vmem:[%s2 + $0x190] sm:$0xff] %vm873, %v839
  %925 = vst.msk [vmem:[%s2 + $0x198] sm:$0xff] %vm873, %v841
  %926 = vst.msk [vmem:[%s2 + $0x1a0] sm:$0xff] %vm873, %v844
  %927 = vst.msk [vmem:[%s2 + $0x1a8] sm:$0xff] %vm873, %v846
  %928 = vst.msk [vmem:[%s2 + $0x1b0] sm:$0xff] %vm873, %v849
  %929 = vst.msk [vmem:[%s2 + $0x1b8] sm:$0xff] %vm873, %v851
  %930 = vst.msk [vmem:[%s2 + $0x1c0] sm:$0xff] %vm873, %v854
  %931 = vst.msk [vmem:[%s2 + $0x1c8] sm:$0xff] %vm873, %v856
  %932 = vst.msk [vmem:[%s2 + $0x1d0] sm:$0xff] %vm873, %v859
  %933 = vst.msk [vmem:[%s2 + $0x1d8] sm:$0xff] %vm873, %v861
  %934 = vst.msk [vmem:[%s2 + $0x1e0] sm:$0xff] %vm873, %v864
  %935 = vst.msk [vmem:[%s2 + $0x1e8] sm:$0xff] %vm873, %v866
  %936 = vst.msk [vmem:[%s2 + $0x1f0] sm:$0xff] %vm873, %v869
  %937 = vst.msk [vmem:[%s2 + $0x1f8] sm:$0xff] %vm873, %v871
  %v938 = vsel %vm873, %v714, 0.0
  %v939 = vsel %vm873, %v716, 0.0
  %v940 = vadd.f32 %v938, %v939
  %v941 = vsel %vm873, %v719, 0.0
  %v942 = vadd.f32 %v940, %v941
  %v943 = vsel %vm873, %v721, 0.0
  %v944 = vadd.f32 %v942, %v943
  %v945 = vsel %vm873, %v724, 0.0
  %v946 = vadd.f32 %v944, %v945
  %v947 = vsel %vm873, %v726, 0.0
  %v948 = vadd.f32 %v946, %v947
  %v949 = vsel %vm873, %v729, 0.0
  %v950 = vadd.f32 %v948, %v949
  %v951 = vsel %vm873, %v731, 0.0
  %v952 = vadd.f32 %v950, %v951
  %v953 = vsel %vm873, %v734, 0.0
  %v954 = vadd.f32 %v952, %v953
  %v955 = vsel %vm873, %v736, 0.0
  %v956 = vadd.f32 %v954, %v955
  %v957 = vsel %vm873, %v739, 0.0
  %v958 = vadd.f32 %v956, %v957
  %v959 = vsel %vm873, %v741, 0.0
  %v960 = vadd.f32 %v958, %v959
  %v961 = vsel %vm873, %v744, 0.0
  %v962 = vadd.f32 %v960, %v961
  %v963 = vsel %vm873, %v746, 0.0
  %v964 = vadd.f32 %v962, %v963
  %v965 = vsel %vm873, %v749, 0.0
  %v966 = vadd.f32 %v964, %v965
  %v967 = vsel %vm873, %v751, 0.0
  %v968 = vadd.f32 %v966, %v967
  %v969 = vsel %vm873, %v754, 0.0
  %v970 = vadd.f32 %v968, %v969
  %v971 = vsel %vm873, %v756, 0.0
  %v972 = vadd.f32 %v970, %v971
  %v973 = vsel %vm873, %v759, 0.0
  %v974 = vadd.f32 %v972, %v973
  %v975 = vsel %vm873, %v761, 0.0
  %v976 = vadd.f32 %v974, %v975
  %v977 = vsel %vm873, %v764, 0.0
  %v978 = vadd.f32 %v976, %v977
  %v979 = vsel %vm873, %v766, 0.0
  %v980 = vadd.f32 %v978, %v979
  %v981 = vsel %vm873, %v769, 0.0
  %v982 = vadd.f32 %v980, %v981
  %v983 = vsel %vm873, %v771, 0.0
  %v984 = vadd.f32 %v982, %v983
  %v985 = vsel %vm873, %v774, 0.0
  %v986 = vadd.f32 %v984, %v985
  %v987 = vsel %vm873, %v776, 0.0
  %v988 = vadd.f32 %v986, %v987
  %v989 = vsel %vm873, %v779, 0.0
  %v990 = vadd.f32 %v988, %v989
  %v991 = vsel %vm873, %v781, 0.0
  %v992 = vadd.f32 %v990, %v991
  %v993 = vsel %vm873, %v784, 0.0
  %v994 = vadd.f32 %v992, %v993
  %v995 = vsel %vm873, %v786, 0.0
  %v996 = vadd.f32 %v994, %v995
  %v997 = vsel %vm873, %v789, 0.0
  %v998 = vadd.f32 %v996, %v997
  %v999 = vsel %vm873, %v791, 0.0
  %v1000 = vadd.f32 %v998, %v999
  %v1001 = vsel %vm873, %v794, 0.0
  %v1002 = vadd.f32 %v1000, %v1001
  %v1003 = vsel %vm873, %v796, 0.0
  %v1004 = vadd.f32 %v1002, %v1003
  %v1005 = vsel %vm873, %v799, 0.0
  %v1006 = vadd.f32 %v1004, %v1005
  %v1007 = vsel %vm873, %v801, 0.0
  %v1008 = vadd.f32 %v1006, %v1007
  %v1009 = vsel %vm873, %v804, 0.0
  %v1010 = vadd.f32 %v1008, %v1009
  %v1011 = vsel %vm873, %v806, 0.0
  %v1012 = vadd.f32 %v1010, %v1011
  %v1013 = vsel %vm873, %v809, 0.0
  %v1014 = vadd.f32 %v1012, %v1013
  %v1015 = vsel %vm873, %v811, 0.0
  %v1016 = vadd.f32 %v1014, %v1015
  %v1017 = vsel %vm873, %v814, 0.0
  %v1018 = vadd.f32 %v1016, %v1017
  %v1019 = vsel %vm873, %v816, 0.0
  %v1020 = vadd.f32 %v1018, %v1019
  %v1021 = vsel %vm873, %v819, 0.0
  %v1022 = vadd.f32 %v1020, %v1021
  %v1023 = vsel %vm873, %v821, 0.0
  %v1024 = vadd.f32 %v1022, %v1023
  %v1025 = vsel %vm873, %v824, 0.0
  %v1026 = vadd.f32 %v1024, %v1025
  %v1027 = vsel %vm873, %v826, 0.0
  %v1028 = vadd.f32 %v1026, %v1027
  %v1029 = vsel %vm873, %v829, 0.0
  %v1030 = vadd.f32 %v1028, %v1029
  %v1031 = vsel %vm873, %v831, 0.0
  %v1032 = vadd.f32 %v1030, %v1031
  %v1033 = vsel %vm873, %v834, 0.0
  %v1034 = vadd.f32 %v1032, %v1033
  %v1035 = vsel %vm873, %v836, 0.0
  %v1036 = vadd.f32 %v1034, %v1035
  %v1037 = vsel %vm873, %v839, 0.0
  %v1038 = vadd.f32 %v1036, %v1037
  %v1039 = vsel %vm873, %v841, 0.0
  %v1040 = vadd.f32 %v1038, %v1039
  %v1041 = vsel %vm873, %v844, 0.0
  %v1042 = vadd.f32 %v1040, %v1041
  %v1043 = vsel %vm873, %v846, 0.0
  %v1044 = vadd.f32 %v1042, %v1043
  %v1045 = vsel %vm873, %v849, 0.0
  %v1046 = vadd.f32 %v1044, %v1045
  %v1047 = vsel %vm873, %v851, 0.0
  %v1048 = vadd.f32 %v1046, %v1047
  %v1049 = vsel %vm873, %v854, 0.0
  %v1050 = vadd.f32 %v1048, %v1049
  %v1051 = vsel %vm873, %v856, 0.0
  %v1052 = vadd.f32 %v1050, %v1051
  %v1053 = vsel %vm873, %v859, 0.0
  %v1054 = vadd.f32 %v1052, %v1053
  %v1055 = vsel %vm873, %v861, 0.0
  %v1056 = vadd.f32 %v1054, %v1055
  %v1057 = vsel %vm873, %v864, 0.0
  %v1058 = vadd.f32 %v1056, %v1057
  %v1059 = vsel %vm873, %v866, 0.0
  %v1060 = vadd.f32 %v1058, %v1059
  %v1061 = vsel %vm873, %v869, 0.0
  %v1062 = vadd.f32 %v1060, %v1061
  %v1063 = vsel %vm873, %v871, 0.0
  %v1064 = vadd.f32 %v1062, %v1063
  %v1065 = vrot.slane %v1064, 4
  %v1066 = vadd.f32 %v1064, %v1065
  %v1067 = vrot.slane %v1066, 2
  %v1068 = vadd.f32 %v1066, %v1067
  %v1069 = vrot.slane %v1068, 1
  %v1070 = vadd.f32 %v1068, %v1069
  %v1071 = vmul.f32 %v714, %v714
  %v1072 = vmul.f32 %v716, %v716
  %v1073 = vmul.f32 %v719, %v719
  %v1074 = vmul.f32 %v721, %v721
  %v1075 = vmul.f32 %v724, %v724
  %v1076 = vmul.f32 %v726, %v726
  %v1077 = vmul.f32 %v729, %v729
  %v1078 = vmul.f32 %v731, %v731
  %v1079 = vmul.f32 %v734, %v734
  %v1080 = vmul.f32 %v736, %v736
  %v1081 = vmul.f32 %v739, %v739
  %v1082 = vmul.f32 %v741, %v741
  %v1083 = vmul.f32 %v744, %v744
  %v1084 = vmul.f32 %v746, %v746
  %v1085 = vmul.f32 %v749, %v749
  %v1086 = vmul.f32 %v751, %v751
  %v1087 = vmul.f32 %v754, %v754
  %v1088 = vmul.f32 %v756, %v756
  %v1089 = vmul.f32 %v759, %v759
  %v1090 = vmul.f32 %v761, %v761
  %v1091 = vmul.f32 %v764, %v764
  %v1092 = vmul.f32 %v766, %v766
  %v1093 = vmul.f32 %v769, %v769
  %v1094 = vmul.f32 %v771, %v771
  %v1095 = vmul.f32 %v774, %v774
  %v1096 = vmul.f32 %v776, %v776
  %v1097 = vmul.f32 %v779, %v779
  %v1098 = vmul.f32 %v781, %v781
  %v1099 = vmul.f32 %v784, %v784
  %v1100 = vmul.f32 %v786, %v786
  %v1101 = vmul.f32 %v789, %v789
  %v1102 = vmul.f32 %v791, %v791
  %v1103 = vmul.f32 %v794, %v794
  %v1104 = vmul.f32 %v796, %v796
  %v1105 = vmul.f32 %v799, %v799
  %v1106 = vmul.f32 %v801, %v801
  %v1107 = vmul.f32 %v804, %v804
  %v1108 = vmul.f32 %v806, %v806
  %v1109 = vmul.f32 %v809, %v809
  %v1110 = vmul.f32 %v811, %v811
  %v1111 = vmul.f32 %v814, %v814
  %v1112 = vmul.f32 %v816, %v816
  %v1113 = vmul.f32 %v819, %v819
  %v1114 = vmul.f32 %v821, %v821
  %v1115 = vmul.f32 %v824, %v824
  %v1116 = vmul.f32 %v826, %v826
  %v1117 = vmul.f32 %v829, %v829
  %v1118 = vmul.f32 %v831, %v831
  %v1119 = vmul.f32 %v834, %v834
  %v1120 = vmul.f32 %v836, %v836
  %v1121 = vmul.f32 %v839, %v839
  %v1122 = vmul.f32 %v841, %v841
  %v1123 = vmul.f32 %v844, %v844
  %v1124 = vmul.f32 %v846, %v846
  %v1125 = vmul.f32 %v849, %v849
  %v1126 = vmul.f32 %v851, %v851
  %v1127 = vmul.f32 %v854, %v854
  %v1128 = vmul.f32 %v856, %v856
  %v1129 = vmul.f32 %v859, %v859
  %v1130 = vmul.f32 %v861, %v861
  %v1131 = vmul.f32 %v864, %v864
  %v1132 = vmul.f32 %v866, %v866
  %v1133 = vmul.f32 %v869, %v869
  %v1134 = vmul.f32 %v871, %v871
  %v1135 = vsel %vm873, %v1071, 0.0
  %v1136 = vsel %vm873, %v1072, 0.0
  %v1137 = vadd.f32 %v1135, %v1136
  %v1138 = vsel %vm873, %v1073, 0.0
  %v1139 = vadd.f32 %v1137, %v1138
  %v1140 = vsel %vm873, %v1074, 0.0
  %v1141 = vadd.f32 %v1139, %v1140
  %v1142 = vsel %vm873, %v1075, 0.0
  %v1143 = vadd.f32 %v1141, %v1142
  %v1144 = vsel %vm873, %v1076, 0.0
  %v1145 = vadd.f32 %v1143, %v1144
  %v1146 = vsel %vm873, %v1077, 0.0
  %v1147 = vadd.f32 %v1145, %v1146
  %v1148 = vsel %vm873, %v1078, 0.0
  %v1149 = vadd.f32 %v1147, %v1148
  %v1150 = vsel %vm873, %v1079, 0.0
  %v1151 = vadd.f32 %v1149, %v1150
  %v1152 = vsel %vm873, %v1080, 0.0
  %v1153 = vadd.f32 %v1151, %v1152
  %v1154 = vsel %vm873, %v1081, 0.0
  %v1155 = vadd.f32 %v1153, %v1154
  %v1156 = vsel %vm873, %v1082, 0.0
  %v1157 = vadd.f32 %v1155, %v1156
  %v1158 = vsel %vm873, %v1083, 0.0
  %v1159 = vadd.f32 %v1157, %v1158
  %v1160 = vsel %vm873, %v1084, 0.0
  %v1161 = vadd.f32 %v1159, %v1160
  %v1162 = vsel %vm873, %v1085, 0.0
  %v1163 = vadd.f32 %v1161, %v1162
  %v1164 = vsel %vm873, %v1086, 0.0
  %v1165 = vadd.f32 %v1163, %v1164
  %v1166 = vsel %vm873, %v1087, 0.0
  %v1167 = vadd.f32 %v1165, %v1166
  %v1168 = vsel %vm873, %v1088, 0.0
  %v1169 = vadd.f32 %v1167, %v1168
  %v1170 = vsel %vm873, %v1089, 0.0
  %v1171 = vadd.f32 %v1169, %v1170
  %v1172 = vsel %vm873, %v1090, 0.0
  %v1173 = vadd.f32 %v1171, %v1172
  %v1174 = vsel %vm873, %v1091, 0.0
  %v1175 = vadd.f32 %v1173, %v1174
  %v1176 = vsel %vm873, %v1092, 0.0
  %v1177 = vadd.f32 %v1175, %v1176
  %v1178 = vsel %vm873, %v1093, 0.0
  %v1179 = vadd.f32 %v1177, %v1178
  %v1180 = vsel %vm873, %v1094, 0.0
  %v1181 = vadd.f32 %v1179, %v1180
  %v1182 = vsel %vm873, %v1095, 0.0
  %v1183 = vadd.f32 %v1181, %v1182
  %v1184 = vsel %vm873, %v1096, 0.0
  %v1185 = vadd.f32 %v1183, %v1184
  %v1186 = vsel %vm873, %v1097, 0.0
  %v1187 = vadd.f32 %v1185, %v1186
  %v1188 = vsel %vm873, %v1098, 0.0
  %v1189 = vadd.f32 %v1187, %v1188
  %v1190 = vsel %vm873, %v1099, 0.0
  %v1191 = vadd.f32 %v1189, %v1190
  %v1192 = vsel %vm873, %v1100, 0.0
  %v1193 = vadd.f32 %v1191, %v1192
  %v1194 = vsel %vm873, %v1101, 0.0
  %v1195 = vadd.f32 %v1193, %v1194
  %v1196 = vsel %vm873, %v1102, 0.0
  %v1197 = vadd.f32 %v1195, %v1196
  %v1198 = vsel %vm873, %v1103, 0.0
  %v1199 = vadd.f32 %v1197, %v1198
  %v1200 = vsel %vm873, %v1104, 0.0
  %v1201 = vadd.f32 %v1199, %v1200
  %v1202 = vsel %vm873, %v1105, 0.0
  %v1203 = vadd.f32 %v1201, %v1202
  %v1204 = vsel %vm873, %v1106, 0.0
  %v1205 = vadd.f32 %v1203, %v1204
  %v1206 = vsel %vm873, %v1107, 0.0
  %v1207 = vadd.f32 %v1205, %v1206
  %v1208 = vsel %vm873, %v1108, 0.0
  %v1209 = vadd.f32 %v1207, %v1208
  %v1210 = vsel %vm873, %v1109, 0.0
  %v1211 = vadd.f32 %v1209, %v1210
  %v1212 = vsel %vm873, %v1110, 0.0
  %v1213 = vadd.f32 %v1211, %v1212
  %v1214 = vsel %vm873, %v1111, 0.0
  %v1215 = vadd.f32 %v1213, %v1214
  %v1216 = vsel %vm873, %v1112, 0.0
  %v1217 = vadd.f32 %v1215, %v1216
  %v1218 = vsel %vm873, %v1113, 0.0
  %v1219 = vadd.f32 %v1217, %v1218
  %v1220 = vsel %vm873, %v1114, 0.0
  %v1221 = vadd.f32 %v1219, %v1220
  %v1222 = vsel %vm873, %v1115, 0.0
  %v1223 = vadd.f32 %v1221, %v1222
  %v1224 = vsel %vm873, %v1116, 0.0
  %v1225 = vadd.f32 %v1223, %v1224
  %v1226 = vsel %vm873, %v1117, 0.0
  %v1227 = vadd.f32 %v1225, %v1226
  %v1228 = vsel %vm873, %v1118, 0.0
  %v1229 = vadd.f32 %v1227, %v1228
  %v1230 = vsel %vm873, %v1119, 0.0
  %v1231 = vadd.f32 %v1229, %v1230
  %v1232 = vsel %vm873, %v1120, 0.0
  %v1233 = vadd.f32 %v1231, %v1232
  %v1234 = vsel %vm873, %v1121, 0.0
  %v1235 = vadd.f32 %v1233, %v1234
  %v1236 = vsel %vm873, %v1122, 0.0
  %v1237 = vadd.f32 %v1235, %v1236
  %v1238 = vsel %vm873, %v1123, 0.0
  %v1239 = vadd.f32 %v1237, %v1238
  %v1240 = vsel %vm873, %v1124, 0.0
  %v1241 = vadd.f32 %v1239, %v1240
  %v1242 = vsel %vm873, %v1125, 0.0
  %v1243 = vadd.f32 %v1241, %v1242
  %v1244 = vsel %vm873, %v1126, 0.0
  %v1245 = vadd.f32 %v1243, %v1244
  %v1246 = vsel %vm873, %v1127, 0.0
  %v1247 = vadd.f32 %v1245, %v1246
  %v1248 = vsel %vm873, %v1128, 0.0
  %v1249 = vadd.f32 %v1247, %v1248
  %v1250 = vsel %vm873, %v1129, 0.0
  %v1251 = vadd.f32 %v1249, %v1250
  %v1252 = vsel %vm873, %v1130, 0.0
  %v1253 = vadd.f32 %v1251, %v1252
  %v1254 = vsel %vm873, %v1131, 0.0
  %v1255 = vadd.f32 %v1253, %v1254
  %v1256 = vsel %vm873, %v1132, 0.0
  %v1257 = vadd.f32 %v1255, %v1256
  %v1258 = vsel %vm873, %v1133, 0.0
  %v1259 = vadd.f32 %v1257, %v1258
  %v1260 = vsel %vm873, %v1134, 0.0
  %v1261 = vadd.f32 %v1259, %v1260
  %v1262 = vrot.slane %v1261, 4
  %v1263 = vadd.f32 %v1261, %v1262
  %v1264 = vrot.slane %v1263, 2
  %v1265 = vadd.f32 %v1263, %v1264
  %v1266 = vrot.slane %v1265, 1
  %v1267 = vadd.f32 %v1265, %v1266
  %vm1268 = vcmask 1040384
  %v1269 = vsel %vm1268, %v1070, %v1267
  %vm1270 = vcmask 1041408
  %v1271 = vsel %vm1270, %v1269, 0.0
  %1272 = vst.msk [vmem:[%s3] sm:$0xff] %vm873, %v1271
  // Predicated region
  $region10: #{slim_forward.31} parent=0 // pred_check
    _
  $region11: #{slim_forward.31} parent=0 // pred_check_branch
    %1274 = sbr.rel (0) target = $region13
  $region12: #{slim_forward.31} parent=0 // pred_region
    _
  $region13: #{slim_forward.31} parent=0 // pred_fallthru
    _
  // Predicated region
  $region14: #{slim_forward.31} parent=0 // pred_check
    _
  $region15: #{slim_forward.31} parent=0 // pred_check_branch
    %1276 = sbr.rel (0) target = $region17
  $region16: #{slim_forward.31} parent=0 // pred_region
    _
  $region17: #{slim_forward.31} parent=0 // pred_fallthru
    _
  // Predicated region
  $region18: #{slim_forward.31} parent=0 // pred_check
    _
  $region19: #{slim_forward.31} parent=0 // pred_check_branch
    %1278 = sbr.rel (0) target = $region21
  $region20: #{slim_forward.31} parent=0 // pred_region
    _
  $region21: #{slim_forward.31} parent=0 // pred_fallthru
    _
  // Predicated region
  $region22: #{slim_forward.31} parent=0 // pred_check
    _
  $region23: #{slim_forward.31} parent=0 // pred_check_branch
    %1280 = sbr.rel (0) target = $region25
  $region24: #{slim_forward.31} parent=0 // pred_region
    _
  $region25: #{slim_forward.31} parent=0 // pred_fallthru
    _

// kernel: slim_forward.34
$region0: #{slim_forward.34}
  #allocation0 [shape = 'u32[]', space=smem, size = 0x4, offset = 0x4, fixed_abs, tag = 'smem constant byte address 0x4 - core index']
  #allocation1 [shape = 'u32[72,128]{1,0:T(1,128)}', space=vmem, size = 0x9000, scoped, tag = 'internal scratch']
  %s0 = inlined_call_operand.vmem [shape: f32[128,32], index: 0, kind: input, shape index: {}]
  %s1 = inlined_call_operand.vmem [shape: f32[1,32], index: 1, kind: input, shape index: {}]
  %s2 = inlined_call_operand.vmem [shape: f32[1,32], index: 2, kind: input, shape index: {}]
  %s3 = inlined_call_operand.vmem [shape: bf16[128,32], index: 3, kind: output, shape index: {}]
  %s4 = sld [smem:[#allocation0]]
  $region22: #{slim_forward.34} parent=0
    _
  %s6 = ssub.s32 1, %s4
  %s7 = scalar_select 0, %s6, %s4
  // Predicated region
  $region2: #{slim_forward.34} parent=0 // pred_check
    _
  $region3: #{slim_forward.34} parent=0 // pred_check_branch
    %9 = sbr.rel (0) target = $region5
  $region4: #{slim_forward.34} parent=0 // pred_region
    _
  $region5: #{slim_forward.34} parent=0 // pred_fallthru
    _
  // Predicated region
  $region6: #{slim_forward.34} parent=0 // pred_check
    _
  $region7: #{slim_forward.34} parent=0 // pred_check_branch
    %11 = sbr.rel (0) target = $region9
  $region8: #{slim_forward.34} parent=0 // pred_region
    _
  $region9: #{slim_forward.34} parent=0 // pred_fallthru
    _
  // Predicated region
  $region10: #{slim_forward.34} parent=0 // pred_check
    _
  $region11: #{slim_forward.34} parent=0 // pred_check_branch
    %13 = sbr.rel (0) target = $region13
  $region12: #{slim_forward.34} parent=0 // pred_region
    _
  $region13: #{slim_forward.34} parent=0 // pred_fallthru
    _
  %v14 = vld [vmem:[%s0] sm:$0xff]
  %v15 = vld [vmem:[%s0 + $0x8] sm:$0xff]
  %v16 = vld [vmem:[%s0 + $0x10] sm:$0xff]
  %v17 = vld [vmem:[%s0 + $0x18] sm:$0xff]
  %v18 = vld [vmem:[%s0 + $0x20] sm:$0xff]
  %v19 = vld [vmem:[%s0 + $0x28] sm:$0xff]
  %v20 = vld [vmem:[%s0 + $0x30] sm:$0xff]
  %v21 = vld [vmem:[%s0 + $0x38] sm:$0xff]
  %v22 = vld [vmem:[%s0 + $0x40] sm:$0xff]
  %v23 = vld [vmem:[%s0 + $0x48] sm:$0xff]
  %v24 = vld [vmem:[%s0 + $0x50] sm:$0xff]
  %v25 = vld [vmem:[%s0 + $0x58] sm:$0xff]
  %v26 = vld [vmem:[%s0 + $0x60] sm:$0xff]
  %v27 = vld [vmem:[%s0 + $0x68] sm:$0xff]
  %v28 = vld [vmem:[%s0 + $0x70] sm:$0xff]
  %v29 = vld [vmem:[%s0 + $0x78] sm:$0xff]
  %v30 = vld [vmem:[%s1] sm:$0x1]
  %v32 = vperm.slane %v30, 0
  %v34 = vmul.f32 %v14, %v32
  %v35 = vmul.f32 %v15, %v32
  %v36 = vmul.f32 %v16, %v32
  %v37 = vmul.f32 %v17, %v32
  %v38 = vmul.f32 %v18, %v32
  %v39 = vmul.f32 %v19, %v32
  %v40 = vmul.f32 %v20, %v32
  %v41 = vmul.f32 %v21, %v32
  %v42 = vmul.f32 %v22, %v32
  %v43 = vmul.f32 %v23, %v32
  %v44 = vmul.f32 %v24, %v32
  %v45 = vmul.f32 %v25, %v32
  %v46 = vmul.f32 %v26, %v32
  %v47 = vmul.f32 %v27, %v32
  %v48 = vmul.f32 %v28, %v32
  %v49 = vmul.f32 %v29, %v32
  %v50 = vld [vmem:[%s2] sm:$0x1]
  %v52 = vperm.slane %v50, 0
  %v54 = vadd.f32 %v34, %v52
  %v55 = vadd.f32 %v35, %v52
  %v56 = vadd.f32 %v36, %v52
  %v57 = vadd.f32 %v37, %v52
  %v58 = vadd.f32 %v38, %v52
  %v59 = vadd.f32 %v39, %v52
  %v60 = vadd.f32 %v40, %v52
  %v61 = vadd.f32 %v41, %v52
  %v62 = vadd.f32 %v42, %v52
  %v63 = vadd.f32 %v43, %v52
  %v64 = vadd.f32 %v44, %v52
  %v65 = vadd.f32 %v45, %v52
  %v66 = vadd.f32 %v46, %v52
  %v67 = vadd.f32 %v47, %v52
  %v68 = vadd.f32 %v48, %v52
  %v69 = vadd.f32 %v49, %v52
  %v70 = vmax.f32 %v54, 0.0
  %v71 = vmax.f32 %v55, 0.0
  %v72 = vmax.f32 %v56, 0.0
  %v73 = vmax.f32 %v57, 0.0
  %v74 = vmax.f32 %v58, 0.0
  %v75 = vmax.f32 %v59, 0.0
  %v76 = vmax.f32 %v60, 0.0
  %v77 = vmax.f32 %v61, 0.0
  %v78 = vmax.f32 %v62, 0.0
  %v79 = vmax.f32 %v63, 0.0
  %v80 = vmax.f32 %v64, 0.0
  %v81 = vmax.f32 %v65, 0.0
  %v82 = vmax.f32 %v66, 0.0
  %v83 = vmax.f32 %v67, 0.0
  %v84 = vmax.f32 %v68, 0.0
  %v85 = vmax.f32 %v69, 0.0
  %v86 = vpack.c.bf16 %v70, %v70
  %v87 = vpack.c.bf16 %v71, %v71
  %v88 = vpack.c.bf16 %v72, %v72
  %v89 = vpack.c.bf16 %v73, %v73
  %v90 = vpack.c.bf16 %v74, %v74
  %v91 = vpack.c.bf16 %v75, %v75
  %v92 = vpack.c.bf16 %v76, %v76
  %v93 = vpack.c.bf16 %v77, %v77
  %v94 = vpack.c.bf16 %v78, %v78
  %v95 = vpack.c.bf16 %v79, %v79
  %v96 = vpack.c.bf16 %v80, %v80
  %v97 = vpack.c.bf16 %v81, %v81
  %v98 = vpack.c.bf16 %v82, %v82
  %v99 = vpack.c.bf16 %v83, %v83
  %v100 = vpack.c.bf16 %v84, %v84
  %v101 = vpack.c.bf16 %v85, %v85
  %vm102 = vcmask 257024
  %103 = vst.msk [vmem:[%s3] sm:$0xf] %vm102, %v86
  %104 = vst.msk [vmem:[%s3 + $0x4] sm:$0xf] %vm102, %v87
  %105 = vst.msk [vmem:[%s3 + $0x8] sm:$0xf] %vm102, %v88
  %106 = vst.msk [vmem:[%s3 + $0xc] sm:$0xf] %vm102, %v89
  %107 = vst.msk [vmem:[%s3 + $0x10] sm:$0xf] %vm102, %v90
  %108 = vst.msk [vmem:[%s3 + $0x14] sm:$0xf] %vm102, %v91
  %109 = vst.msk [vmem:[%s3 + $0x18] sm:$0xf] %vm102, %v92
  %110 = vst.msk [vmem:[%s3 + $0x1c] sm:$0xf] %vm102, %v93
  %111 = vst.msk [vmem:[%s3 + $0x20] sm:$0xf] %vm102, %v94
  %112 = vst.msk [vmem:[%s3 + $0x24] sm:$0xf] %vm102, %v95
  %113 = vst.msk [vmem:[%s3 + $0x28] sm:$0xf] %vm102, %v96
  %114 = vst.msk [vmem:[%s3 + $0x2c] sm:$0xf] %vm102, %v97
  %115 = vst.msk [vmem:[%s3 + $0x30] sm:$0xf] %vm102, %v98
  %116 = vst.msk [vmem:[%s3 + $0x34] sm:$0xf] %vm102, %v99
  %117 = vst.msk [vmem:[%s3 + $0x38] sm:$0xf] %vm102, %v100
  %118 = vst.msk [vmem:[%s3 + $0x3c] sm:$0xf] %vm102, %v101
  // Predicated region
  $region14: #{slim_forward.34} parent=0 // pred_check
    _
  $region15: #{slim_forward.34} parent=0 // pred_check_branch
    %120 = sbr.rel (0) target = $region17
  $region16: #{slim_forward.34} parent=0 // pred_region
    _
  $region17: #{slim_forward.34} parent=0 // pred_fallthru
    _
  // Predicated region
  $region18: #{slim_forward.34} parent=0 // pred_check
    _
  $region19: #{slim_forward.34} parent=0 // pred_check_branch
    %122 = sbr.rel (0) target = $region21
  $region20: #{slim_forward.34} parent=0 // pred_region
    _
  $region21: #{slim_forward.34} parent=0 // pred_fallthru
    _

// kernel: slim_forward.33
$region0: #{slim_forward.33}
  #allocation0 [shape = 'u32[]', space=smem, size = 0x4, offset = 0x4, fixed_abs, tag = 'smem constant byte address 0x4 - core index']
  #allocation1 [shape = 'u32[72,128]{1,0:T(1,128)}', space=vmem, size = 0x9000, scoped, tag = 'internal scratch']
  %s0 = inlined_call_operand.vmem [shape: bf16[128,288], index: 0, kind: input, shape index: {}]
  %s1 = inlined_call_operand.vmem [shape: bf16[288,32], index: 1, kind: input, shape index: {}]
  %s2 = inlined_call_operand.vmem [shape: f32[128,32], index: 2, kind: output, shape index: {0}]
  %s3 = inlined_call_operand.vmem [shape: f32[8,32], index: 3, kind: output, shape index: {1}]
  %4 = xla_tuple %s2, %s3
  %s5 = sld [smem:[#allocation0]]
  $region26: #{slim_forward.33} parent=0
    _
  %s7 = ssub.s32 1, %s5
  %s8 = scalar_select 0, %s7, %s5
  // Predicated region
  $region2: #{slim_forward.33} parent=0 // pred_check
    _
  $region3: #{slim_forward.33} parent=0 // pred_check_branch
    %10 = sbr.rel (0) target = $region5
  $region4: #{slim_forward.33} parent=0 // pred_region
    _
  $region5: #{slim_forward.33} parent=0 // pred_fallthru
    _
  // Predicated region
  $region6: #{slim_forward.33} parent=0 // pred_check
    _
  $region7: #{slim_forward.33} parent=0 // pred_check_branch
    %12 = sbr.rel (0) target = $region9
  $region8: #{slim_forward.33} parent=0 // pred_region
    _
  $region9: #{slim_forward.33} parent=0 // pred_fallthru
    _
  %v14 = vld [vmem:[%s0] sm:$0xff]
  %v15 = vld [vmem:[%s0 + $0x8] sm:$0xf]
  %v16 = vld [vmem:[%s0 + $0xc] sm:$0xff]
  %v17 = vld [vmem:[%s0 + $0x14] sm:$0xf]
  %v18 = vld [vmem:[%s0 + $0x18] sm:$0xff]
  %v19 = vld [vmem:[%s0 + $0x20] sm:$0xf]
  %v20 = vld [vmem:[%s0 + $0x24] sm:$0xff]
  %v21 = vld [vmem:[%s0 + $0x2c] sm:$0xf]
  %v22 = vld [vmem:[%s0 + $0x30] sm:$0xff]
  %v23 = vld [vmem:[%s0 + $0x38] sm:$0xf]
  %v24 = vld [vmem:[%s0 + $0x3c] sm:$0xff]
  %v25 = vld [vmem:[%s0 + $0x44] sm:$0xf]
  %v26 = vld [vmem:[%s0 + $0x48] sm:$0xff]
  %v27 = vld [vmem:[%s0 + $0x50] sm:$0xf]
  %v28 = vld [vmem:[%s0 + $0x54] sm:$0xff]
  %v29 = vld [vmem:[%s0 + $0x5c] sm:$0xf]
  %v30 = vld [vmem:[%s0 + $0x60] sm:$0xff]
  %v31 = vld [vmem:[%s0 + $0x68] sm:$0xf]
  %v32 = vld [vmem:[%s0 + $0x6c] sm:$0xff]
  %v33 = vld [vmem:[%s0 + $0x74] sm:$0xf]
  %v34 = vld [vmem:[%s0 + $0x78] sm:$0xff]
  %v35 = vld [vmem:[%s0 + $0x80] sm:$0xf]
  %v36 = vld [vmem:[%s0 + $0x84] sm:$0xff]
  %v37 = vld [vmem:[%s0 + $0x8c] sm:$0xf]
  %v38 = vld [vmem:[%s0 + $0x90] sm:$0xff]
  %v39 = vld [vmem:[%s0 + $0x98] sm:$0xf]
  %v40 = vld [vmem:[%s0 + $0x9c] sm:$0xff]
  %v41 = vld [vmem:[%s0 + $0xa4] sm:$0xf]
  %v42 = vld [vmem:[%s0 + $0xa8] sm:$0xff]
  %v43 = vld [vmem:[%s0 + $0xb0] sm:$0xf]
  %v44 = vld [vmem:[%s0 + $0xb4] sm:$0xff]
  %v45 = vld [vmem:[%s0 + $0xbc] sm:$0xf]
  %v46 = vld [vmem:[%s1] sm:$0xf]
  %v47 = vld [vmem:[%s1 + $0x4] sm:$0xf]
  %v48 = vld [vmem:[%s1 + $0x8] sm:$0xf]
  %v49 = vld [vmem:[%s1 + $0xc] sm:$0xf]
  %v50 = vld [vmem:[%s1 + $0x10] sm:$0xf]
  %v51 = vld [vmem:[%s1 + $0x14] sm:$0xf]
  %v52 = vld [vmem:[%s1 + $0x18] sm:$0xf]
  %v53 = vld [vmem:[%s1 + $0x1c] sm:$0xf]
  %v54 = vld [vmem:[%s1 + $0x20] sm:$0xf]
  %v55 = vld [vmem:[%s1 + $0x24] sm:$0xf]
  %v56 = vld [vmem:[%s1 + $0x28] sm:$0xf]
  %v57 = vld [vmem:[%s1 + $0x2c] sm:$0xf]
  %v58 = vld [vmem:[%s1 + $0x30] sm:$0xf]
  %v59 = vld [vmem:[%s1 + $0x34] sm:$0xf]
  %v60 = vld [vmem:[%s1 + $0x38] sm:$0xf]
  %v61 = vld [vmem:[%s1 + $0x3c] sm:$0xf]
  %v62 = vld [vmem:[%s1 + $0x40] sm:$0xf]
  %v63 = vld [vmem:[%s1 + $0x44] sm:$0xf]
  %v64 = vld [vmem:[%s1 + $0x48] sm:$0xf]
  %v65 = vld [vmem:[%s1 + $0x4c] sm:$0xf]
  %v66 = vld [vmem:[%s1 + $0x50] sm:$0xf]
  %v67 = vld [vmem:[%s1 + $0x54] sm:$0xf]
  %v68 = vld [vmem:[%s1 + $0x58] sm:$0xf]
  %v69 = vld [vmem:[%s1 + $0x5c] sm:$0xf]
  %v70 = vld [vmem:[%s1 + $0x60] sm:$0xf]
  %v71 = vld [vmem:[%s1 + $0x64] sm:$0xf]
  %v72 = vld [vmem:[%s1 + $0x68] sm:$0xf]
  %v73 = vld [vmem:[%s1 + $0x6c] sm:$0xf]
  %v74 = vld [vmem:[%s1 + $0x70] sm:$0xf]
  %v75 = vld [vmem:[%s1 + $0x74] sm:$0xf]
  %v76 = vld [vmem:[%s1 + $0x78] sm:$0xf]
  %v77 = vld [vmem:[%s1 + $0x7c] sm:$0xf]
  %v78 = vld [vmem:[%s1 + $0x80] sm:$0xf]
  %v79 = vld [vmem:[%s1 + $0x84] sm:$0xf]
  %v80 = vld [vmem:[%s1 + $0x88] sm:$0xf]
  %v81 = vld [vmem:[%s1 + $0x8c] sm:$0xf]
  %v114 = vunpack.c.l.b16 %v14
  %v115 = vunpack.c.h.b16 %v14
  %v116 = vunpack.c.l.b16 %v15
  %v117 = vunpack.c.l.b16 %v16
  %v118 = vunpack.c.h.b16 %v16
  %v119 = vunpack.c.l.b16 %v17
  %v120 = vunpack.c.l.b16 %v18
  %v121 = vunpack.c.h.b16 %v18
  %v122 = vunpack.c.l.b16 %v19
  %v123 = vunpack.c.l.b16 %v20
  %v124 = vunpack.c.h.b16 %v20
  %v125 = vunpack.c.l.b16 %v21
  %v126 = vunpack.c.l.b16 %v22
  %v127 = vunpack.c.h.b16 %v22
  %v128 = vunpack.c.l.b16 %v23
  %v129 = vunpack.c.l.b16 %v24
  %v130 = vunpack.c.h.b16 %v24
  %v131 = vunpack.c.l.b16 %v25
  %v132 = vunpack.c.l.b16 %v26
  %v133 = vunpack.c.h.b16 %v26
  %v134 = vunpack.c.l.b16 %v27
  %v135 = vunpack.c.l.b16 %v28
  %v136 = vunpack.c.h.b16 %v28
  %v137 = vunpack.c.l.b16 %v29
  %v138 = vunpack.c.l.b16 %v30
  %v139 = vunpack.c.h.b16 %v30
  %v140 = vunpack.c.l.b16 %v31
  %v141 = vunpack.c.l.b16 %v32
  %v142 = vunpack.c.h.b16 %v32
  %v143 = vunpack.c.l.b16 %v33
  %v144 = vunpack.c.l.b16 %v34
  %v145 = vunpack.c.h.b16 %v34
  %v146 = vunpack.c.l.b16 %v35
  %v147 = vunpack.c.l.b16 %v36
  %v148 = vunpack.c.h.b16 %v36
  %v149 = vunpack.c.l.b16 %v37
  %v150 = vunpack.c.l.b16 %v38
  %v151 = vunpack.c.h.b16 %v38
  %v152 = vunpack.c.l.b16 %v39
  %v153 = vunpack.c.l.b16 %v40
  %v154 = vunpack.c.h.b16 %v40
  %v155 = vunpack.c.l.b16 %v41
  %v156 = vunpack.c.l.b16 %v42
  %v157 = vunpack.c.h.b16 %v42
  %v158 = vunpack.c.l.b16 %v43
  %v159 = vunpack.c.l.b16 %v44
  %v160 = vunpack.c.h.b16 %v44
  %v161 = vunpack.c.l.b16 %v45
  %v162 = vpack.c.b16 %v117, %v114
  %v163 = vpack.c.b16 %v118, %v115
  %v164 = vpack.c.b16 %v119, %v116
  %v165 = vpack.c.b16 %v123, %v120
  %v166 = vpack.c.b16 %v124, %v121
  %v167 = vpack.c.b16 %v125, %v122
  %v168 = vpack.c.b16 %v129, %v126
  %v169 = vpack.c.b16 %v130, %v127
  %v170 = vpack.c.b16 %v131, %v128
  %v171 = vpack.c.b16 %v135, %v132
  %v172 = vpack.c.b16 %v136, %v133
  %v173 = vpack.c.b16 %v137, %v134
  %v174 = vpack.c.b16 %v141, %v138
  %v175 = vpack.c.b16 %v142, %v139
  %v176 = vpack.c.b16 %v143, %v140
  %v177 = vpack.c.b16 %v147, %v144
  %v178 = vpack.c.b16 %v148, %v145
  %v179 = vpack.c.b16 %v149, %v146
  %v180 = vpack.c.b16 %v153, %v150
  %v181 = vpack.c.b16 %v154, %v151
  %v182 = vpack.c.b16 %v155, %v152
  %v183 = vpack.c.b16 %v159, %v156
  %v184 = vpack.c.b16 %v160, %v157
  %v185 = vpack.c.b16 %v161, %v158
  %v238 = vunpack.c.l.b16 %v46
  %v239 = vunpack.c.l.b16 %v47
  %v240 = vunpack.c.l.b16 %v48
  %v241 = vunpack.c.l.b16 %v49
  %v242 = vunpack.c.l.b16 %v50
  %v243 = vunpack.c.l.b16 %v51
  %v244 = vunpack.c.l.b16 %v52
  %v245 = vunpack.c.l.b16 %v53
  %v246 = vunpack.c.l.b16 %v54
  %v247 = vunpack.c.l.b16 %v55
  %v248 = vunpack.c.l.b16 %v56
  %v249 = vunpack.c.l.b16 %v57
  %v250 = vunpack.c.l.b16 %v58
  %v251 = vunpack.c.l.b16 %v59
  %v252 = vunpack.c.l.b16 %v60
  %v253 = vunpack.c.l.b16 %v61
  %v254 = vunpack.c.l.b16 %v62
  %v255 = vunpack.c.l.b16 %v63
  %v256 = vunpack.c.l.b16 %v64
  %v257 = vunpack.c.l.b16 %v65
  %v258 = vunpack.c.l.b16 %v66
  %v259 = vunpack.c.l.b16 %v67
  %v260 = vunpack.c.l.b16 %v68
  %v261 = vunpack.c.l.b16 %v69
  %v262 = vunpack.c.l.b16 %v70
  %v263 = vunpack.c.l.b16 %v71
  %v264 = vunpack.c.l.b16 %v72
  %v265 = vunpack.c.l.b16 %v73
  %v266 = vunpack.c.l.b16 %v74
  %v267 = vunpack.c.l.b16 %v75
  %v268 = vunpack.c.l.b16 %v76
  %v269 = vunpack.c.l.b16 %v77
  %v270 = vunpack.c.l.b16 %v78
  %v271 = vunpack.c.l.b16 %v79
  %v272 = vunpack.c.l.b16 %v80
  %v273 = vunpack.c.l.b16 %v81
  %v274 = vpack.c.b16 %v239, %v238
  %v275 = vpack.c.b16 %v241, %v240
  %v276 = vpack.c.b16 %v243, %v242
  %v277 = vpack.c.b16 %v245, %v244
  %v278 = vpack.c.b16 %v247, %v246
  %v279 = vpack.c.b16 %v249, %v248
  %v280 = vpack.c.b16 %v251, %v250
  %v281 = vpack.c.b16 %v253, %v252
  %v282 = vpack.c.b16 %v255, %v254
  %v283 = vpack.c.b16 %v257, %v256
  %v284 = vpack.c.b16 %v259, %v258
  %v285 = vpack.c.b16 %v261, %v260
  %v286 = vpack.c.b16 %v263, %v262
  %v287 = vpack.c.b16 %v265, %v264
  %v288 = vpack.c.b16 %v267, %v266
  %v289 = vpack.c.b16 %v269, %v268
  %v290 = vpack.c.b16 %v271, %v270
  %v291 = vpack.c.b16 %v273, %v272
  %vm310 = vcmask 261120
  %v312 = vsel %vm310, %v164, 0
  %v315 = vsel %vm310, %v167, 0
  %v318 = vsel %vm310, %v170, 0
  %v321 = vsel %vm310, %v173, 0
  %v324 = vsel %vm310, %v176, 0
  %v327 = vsel %vm310, %v179, 0
  %v330 = vsel %vm310, %v182, 0
  %v333 = vsel %vm310, %v185, 0
  %335 = vmatpush.bf16.msra.mxu0 %v281
  %336 = vmatpush.bf16.msra.mxu0 %v280
  %337 = vmatpush.bf16.msra.mxu0 %v279
  %338 = vmatpush.bf16.msra.mxu0 %v278
  %339 = vmatpush.bf16.msra.mxu0 %v277
  %340 = vmatpush.bf16.msra.mxu0 %v276
  %341 = vmatpush.bf16.msra.mxu0 %v275
  %342 = vmatpush.bf16.msra.mxu0 %v274
  %343 = vmatmul.bf16.gmra.mxu0 %v162
  %v344 = vpop.f32.mrf.mxu0
  %v345 = vadd.f32 0.0, %v344
  %v346 = vpop.f32.mrf.mxu0
  %v347 = vadd.f32 0.0, %v346
  %348 = vmatmul.bf16.gmra.mxu0 %v165
  %v349 = vpop.f32.mrf.mxu0
  %v350 = vadd.f32 0.0, %v349
  %v351 = vpop.f32.mrf.mxu0
  %v352 = vadd.f32 0.0, %v351
  %353 = vmatmul.bf16.gmra.mxu0 %v168
  %v354 = vpop.f32.mrf.mxu0
  %v355 = vadd.f32 0.0, %v354
  %v356 = vpop.f32.mrf.mxu0
  %v357 = vadd.f32 0.0, %v356
  %358 = vmatmul.bf16.gmra.mxu0 %v171
  %v359 = vpop.f32.mrf.mxu0
  %v360 = vadd.f32 0.0, %v359
  %v361 = vpop.f32.mrf.mxu0
  %v362 = vadd.f32 0.0, %v361
  %363 = vmatmul.bf16.gmra.mxu0 %v174
  %v364 = vpop.f32.mrf.mxu0
  %v365 = vadd.f32 0.0, %v364
  %v366 = vpop.f32.mrf.mxu0
  %v367 = vadd.f32 0.0, %v366
  %368 = vmatmul.bf16.gmra.mxu0 %v177
  %v369 = vpop.f32.mrf.mxu0
  %v370 = vadd.f32 0.0, %v369
  %v371 = vpop.f32.mrf.mxu0
  %v372 = vadd.f32 0.0, %v371
  %373 = vmatmul.bf16.gmra.mxu0 %v180
  %v374 = vpop.f32.mrf.mxu0
  %v375 = vadd.f32 0.0, %v374
  %v376 = vpop.f32.mrf.mxu0
  %v377 = vadd.f32 0.0, %v376
  %378 = vmatmul.bf16.gmra.mxu0 %v183
  %v379 = vpop.f32.mrf.mxu0
  %v380 = vadd.f32 0.0, %v379
  %v381 = vpop.f32.mrf.mxu0
  %v382 = vadd.f32 0.0, %v381
  %383 = vdwg.mxu0
  %384 = vmatpush.bf16.msra.mxu0 %v289
  %385 = vmatpush.bf16.msra.mxu0 %v288
  %386 = vmatpush.bf16.msra.mxu0 %v287
  %387 = vmatpush.bf16.msra.mxu0 %v286
  %388 = vmatpush.bf16.msra.mxu0 %v285
  %389 = vmatpush.bf16.msra.mxu0 %v284
  %390 = vmatpush.bf16.msra.mxu0 %v283
  %391 = vmatpush.bf16.msra.mxu0 %v282
  %392 = vmatmul.bf16.gmra.mxu0 %v163
  %v393 = vpop.f32.mrf.mxu0
  %v394 = vadd.f32 %v345, %v393
  %v395 = vpop.f32.mrf.mxu0
  %v396 = vadd.f32 %v347, %v395
  %397 = vmatmul.bf16.gmra.mxu0 %v166
  %v398 = vpop.f32.mrf.mxu0
  %v399 = vadd.f32 %v350, %v398
  %v400 = vpop.f32.mrf.mxu0
  %v401 = vadd.f32 %v352, %v400
  %402 = vmatmul.bf16.gmra.mxu0 %v169
  %v403 = vpop.f32.mrf.mxu0
  %v404 = vadd.f32 %v355, %v403
  %v405 = vpop.f32.mrf.mxu0
  %v406 = vadd.f32 %v357, %v405
  %407 = vmatmul.bf16.gmra.mxu0 %v172
  %v408 = vpop.f32.mrf.mxu0
  %v409 = vadd.f32 %v360, %v408
  %v410 = vpop.f32.mrf.mxu0
  %v411 = vadd.f32 %v362, %v410
  %412 = vmatmul.bf16.gmra.mxu0 %v175
  %v413 = vpop.f32.mrf.mxu0
  %v414 = vadd.f32 %v365, %v413
  %v415 = vpop.f32.mrf.mxu0
  %v416 = vadd.f32 %v367, %v415
  %417 = vmatmul.bf16.gmra.mxu0 %v178
  %v418 = vpop.f32.mrf.mxu0
  %v419 = vadd.f32 %v370, %v418
  %v420 = vpop.f32.mrf.mxu0
  %v421 = vadd.f32 %v372, %v420
  %422 = vmatmul.bf16.gmra.mxu0 %v181
  %v423 = vpop.f32.mrf.mxu0
  %v424 = vadd.f32 %v375, %v423
  %v425 = vpop.f32.mrf.mxu0
  %v426 = vadd.f32 %v377, %v425
  %427 = vmatmul.bf16.gmra.mxu0 %v184
  %v428 = vpop.f32.mrf.mxu0
  %v429 = vadd.f32 %v380, %v428
  %v430 = vpop.f32.mrf.mxu0
  %v431 = vadd.f32 %v382, %v430
  %432 = vdwg.mxu0
  %433 = vmatpush.bf16.msra.mxu0 0
  %434 = vmatpush.bf16.msra.mxu0 0
  %435 = vmatpush.bf16.msra.mxu0 0
  %436 = vmatpush.bf16.msra.mxu0 0
  %437 = vmatpush.bf16.msra.mxu0 0
  %438 = vmatpush.bf16.msra.mxu0 0
  %439 = vmatpush.bf16.msra.mxu0 %v291
  %440 = vmatpush.bf16.msra.mxu0 %v290
  %441 = vmatmul.bf16.gmra.mxu0 %v312
  %v442 = vpop.f32.mrf.mxu0
  %v443 = vadd.f32 %v394, %v442
  %v444 = vpop.f32.mrf.mxu0
  %v445 = vadd.f32 %v396, %v444
  %446 = vmatmul.bf16.gmra.mxu0 %v315
  %v447 = vpop.f32.mrf.mxu0
  %v448 = vadd.f32 %v399, %v447
  %v449 = vpop.f32.mrf.mxu0
  %v450 = vadd.f32 %v401, %v449
  %451 = vmatmul.bf16.gmra.mxu0 %v318
  %v452 = vpop.f32.mrf.mxu0
  %v453 = vadd.f32 %v404, %v452
  %v454 = vpop.f32.mrf.mxu0
  %v455 = vadd.f32 %v406, %v454
  %456 = vmatmul.bf16.gmra.mxu0 %v321
  %v457 = vpop.f32.mrf.mxu0
  %v458 = vadd.f32 %v409, %v457
  %v459 = vpop.f32.mrf.mxu0
  %v460 = vadd.f32 %v411, %v459
  %461 = vmatmul.bf16.gmra.mxu0 %v324
  %v462 = vpop.f32.mrf.mxu0
  %v463 = vadd.f32 %v414, %v462
  %v464 = vpop.f32.mrf.mxu0
  %v465 = vadd.f32 %v416, %v464
  %466 = vmatmul.bf16.gmra.mxu0 %v327
  %v467 = vpop.f32.mrf.mxu0
  %v468 = vadd.f32 %v419, %v467
  %v469 = vpop.f32.mrf.mxu0
  %v470 = vadd.f32 %v421, %v469
  %471 = vmatmul.bf16.gmra.mxu0 %v330
  %v472 = vpop.f32.mrf.mxu0
  %v473 = vadd.f32 %v424, %v472
  %v474 = vpop.f32.mrf.mxu0
  %v475 = vadd.f32 %v426, %v474
  %476 = vmatmul.bf16.gmra.mxu0 %v333
  %v477 = vpop.f32.mrf.mxu0
  %v478 = vadd.f32 %v429, %v477
  %v479 = vpop.f32.mrf.mxu0
  %v480 = vadd.f32 %v431, %v479
  %481 = vdwg.mxu0
  %482 = vst.msk [vmem:[%s2] sm:$0xff] %vm310, %v443
  %483 = vst.msk [vmem:[%s2 + $0x8] sm:$0xff] %vm310, %v445
  %484 = vst.msk [vmem:[%s2 + $0x10] sm:$0xff] %vm310, %v448
  %485 = vst.msk [vmem:[%s2 + $0x18] sm:$0xff] %vm310, %v450
  %486 = vst.msk [vmem:[%s2 + $0x20] sm:$0xff] %vm310, %v453
  %487 = vst.msk [vmem:[%s2 + $0x28] sm:$0xff] %vm310, %v455
  %488 = vst.msk [vmem:[%s2 + $0x30] sm:$0xff] %vm310, %v458
  %489 = vst.msk [vmem:[%s2 + $0x38] sm:$0xff] %vm310, %v460
  %490 = vst.msk [vmem:[%s2 + $0x40] sm:$0xff] %vm310, %v463
  %491 = vst.msk [vmem:[%s2 + $0x48] sm:$0xff] %vm310, %v465
  %492 = vst.msk [vmem:[%s2 + $0x50] sm:$0xff] %vm310, %v468
  %493 = vst.msk [vmem:[%s2 + $0x58] sm:$0xff] %vm310, %v470
  %494 = vst.msk [vmem:[%s2 + $0x60] sm:$0xff] %vm310, %v473
  %495 = vst.msk [vmem:[%s2 + $0x68] sm:$0xff] %vm310, %v475
  %496 = vst.msk [vmem:[%s2 + $0x70] sm:$0xff] %vm310, %v478
  %497 = vst.msk [vmem:[%s2 + $0x78] sm:$0xff] %vm310, %v480
  %v498 = vsel %vm310, %v443, 0.0
  %v499 = vsel %vm310, %v445, 0.0
  %v500 = vadd.f32 %v498, %v499
  %v501 = vsel %vm310, %v448, 0.0
  %v502 = vadd.f32 %v500, %v501
  %v503 = vsel %vm310, %v450, 0.0
  %v504 = vadd.f32 %v502, %v503
  %v505 = vsel %vm310, %v453, 0.0
  %v506 = vadd.f32 %v504, %v505
  %v507 = vsel %vm310, %v455, 0.0
  %v508 = vadd.f32 %v506, %v507
  %v509 = vsel %vm310, %v458, 0.0
  %v510 = vadd.f32 %v508, %v509
  %v511 = vsel %vm310, %v460, 0.0
  %v512 = vadd.f32 %v510, %v511
  %v513 = vsel %vm310, %v463, 0.0
  %v514 = vadd.f32 %v512, %v513
  %v515 = vsel %vm310, %v465, 0.0
  %v516 = vadd.f32 %v514, %v515
  %v517 = vsel %vm310, %v468, 0.0
  %v518 = vadd.f32 %v516, %v517
  %v519 = vsel %vm310, %v470, 0.0
  %v520 = vadd.f32 %v518, %v519
  %v521 = vsel %vm310, %v473, 0.0
  %v522 = vadd.f32 %v520, %v521
  %v523 = vsel %vm310, %v475, 0.0
  %v524 = vadd.f32 %v522, %v523
  %v525 = vsel %vm310, %v478, 0.0
  %v526 = vadd.f32 %v524, %v525
  %v527 = vsel %vm310, %v480, 0.0
  %v528 = vadd.f32 %v526, %v527
  %v529 = vrot.slane %v528, 4
  %v530 = vadd.f32 %v528, %v529
  %v531 = vrot.slane %v530, 2
  %v532 = vadd.f32 %v530, %v531
  %v533 = vrot.slane %v532, 1
  %v534 = vadd.f32 %v532, %v533
  %v535 = vmul.f32 %v443, %v443
  %v536 = vmul.f32 %v445, %v445
  %v537 = vmul.f32 %v448, %v448
  %v538 = vmul.f32 %v450, %v450
  %v539 = vmul.f32 %v453, %v453
  %v540 = vmul.f32 %v455, %v455
  %v541 = vmul.f32 %v458, %v458
  %v542 = vmul.f32 %v460, %v460
  %v543 = vmul.f32 %v463, %v463
  %v544 = vmul.f32 %v465, %v465
  %v545 = vmul.f32 %v468, %v468
  %v546 = vmul.f32 %v470, %v470
  %v547 = vmul.f32 %v473, %v473
  %v548 = vmul.f32 %v475, %v475
  %v549 = vmul.f32 %v478, %v478
  %v550 = vmul.f32 %v480, %v480
  %v551 = vsel %vm310, %v535, 0.0
  %v552 = vsel %vm310, %v536, 0.0
  %v553 = vadd.f32 %v551, %v552
  %v554 = vsel %vm310, %v537, 0.0
  %v555 = vadd.f32 %v553, %v554
  %v556 = vsel %vm310, %v538, 0.0
  %v557 = vadd.f32 %v555, %v556
  %v558 = vsel %vm310, %v539, 0.0
  %v559 = vadd.f32 %v557, %v558
  %v560 = vsel %vm310, %v540, 0.0
  %v561 = vadd.f32 %v559, %v560
  %v562 = vsel %vm310, %v541, 0.0
  %v563 = vadd.f32 %v561, %v562
  %v564 = vsel %vm310, %v542, 0.0
  %v565 = vadd.f32 %v563, %v564
  %v566 = vsel %vm310, %v543, 0.0
  %v567 = vadd.f32 %v565, %v566
  %v568 = vsel %vm310, %v544, 0.0
  %v569 = vadd.f32 %v567, %v568
  %v570 = vsel %vm310, %v545, 0.0
  %v571 = vadd.f32 %v569, %v570
  %v572 = vsel %vm310, %v546, 0.0
  %v573 = vadd.f32 %v571, %v572
  %v574 = vsel %vm310, %v547, 0.0
  %v575 = vadd.f32 %v573, %v574
  %v576 = vsel %vm310, %v548, 0.0
  %v577 = vadd.f32 %v575, %v576
  %v578 = vsel %vm310, %v549, 0.0
  %v579 = vadd.f32 %v577, %v578
  %v580 = vsel %vm310, %v550, 0.0
  %v581 = vadd.f32 %v579, %v580
  %v582 = vrot.slane %v581, 4
  %v583 = vadd.f32 %v581, %v582
  %v584 = vrot.slane %v583, 2
  %v585 = vadd.f32 %v583, %v584
  %v586 = vrot.slane %v585, 1
  %v587 = vadd.f32 %v585, %v586
  %vm588 = vcmask 1040384
  %v589 = vsel %vm588, %v534, %v587
  %vm590 = vcmask 1041408
  %v591 = vsel %vm590, %v589, 0.0
  %592 = vst.msk [vmem:[%s3] sm:$0xff] %vm310, %v591
  // Predicated region
  $region10: #{slim_forward.33} parent=0 // pred_check
    _
  $region11: #{slim_forward.33} parent=0 // pred_check_branch
    %594 = sbr.rel (0) target = $region13
  $region12: #{slim_forward.33} parent=0 // pred_region
    _
  $region13: #{slim_forward.33} parent=0 // pred_fallthru
    _
  // Predicated region
  $region14: #{slim_forward.33} parent=0 // pred_check
    _
  $region15: #{slim_forward.33} parent=0 // pred_check_branch
    %596 = sbr.rel (0) target = $region17
  $region16: #{slim_forward.33} parent=0 // pred_region
    _
  $region17: #{slim_forward.33} parent=0 // pred_fallthru
    _
  // Predicated region
  $region18: #{slim_forward.33} parent=0 // pred_check
    _
  $region19: #{slim_forward.33} parent=0 // pred_check_branch
    %598 = sbr.rel (0) target = $region21
  $region20: #{slim_forward.33} parent=0 // pred_region
    _
  $region21: #{slim_forward.33} parent=0 // pred_fallthru
    _
  // Predicated region
  $region22: #{slim_forward.33} parent=0 // pred_check
    _
  $region23: #{slim_forward.33} parent=0 // pred_check_branch
    %600 = sbr.rel (0) target = $region25
  $region24: #{slim_forward.33} parent=0 // pred_region
    _
  $region25: #{slim_forward.33} parent=0 // pred_fallthru
    _

// kernel: slim_forward.38
$region0: #{slim_forward.38}
  #allocation0 [shape = 'u32[]', space=smem, size = 0x4, offset = 0x4, fixed_abs, tag = 'smem constant byte address 0x4 - core index']
  #allocation1 [shape = 'u32[72,128]{1,0:T(1,128)}', space=vmem, size = 0x9000, scoped, tag = 'internal scratch']
  %s0 = inlined_call_operand.vmem [shape: f32[32,64], index: 0, kind: input, shape index: {}]
  %s1 = inlined_call_operand.vmem [shape: f32[1,64], index: 1, kind: input, shape index: {}]
  %s2 = inlined_call_operand.vmem [shape: f32[1,64], index: 2, kind: input, shape index: {}]
  %s3 = inlined_call_operand.vmem [shape: bf16[32,64], index: 3, kind: output, shape index: {}]
  %s4 = sld [smem:[#allocation0]]
  $region22: #{slim_forward.38} parent=0
    _
  %s6 = ssub.s32 1, %s4
  %s7 = scalar_select 0, %s6, %s4
  // Predicated region
  $region2: #{slim_forward.38} parent=0 // pred_check
    _
  $region3: #{slim_forward.38} parent=0 // pred_check_branch
    %9 = sbr.rel (0) target = $region5
  $region4: #{slim_forward.38} parent=0 // pred_region
    _
  $region5: #{slim_forward.38} parent=0 // pred_fallthru
    _
  // Predicated region
  $region6: #{slim_forward.38} parent=0 // pred_check
    _
  $region7: #{slim_forward.38} parent=0 // pred_check_branch
    %11 = sbr.rel (0) target = $region9
  $region8: #{slim_forward.38} parent=0 // pred_region
    _
  $region9: #{slim_forward.38} parent=0 // pred_fallthru
    _
  // Predicated region
  $region10: #{slim_forward.38} parent=0 // pred_check
    _
  $region11: #{slim_forward.38} parent=0 // pred_check_branch
    %13 = sbr.rel (0) target = $region13
  $region12: #{slim_forward.38} parent=0 // pred_region
    _
  $region13: #{slim_forward.38} parent=0 // pred_fallthru
    _
  %v14 = vld [vmem:[%s0] sm:$0xff]
  %v15 = vld [vmem:[%s0 + $0x8] sm:$0xff]
  %v16 = vld [vmem:[%s0 + $0x10] sm:$0xff]
  %v17 = vld [vmem:[%s0 + $0x18] sm:$0xff]
  %v18 = vld [vmem:[%s1] sm:$0x1]
  %v20 = vperm.slane %v18, 0
  %v22 = vmul.f32 %v14, %v20
  %v23 = vmul.f32 %v15, %v20
  %v24 = vmul.f32 %v16, %v20
  %v25 = vmul.f32 %v17, %v20
  %v26 = vld [vmem:[%s2] sm:$0x1]
  %v28 = vperm.slane %v26, 0
  %v30 = vadd.f32 %v22, %v28
  %v31 = vadd.f32 %v23, %v28
  %v32 = vadd.f32 %v24, %v28
  %v33 = vadd.f32 %v25, %v28
  %v34 = vmax.f32 %v30, 0.0
  %v35 = vmax.f32 %v31, 0.0
  %v36 = vmax.f32 %v32, 0.0
  %v37 = vmax.f32 %v33, 0.0
  %v38 = vpack.c.bf16 %v34, %v34
  %v39 = vpack.c.bf16 %v35, %v35
  %v40 = vpack.c.bf16 %v36, %v36
  %v41 = vpack.c.bf16 %v37, %v37
  %vm42 = vcmask 519168
  %43 = vst.msk [vmem:[%s3] sm:$0xf] %vm42, %v38
  %44 = vst.msk [vmem:[%s3 + $0x4] sm:$0xf] %vm42, %v39
  %45 = vst.msk [vmem:[%s3 + $0x8] sm:$0xf] %vm42, %v40
  %46 = vst.msk [vmem:[%s3 + $0xc] sm:$0xf] %vm42, %v41
  // Predicated region
  $region14: #{slim_forward.38} parent=0 // pred_check
    _
  $region15: #{slim_forward.38} parent=0 // pred_check_branch
    %48 = sbr.rel (0) target = $region17
  $region16: #{slim_forward.38} parent=0 // pred_region
    _
  $region17: #{slim_forward.38} parent=0 // pred_fallthru
    _
  // Predicated region
  $region18: #{slim_forward.38} parent=0 // pred_check
    _
  $region19: #{slim_forward.38} parent=0 // pred_check_branch
    %50 = sbr.rel (0) target = $region21
  $region20: #{slim_forward.38} parent=0 // pred_region
    _
  $region21: #{slim_forward.38} parent=0 // pred_fallthru
    _

// kernel: slim_forward.37
$region0: #{slim_forward.37}
  #allocation0 [shape = 'u32[]', space=smem, size = 0x4, offset = 0x4, fixed_abs, tag = 'smem constant byte address 0x4 - core index']
  #allocation1 [shape = 'u32[72,128]{1,0:T(1,128)}', space=vmem, size = 0x9000, scoped, tag = 'internal scratch']
  %s0 = inlined_call_operand.vmem [shape: bf16[32,288], index: 0, kind: input, shape index: {}]
  %s1 = inlined_call_operand.vmem [shape: bf16[288,64], index: 1, kind: input, shape index: {}]
  %s2 = inlined_call_operand.vmem [shape: f32[32,64], index: 2, kind: output, shape index: {0}]
  %s3 = inlined_call_operand.vmem [shape: f32[8,64], index: 3, kind: output, shape index: {1}]
  %4 = xla_tuple %s2, %s3
  %s5 = sld [smem:[#allocation0]]
  $region26: #{slim_forward.37} parent=0
    _
  %s7 = ssub.s32 1, %s5
  %s8 = scalar_select 0, %s7, %s5
  // Predicated region
  $region2: #{slim_forward.37} parent=0 // pred_check
    _
  $region3: #{slim_forward.37} parent=0 // pred_check_branch
    %10 = sbr.rel (0) target = $region5
  $region4: #{slim_forward.37} parent=0 // pred_region
    _
  $region5: #{slim_forward.37} parent=0 // pred_fallthru
    _
  // Predicated region
  $region6: #{slim_forward.37} parent=0 // pred_check
    _
  $region7: #{slim_forward.37} parent=0 // pred_check_branch
    %12 = sbr.rel (0) target = $region9
  $region8: #{slim_forward.37} parent=0 // pred_region
    _
  $region9: #{slim_forward.37} parent=0 // pred_fallthru
    _
  %v14 = vld [vmem:[%s0] sm:$0xff]
  %v15 = vld [vmem:[%s0 + $0x8] sm:$0xf]
  %v16 = vld [vmem:[%s0 + $0xc] sm:$0xff]
  %v17 = vld [vmem:[%s0 + $0x14] sm:$0xf]
  %v18 = vld [vmem:[%s0 + $0x18] sm:$0xff]
  %v19 = vld [vmem:[%s0 + $0x20] sm:$0xf]
  %v20 = vld [vmem:[%s0 + $0x24] sm:$0xff]
  %v21 = vld [vmem:[%s0 + $0x2c] sm:$0xf]
  %v22 = vld [vmem:[%s1] sm:$0xf]
  %v23 = vld [vmem:[%s1 + $0x4] sm:$0xf]
  %v24 = vld [vmem:[%s1 + $0x8] sm:$0xf]
  %v25 = vld [vmem:[%s1 + $0xc] sm:$0xf]
  %v26 = vld [vmem:[%s1 + $0x10] sm:$0xf]
  %v27 = vld [vmem:[%s1 + $0x14] sm:$0xf]
  %v28 = vld [vmem:[%s1 + $0x18] sm:$0xf]
  %v29 = vld [vmem:[%s1 + $0x1c] sm:$0xf]
  %v30 = vld [vmem:[%s1 + $0x20] sm:$0xf]
  %v31 = vld [vmem:[%s1 + $0x24] sm:$0xf]
  %v32 = vld [vmem:[%s1 + $0x28] sm:$0xf]
  %v33 = vld [vmem:[%s1 + $0x2c] sm:$0xf]
  %v34 = vld [vmem:[%s1 + $0x30] sm:$0xf]
  %v35 = vld [vmem:[%s1 + $0x34] sm:$0xf]
  %v36 = vld [vmem:[%s1 + $0x38] sm:$0xf]
  %v37 = vld [vmem:[%s1 + $0x3c] sm:$0xf]
  %v38 = vld [vmem:[%s1 + $0x40] sm:$0xf]
  %v39 = vld [vmem:[%s1 + $0x44] sm:$0xf]
  %v40 = vld [vmem:[%s1 + $0x48] sm:$0xf]
  %v41 = vld [vmem:[%s1 + $0x4c] sm:$0xf]
  %v42 = vld [vmem:[%s1 + $0x50] sm:$0xf]
  %v43 = vld [vmem:[%s1 + $0x54] sm:$0xf]
  %v44 = vld [vmem:[%s1 + $0x58] sm:$0xf]
  %v45 = vld [vmem:[%s1 + $0x5c] sm:$0xf]
  %v46 = vld [vmem:[%s1 + $0x60] sm:$0xf]
  %v47 = vld [vmem:[%s1 + $0x64] sm:$0xf]
  %v48 = vld [vmem:[%s1 + $0x68] sm:$0xf]
  %v49 = vld [vmem:[%s1 + $0x6c] sm:$0xf]
  %v50 = vld [vmem:[%s1 + $0x70] sm:$0xf]
  %v51 = vld [vmem:[%s1 + $0x74] sm:$0xf]
  %v52 = vld [vmem:[%s1 + $0x78] sm:$0xf]
  %v53 = vld [vmem:[%s1 + $0x7c] sm:$0xf]
  %v54 = vld [vmem:[%s1 + $0x80] sm:$0xf]
  %v55 = vld [vmem:[%s1 + $0x84] sm:$0xf]
  %v56 = vld [vmem:[%s1 + $0x88] sm:$0xf]
  %v57 = vld [vmem:[%s1 + $0x8c] sm:$0xf]
  %v66 = vunpack.c.l.b16 %v14
  %v67 = vunpack.c.h.b16 %v14
  %v68 = vunpack.c.l.b16 %v15
  %v69 = vunpack.c.l.b16 %v16
  %v70 = vunpack.c.h.b16 %v16
  %v71 = vunpack.c.l.b16 %v17
  %v72 = vunpack.c.l.b16 %v18
  %v73 = vunpack.c.h.b16 %v18
  %v74 = vunpack.c.l.b16 %v19
  %v75 = vunpack.c.l.b16 %v20
  %v76 = vunpack.c.h.b16 %v20
  %v77 = vunpack.c.l.b16 %v21
  %v78 = vpack.c.b16 %v69, %v66
  %v79 = vpack.c.b16 %v70, %v67
  %v80 = vpack.c.b16 %v71, %v68
  %v81 = vpack.c.b16 %v75, %v72
  %v82 = vpack.c.b16 %v76, %v73
  %v83 = vpack.c.b16 %v77, %v74
  %v124 = vunpack.c.l.b16 %v22
  %v125 = vunpack.c.l.b16 %v23
  %v126 = vunpack.c.l.b16 %v24
  %v127 = vunpack.c.l.b16 %v25
  %v128 = vunpack.c.l.b16 %v26
  %v129 = vunpack.c.l.b16 %v27
  %v130 = vunpack.c.l.b16 %v28
  %v131 = vunpack.c.l.b16 %v29
  %v132 = vunpack.c.l.b16 %v30
  %v133 = vunpack.c.l.b16 %v31
  %v134 = vunpack.c.l.b16 %v32
  %v135 = vunpack.c.l.b16 %v33
  %v136 = vunpack.c.l.b16 %v34
  %v137 = vunpack.c.l.b16 %v35
  %v138 = vunpack.c.l.b16 %v36
  %v139 = vunpack.c.l.b16 %v37
  %v140 = vunpack.c.l.b16 %v38
  %v141 = vunpack.c.l.b16 %v39
  %v142 = vunpack.c.l.b16 %v40
  %v143 = vunpack.c.l.b16 %v41
  %v144 = vunpack.c.l.b16 %v42
  %v145 = vunpack.c.l.b16 %v43
  %v146 = vunpack.c.l.b16 %v44
  %v147 = vunpack.c.l.b16 %v45
  %v148 = vunpack.c.l.b16 %v46
  %v149 = vunpack.c.l.b16 %v47
  %v150 = vunpack.c.l.b16 %v48
  %v151 = vunpack.c.l.b16 %v49
  %v152 = vunpack.c.l.b16 %v50
  %v153 = vunpack.c.l.b16 %v51
  %v154 = vunpack.c.l.b16 %v52
  %v155 = vunpack.c.l.b16 %v53
  %v156 = vunpack.c.l.b16 %v54
  %v157 = vunpack.c.l.b16 %v55
  %v158 = vunpack.c.l.b16 %v56
  %v159 = vunpack.c.l.b16 %v57
  %v160 = vpack.c.b16 %v125, %v124
  %v161 = vpack.c.b16 %v127, %v126
  %v162 = vpack.c.b16 %v129, %v128
  %v163 = vpack.c.b16 %v131, %v130
  %v164 = vpack.c.b16 %v133, %v132
  %v165 = vpack.c.b16 %v135, %v134
  %v166 = vpack.c.b16 %v137, %v136
  %v167 = vpack.c.b16 %v139, %v138
  %v168 = vpack.c.b16 %v141, %v140
  %v169 = vpack.c.b16 %v143, %v142
  %v170 = vpack.c.b16 %v145, %v144
  %v171 = vpack.c.b16 %v147, %v146
  %v172 = vpack.c.b16 %v149, %v148
  %v173 = vpack.c.b16 %v151, %v150
  %v174 = vpack.c.b16 %v153, %v152
  %v175 = vpack.c.b16 %v155, %v154
  %v176 = vpack.c.b16 %v157, %v156
  %v177 = vpack.c.b16 %v159, %v158
  %vm196 = vcmask 261120
  %v198 = vsel %vm196, %v80, 0
  %v201 = vsel %vm196, %v83, 0
  %203 = vmatpush.bf16.msra.mxu0 %v167
  %204 = vmatpush.bf16.msra.mxu0 %v166
  %205 = vmatpush.bf16.msra.mxu0 %v165
  %206 = vmatpush.bf16.msra.mxu0 %v164
  %207 = vmatpush.bf16.msra.mxu0 %v163
  %208 = vmatpush.bf16.msra.mxu0 %v162
  %209 = vmatpush.bf16.msra.mxu0 %v161
  %210 = vmatpush.bf16.msra.mxu0 %v160
  %211 = vmatmul.bf16.gmra.mxu0 %v78
  %v212 = vpop.f32.mrf.mxu0
  %v213 = vadd.f32 0.0, %v212
  %v214 = vpop.f32.mrf.mxu0
  %v215 = vadd.f32 0.0, %v214
  %216 = vmatmul.bf16.gmra.mxu0 %v81
  %v217 = vpop.f32.mrf.mxu0
  %v218 = vadd.f32 0.0, %v217
  %v219 = vpop.f32.mrf.mxu0
  %v220 = vadd.f32 0.0, %v219
  %221 = vdwg.mxu0
  %222 = vmatpush.bf16.msra.mxu0 %v175
  %223 = vmatpush.bf16.msra.mxu0 %v174
  %224 = vmatpush.bf16.msra.mxu0 %v173
  %225 = vmatpush.bf16.msra.mxu0 %v172
  %226 = vmatpush.bf16.msra.mxu0 %v171
  %227 = vmatpush.bf16.msra.mxu0 %v170
  %228 = vmatpush.bf16.msra.mxu0 %v169
  %229 = vmatpush.bf16.msra.mxu0 %v168
  %230 = vmatmul.bf16.gmra.mxu0 %v79
  %v231 = vpop.f32.mrf.mxu0
  %v232 = vadd.f32 %v213, %v231
  %v233 = vpop.f32.mrf.mxu0
  %v234 = vadd.f32 %v215, %v233
  %235 = vmatmul.bf16.gmra.mxu0 %v82
  %v236 = vpop.f32.mrf.mxu0
  %v237 = vadd.f32 %v218, %v236
  %v238 = vpop.f32.mrf.mxu0
  %v239 = vadd.f32 %v220, %v238
  %240 = vdwg.mxu0
  %241 = vmatpush.bf16.msra.mxu0 0
  %242 = vmatpush.bf16.msra.mxu0 0
  %243 = vmatpush.bf16.msra.mxu0 0
  %244 = vmatpush.bf16.msra.mxu0 0
  %245 = vmatpush.bf16.msra.mxu0 0
  %246 = vmatpush.bf16.msra.mxu0 0
  %247 = vmatpush.bf16.msra.mxu0 %v177
  %248 = vmatpush.bf16.msra.mxu0 %v176
  %249 = vmatmul.bf16.gmra.mxu0 %v198
  %v250 = vpop.f32.mrf.mxu0
  %v251 = vadd.f32 %v232, %v250
  %v252 = vpop.f32.mrf.mxu0
  %v253 = vadd.f32 %v234, %v252
  %254 = vmatmul.bf16.gmra.mxu0 %v201
  %v255 = vpop.f32.mrf.mxu0
  %v256 = vadd.f32 %v237, %v255
  %v257 = vpop.f32.mrf.mxu0
  %v258 = vadd.f32 %v239, %v257
  %259 = vdwg.mxu0
  %vm260 = vcmask 523264
  %261 = vst.msk [vmem:[%s2] sm:$0xff] %vm260, %v251
  %262 = vst.msk [vmem:[%s2 + $0x8] sm:$0xff] %vm260, %v253
  %263 = vst.msk [vmem:[%s2 + $0x10] sm:$0xff] %vm260, %v256
  %264 = vst.msk [vmem:[%s2 + $0x18] sm:$0xff] %vm260, %v258
  %v265 = vsel %vm260, %v251, 0.0
  %v266 = vsel %vm260, %v253, 0.0
  %v267 = vadd.f32 %v265, %v266
  %v268 = vsel %vm260, %v256, 0.0
  %v269 = vadd.f32 %v267, %v268
  %v270 = vsel %vm260, %v258, 0.0
  %v271 = vadd.f32 %v269, %v270
  %v272 = vrot.slane %v271, 4
  %v273 = vadd.f32 %v271, %v272
  %v274 = vrot.slane %v273, 2
  %v275 = vadd.f32 %v273, %v274
  %v276 = vrot.slane %v275, 1
  %v277 = vadd.f32 %v275, %v276
  %v278 = vmul.f32 %v251, %v251
  %v279 = vmul.f32 %v253, %v253
  %v280 = vmul.f32 %v256, %v256
  %v281 = vmul.f32 %v258, %v258
  %v282 = vsel %vm260, %v278, 0.0
  %v283 = vsel %vm260, %v279, 0.0
  %v284 = vadd.f32 %v282, %v283
  %v285 = vsel %vm260, %v280, 0.0
  %v286 = vadd.f32 %v284, %v285
  %v287 = vsel %vm260, %v281, 0.0
  %v288 = vadd.f32 %v286, %v287
  %v289 = vrot.slane %v288, 4
  %v290 = vadd.f32 %v288, %v289
  %v291 = vrot.slane %v290, 2
  %v292 = vadd.f32 %v290, %v291
  %v293 = vrot.slane %v292, 1
  %v294 = vadd.f32 %v292, %v293
  %vm295 = vcmask 1040384
  %v296 = vsel %vm295, %v277, %v294
  %vm297 = vcmask 1041408
  %v298 = vsel %vm297, %v296, 0.0
  %299 = vst.msk [vmem:[%s3] sm:$0xff] %vm260, %v298
  // Predicated region
  $region10: #{slim_forward.37} parent=0 // pred_check
    _
  $region11: #{slim_forward.37} parent=0 // pred_check_branch
    %301 = sbr.rel (0) target = $region13
  $region12: #{slim_forward.37} parent=0 // pred_region
    _
  $region13: #{slim_forward.37} parent=0 // pred_fallthru
    _
  // Predicated region
  $region14: #{slim_forward.37} parent=0 // pred_check
    _
  $region15: #{slim_forward.37} parent=0 // pred_check_branch
    %303 = sbr.rel (0) target = $region17
  $region16: #{slim_forward.37} parent=0 // pred_region
    _
  $region17: #{slim_forward.37} parent=0 // pred_fallthru
    _
  // Predicated region
  $region18: #{slim_forward.37} parent=0 // pred_check
    _
  $region19: #{slim_forward.37} parent=0 // pred_check_branch
    %305 = sbr.rel (0) target = $region21
  $region20: #{slim_forward.37} parent=0 // pred_region
    _
  $region21: #{slim_forward.37} parent=0 // pred_fallthru
    _
  // Predicated region
  $region22: #{slim_forward.37} parent=0 // pred_check
    _
  $region23: #{slim_forward.37} parent=0 // pred_check_branch
    %307 = sbr.rel (0) target = $region25
  $region24: #{slim_forward.37} parent=0 // pred_region
    _
  $region25: #{slim_forward.37} parent=0 // pred_fallthru
    _

// kernel: slim_forward.39
$region0: #{slim_forward.39}
  #allocation0 [shape = 'u32[]', space=smem, size = 0x4, offset = 0x4, fixed_abs, tag = 'smem constant byte address 0x4 - core index']
  #allocation1 [shape = 'u32[72,128]{1,0:T(1,128)}', space=vmem, size = 0x9000, scoped, tag = 'internal scratch']
  %s0 = inlined_call_operand.vmem [shape: bf16[32,576], index: 0, kind: input, shape index: {}]
  %s1 = inlined_call_operand.vmem [shape: bf16[576,64], index: 1, kind: input, shape index: {}]
  %s2 = inlined_call_operand.vmem [shape: f32[32,64], index: 2, kind: output, shape index: {0}]
  %s3 = inlined_call_operand.vmem [shape: f32[8,64], index: 3, kind: output, shape index: {1}]
  %4 = xla_tuple %s2, %s3
  %s5 = sld [smem:[#allocation0]]
  $region26: #{slim_forward.39} parent=0
    _
  %s7 = ssub.s32 1, %s5
  %s8 = scalar_select 0, %s7, %s5
  // Predicated region
  $region2: #{slim_forward.39} parent=0 // pred_check
    _
  $region3: #{slim_forward.39} parent=0 // pred_check_branch
    %10 = sbr.rel (0) target = $region5
  $region4: #{slim_forward.39} parent=0 // pred_region
    _
  $region5: #{slim_forward.39} parent=0 // pred_fallthru
    _
  // Predicated region
  $region6: #{slim_forward.39} parent=0 // pred_check
    _
  $region7: #{slim_forward.39} parent=0 // pred_check_branch
    %12 = sbr.rel (0) target = $region9
  $region8: #{slim_forward.39} parent=0 // pred_region
    _
  $region9: #{slim_forward.39} parent=0 // pred_fallthru
    _
  %v14 = vld [vmem:[%s0] sm:$0xff]
  %v15 = vld [vmem:[%s0 + $0x8] sm:$0xff]
  %v16 = vld [vmem:[%s0 + $0x10] sm:$0xf]
  %v17 = vld [vmem:[%s0 + $0x14] sm:$0xff]
  %v18 = vld [vmem:[%s0 + $0x1c] sm:$0xff]
  %v19 = vld [vmem:[%s0 + $0x24] sm:$0xf]
  %v20 = vld [vmem:[%s0 + $0x28] sm:$0xff]
  %v21 = vld [vmem:[%s0 + $0x30] sm:$0xff]
  %v22 = vld [vmem:[%s0 + $0x38] sm:$0xf]
  %v23 = vld [vmem:[%s0 + $0x3c] sm:$0xff]
  %v24 = vld [vmem:[%s0 + $0x44] sm:$0xff]
  %v25 = vld [vmem:[%s0 + $0x4c] sm:$0xf]
  %v26 = vld [vmem:[%s1] sm:$0xf]
  %v27 = vld [vmem:[%s1 + $0x4] sm:$0xf]
  %v28 = vld [vmem:[%s1 + $0x8] sm:$0xf]
  %v29 = vld [vmem:[%s1 + $0xc] sm:$0xf]
  %v30 = vld [vmem:[%s1 + $0x10] sm:$0xf]
  %v31 = vld [vmem:[%s1 + $0x14] sm:$0xf]
  %v32 = vld [vmem:[%s1 + $0x18] sm:$0xf]
  %v33 = vld [vmem:[%s1 + $0x1c] sm:$0xf]
  %v34 = vld [vmem:[%s1 + $0x20] sm:$0xf]
  %v35 = vld [vmem:[%s1 + $0x24] sm:$0xf]
  %v36 = vld [vmem:[%s1 + $0x28] sm:$0xf]
  %v37 = vld [vmem:[%s1 + $0x2c] sm:$0xf]
  %v38 = vld [vmem:[%s1 + $0x30] sm:$0xf]
  %v39 = vld [vmem:[%s1 + $0x34] sm:$0xf]
  %v40 = vld [vmem:[%s1 + $0x38] sm:$0xf]
  %v41 = vld [vmem:[%s1 + $0x3c] sm:$0xf]
  %v42 = vld [vmem:[%s1 + $0x40] sm:$0xf]
  %v43 = vld [vmem:[%s1 + $0x44] sm:$0xf]
  %v44 = vld [vmem:[%s1 + $0x48] sm:$0xf]
  %v45 = vld [vmem:[%s1 + $0x4c] sm:$0xf]
  %v46 = vld [vmem:[%s1 + $0x50] sm:$0xf]
  %v47 = vld [vmem:[%s1 + $0x54] sm:$0xf]
  %v48 = vld [vmem:[%s1 + $0x58] sm:$0xf]
  %v49 = vld [vmem:[%s1 + $0x5c] sm:$0xf]
  %v50 = vld [vmem:[%s1 + $0x60] sm:$0xf]
  %v51 = vld [vmem:[%s1 + $0x64] sm:$0xf]
  %v52 = vld [vmem:[%s1 + $0x68] sm:$0xf]
  %v53 = vld [vmem:[%s1 + $0x6c] sm:$0xf]
  %v54 = vld [vmem:[%s1 + $0x70] sm:$0xf]
  %v55 = vld [vmem:[%s1 + $0x74] sm:$0xf]
  %v56 = vld [vmem:[%s1 + $0x78] sm:$0xf]
  %v57 = vld [vmem:[%s1 + $0x7c] sm:$0xf]
  %v58 = vld [vmem:[%s1 + $0x80] sm:$0xf]
  %v59 = vld [vmem:[%s1 + $0x84] sm:$0xf]
  %v60 = vld [vmem:[%s1 + $0x88] sm:$0xf]
  %v61 = vld [vmem:[%s1 + $0x8c] sm:$0xf]
  %v62 = vld [vmem:[%s1 + $0x90] sm:$0xf]
  %v63 = vld [vmem:[%s1 + $0x94] sm:$0xf]
  %v64 = vld [vmem:[%s1 + $0x98] sm:$0xf]
  %v65 = vld [vmem:[%s1 + $0x9c] sm:$0xf]
  %v66 = vld [vmem:[%s1 + $0xa0] sm:$0xf]
  %v67 = vld [vmem:[%s1 + $0xa4] sm:$0xf]
  %v68 = vld [vmem:[%s1 + $0xa8] sm:$0xf]
  %v69 = vld [vmem:[%s1 + $0xac] sm:$0xf]
  %v70 = vld [vmem:[%s1 + $0xb0] sm:$0xf]
  %v71 = vld [vmem:[%s1 + $0xb4] sm:$0xf]
  %v72 = vld [vmem:[%s1 + $0xb8] sm:$0xf]
  %v73 = vld [vmem:[%s1 + $0xbc] sm:$0xf]
  %v74 = vld [vmem:[%s1 + $0xc0] sm:$0xf]
  %v75 = vld [vmem:[%s1 + $0xc4] sm:$0xf]
  %v76 = vld [vmem:[%s1 + $0xc8] sm:$0xf]
  %v77 = vld [vmem:[%s1 + $0xcc] sm:$0xf]
  %v78 = vld [vmem:[%s1 + $0xd0] sm:$0xf]
  %v79 = vld [vmem:[%s1 + $0xd4] sm:$0xf]
  %v80 = vld [vmem:[%s1 + $0xd8] sm:$0xf]
  %v81 = vld [vmem:[%s1 + $0xdc] sm:$0xf]
  %v82 = vld [vmem:[%s1 + $0xe0] sm:$0xf]
  %v83 = vld [vmem:[%s1 + $0xe4] sm:$0xf]
  %v84 = vld [vmem:[%s1 + $0xe8] sm:$0xf]
  %v85 = vld [vmem:[%s1 + $0xec] sm:$0xf]
  %v86 = vld [vmem:[%s1 + $0xf0] sm:$0xf]
  %v87 = vld [vmem:[%s1 + $0xf4] sm:$0xf]
  %v88 = vld [vmem:[%s1 + $0xf8] sm:$0xf]
  %v89 = vld [vmem:[%s1 + $0xfc] sm:$0xf]
  %v90 = vld [vmem:[%s1 + $0x100] sm:$0xf]
  %v91 = vld [vmem:[%s1 + $0x104] sm:$0xf]
  %v92 = vld [vmem:[%s1 + $0x108] sm:$0xf]
  %v93 = vld [vmem:[%s1 + $0x10c] sm:$0xf]
  %v94 = vld [vmem:[%s1 + $0x110] sm:$0xf]
  %v95 = vld [vmem:[%s1 + $0x114] sm:$0xf]
  %v96 = vld [vmem:[%s1 + $0x118] sm:$0xf]
  %v97 = vld [vmem:[%s1 + $0x11c] sm:$0xf]
  %v110 = vunpack.c.l.b16 %v14
  %v111 = vunpack.c.h.b16 %v14
  %v112 = vunpack.c.l.b16 %v15
  %v113 = vunpack.c.h.b16 %v15
  %v114 = vunpack.c.l.b16 %v16
  %v115 = vunpack.c.l.b16 %v17
  %v116 = vunpack.c.h.b16 %v17
  %v117 = vunpack.c.l.b16 %v18
  %v118 = vunpack.c.h.b16 %v18
  %v119 = vunpack.c.l.b16 %v19
  %v120 = vunpack.c.l.b16 %v20
  %v121 = vunpack.c.h.b16 %v20
  %v122 = vunpack.c.l.b16 %v21
  %v123 = vunpack.c.h.b16 %v21
  %v124 = vunpack.c.l.b16 %v22
  %v125 = vunpack.c.l.b16 %v23
  %v126 = vunpack.c.h.b16 %v23
  %v127 = vunpack.c.l.b16 %v24
  %v128 = vunpack.c.h.b16 %v24
  %v129 = vunpack.c.l.b16 %v25
  %v130 = vpack.c.b16 %v115, %v110
  %v131 = vpack.c.b16 %v116, %v111
  %v132 = vpack.c.b16 %v117, %v112
  %v133 = vpack.c.b16 %v118, %v113
  %v134 = vpack.c.b16 %v119, %v114
  %v135 = vpack.c.b16 %v125, %v120
  %v136 = vpack.c.b16 %v126, %v121
  %v137 = vpack.c.b16 %v127, %v122
  %v138 = vpack.c.b16 %v128, %v123
  %v139 = vpack.c.b16 %v129, %v124
  %v220 = vunpack.c.l.b16 %v26
  %v221 = vunpack.c.l.b16 %v27
  %v222 = vunpack.c.l.b16 %v28
  %v223 = vunpack.c.l.b16 %v29
  %v224 = vunpack.c.l.b16 %v30
  %v225 = vunpack.c.l.b16 %v31
  %v226 = vunpack.c.l.b16 %v32
  %v227 = vunpack.c.l.b16 %v33
  %v228 = vunpack.c.l.b16 %v34
  %v229 = vunpack.c.l.b16 %v35
  %v230 = vunpack.c.l.b16 %v36
  %v231 = vunpack.c.l.b16 %v37
  %v232 = vunpack.c.l.b16 %v38
  %v233 = vunpack.c.l.b16 %v39
  %v234 = vunpack.c.l.b16 %v40
  %v235 = vunpack.c.l.b16 %v41
  %v236 = vunpack.c.l.b16 %v42
  %v237 = vunpack.c.l.b16 %v43
  %v238 = vunpack.c.l.b16 %v44
  %v239 = vunpack.c.l.b16 %v45
  %v240 = vunpack.c.l.b16 %v46
  %v241 = vunpack.c.l.b16 %v47
  %v242 = vunpack.c.l.b16 %v48
  %v243 = vunpack.c.l.b16 %v49
  %v244 = vunpack.c.l.b16 %v50
  %v245 = vunpack.c.l.b16 %v51
  %v246 = vunpack.c.l.b16 %v52
  %v247 = vunpack.c.l.b16 %v53
  %v248 = vunpack.c.l.b16 %v54
  %v249 = vunpack.c.l.b16 %v55
  %v250 = vunpack.c.l.b16 %v56
  %v251 = vunpack.c.l.b16 %v57
  %v252 = vunpack.c.l.b16 %v58
  %v253 = vunpack.c.l.b16 %v59
  %v254 = vunpack.c.l.b16 %v60
  %v255 = vunpack.c.l.b16 %v61
  %v256 = vunpack.c.l.b16 %v62
  %v257 = vunpack.c.l.b16 %v63
  %v258 = vunpack.c.l.b16 %v64
  %v259 = vunpack.c.l.b16 %v65
  %v260 = vunpack.c.l.b16 %v66
  %v261 = vunpack.c.l.b16 %v67
  %v262 = vunpack.c.l.b16 %v68
  %v263 = vunpack.c.l.b16 %v69
  %v264 = vunpack.c.l.b16 %v70
  %v265 = vunpack.c.l.b16 %v71
  %v266 = vunpack.c.l.b16 %v72
  %v267 = vunpack.c.l.b16 %v73
  %v268 = vunpack.c.l.b16 %v74
  %v269 = vunpack.c.l.b16 %v75
  %v270 = vunpack.c.l.b16 %v76
  %v271 = vunpack.c.l.b16 %v77
  %v272 = vunpack.c.l.b16 %v78
  %v273 = vunpack.c.l.b16 %v79
  %v274 = vunpack.c.l.b16 %v80
  %v275 = vunpack.c.l.b16 %v81
  %v276 = vunpack.c.l.b16 %v82
  %v277 = vunpack.c.l.b16 %v83
  %v278 = vunpack.c.l.b16 %v84
  %v279 = vunpack.c.l.b16 %v85
  %v280 = vunpack.c.l.b16 %v86
  %v281 = vunpack.c.l.b16 %v87
  %v282 = vunpack.c.l.b16 %v88
  %v283 = vunpack.c.l.b16 %v89
  %v284 = vunpack.c.l.b16 %v90
  %v285 = vunpack.c.l.b16 %v91
  %v286 = vunpack.c.l.b16 %v92
  %v287 = vunpack.c.l.b16 %v93
  %v288 = vunpack.c.l.b16 %v94
  %v289 = vunpack.c.l.b16 %v95
  %v290 = vunpack.c.l.b16 %v96
  %v291 = vunpack.c.l.b16 %v97
  %v292 = vpack.c.b16 %v221, %v220
  %v293 = vpack.c.b16 %v223, %v222
  %v294 = vpack.c.b16 %v225, %v224
  %v295 = vpack.c.b16 %v227, %v226
  %v296 = vpack.c.b16 %v229, %v228
  %v297 = vpack.c.b16 %v231, %v230
  %v298 = vpack.c.b16 %v233, %v232
  %v299 = vpack.c.b16 %v235, %v234
  %v300 = vpack.c.b16 %v237, %v236
  %v301 = vpack.c.b16 %v239, %v238
  %v302 = vpack.c.b16 %v241, %v240
  %v303 = vpack.c.b16 %v243, %v242
  %v304 = vpack.c.b16 %v245, %v244
  %v305 = vpack.c.b16 %v247, %v246
  %v306 = vpack.c.b16 %v249, %v248
  %v307 = vpack.c.b16 %v251, %v250
  %v308 = vpack.c.b16 %v253, %v252
  %v309 = vpack.c.b16 %v255, %v254
  %v310 = vpack.c.b16 %v257, %v256
  %v311 = vpack.c.b16 %v259, %v258
  %v312 = vpack.c.b16 %v261, %v260
  %v313 = vpack.c.b16 %v263, %v262
  %v314 = vpack.c.b16 %v265, %v264
  %v315 = vpack.c.b16 %v267, %v266
  %v316 = vpack.c.b16 %v269, %v268
  %v317 = vpack.c.b16 %v271, %v270
  %v318 = vpack.c.b16 %v273, %v272
  %v319 = vpack.c.b16 %v275, %v274
  %v320 = vpack.c.b16 %v277, %v276
  %v321 = vpack.c.b16 %v279, %v278
  %v322 = vpack.c.b16 %v281, %v280
  %v323 = vpack.c.b16 %v283, %v282
  %v324 = vpack.c.b16 %v285, %v284
  %v325 = vpack.c.b16 %v287, %v286
  %v326 = vpack.c.b16 %v289, %v288
  %v327 = vpack.c.b16 %v291, %v290
  %vm364 = vcmask 523264
  %v366 = vsel %vm364, %v134, 0
  %v369 = vsel %vm364, %v139, 0
  %371 = vmatpush.bf16.msra.mxu0 %v299
  %372 = vmatpush.bf16.msra.mxu0 %v298
  %373 = vmatpush.bf16.msra.mxu0 %v297
  %374 = vmatpush.bf16.msra.mxu0 %v296
  %375 = vmatpush.bf16.msra.mxu0 %v295
  %376 = vmatpush.bf16.msra.mxu0 %v294
  %377 = vmatpush.bf16.msra.mxu0 %v293
  %378 = vmatpush.bf16.msra.mxu0 %v292
  %379 = vmatmul.bf16.gmra.mxu0 %v130
  %v380 = vpop.f32.mrf.mxu0
  %v381 = vadd.f32 0.0, %v380
  %v382 = vpop.f32.mrf.mxu0
  %v383 = vadd.f32 0.0, %v382
  %384 = vmatmul.bf16.gmra.mxu0 %v135
  %v385 = vpop.f32.mrf.mxu0
  %v386 = vadd.f32 0.0, %v385
  %v387 = vpop.f32.mrf.mxu0
  %v388 = vadd.f32 0.0, %v387
  %389 = vdwg.mxu0
  %390 = vmatpush.bf16.msra.mxu0 %v307
  %391 = vmatpush.bf16.msra.mxu0 %v306
  %392 = vmatpush.bf16.msra.mxu0 %v305
  %393 = vmatpush.bf16.msra.mxu0 %v304
  %394 = vmatpush.bf16.msra.mxu0 %v303
  %395 = vmatpush.bf16.msra.mxu0 %v302
  %396 = vmatpush.bf16.msra.mxu0 %v301
  %397 = vmatpush.bf16.msra.mxu0 %v300
  %398 = vmatmul.bf16.gmra.mxu0 %v131
  %v399 = vpop.f32.mrf.mxu0
  %v400 = vadd.f32 %v381, %v399
  %v401 = vpop.f32.mrf.mxu0
  %v402 = vadd.f32 %v383, %v401
  %403 = vmatmul.bf16.gmra.mxu0 %v136
  %v404 = vpop.f32.mrf.mxu0
  %v405 = vadd.f32 %v386, %v404
  %v406 = vpop.f32.mrf.mxu0
  %v407 = vadd.f32 %v388, %v406
  %408 = vdwg.mxu0
  %409 = vmatpush.bf16.msra.mxu0 %v315
  %410 = vmatpush.bf16.msra.mxu0 %v314
  %411 = vmatpush.bf16.msra.mxu0 %v313
  %412 = vmatpush.bf16.msra.mxu0 %v312
  %413 = vmatpush.bf16.msra.mxu0 %v311
  %414 = vmatpush.bf16.msra.mxu0 %v310
  %415 = vmatpush.bf16.msra.mxu0 %v309
  %416 = vmatpush.bf16.msra.mxu0 %v308
  %417 = vmatmul.bf16.gmra.mxu0 %v132
  %v418 = vpop.f32.mrf.mxu0
  %v419 = vadd.f32 %v400, %v418
  %v420 = vpop.f32.mrf.mxu0
  %v421 = vadd.f32 %v402, %v420
  %422 = vmatmul.bf16.gmra.mxu0 %v137
  %v423 = vpop.f32.mrf.mxu0
  %v424 = vadd.f32 %v405, %v423
  %v425 = vpop.f32.mrf.mxu0
  %v426 = vadd.f32 %v407, %v425
  %427 = vdwg.mxu0
  %428 = vmatpush.bf16.msra.mxu0 %v323
  %429 = vmatpush.bf16.msra.mxu0 %v322
  %430 = vmatpush.bf16.msra.mxu0 %v321
  %431 = vmatpush.bf16.msra.mxu0 %v320
  %432 = vmatpush.bf16.msra.mxu0 %v319
  %433 = vmatpush.bf16.msra.mxu0 %v318
  %434 = vmatpush.bf16.msra.mxu0 %v317
  %435 = vmatpush.bf16.msra.mxu0 %v316
  %436 = vmatmul.bf16.gmra.mxu0 %v133
  %v437 = vpop.f32.mrf.mxu0
  %v438 = vadd.f32 %v419, %v437
  %v439 = vpop.f32.mrf.mxu0
  %v440 = vadd.f32 %v421, %v439
  %441 = vmatmul.bf16.gmra.mxu0 %v138
  %v442 = vpop.f32.mrf.mxu0
  %v443 = vadd.f32 %v424, %v442
  %v444 = vpop.f32.mrf.mxu0
  %v445 = vadd.f32 %v426, %v444
  %446 = vdwg.mxu0
  %447 = vmatpush.bf16.msra.mxu0 0
  %448 = vmatpush.bf16.msra.mxu0 0
  %449 = vmatpush.bf16.msra.mxu0 0
  %450 = vmatpush.bf16.msra.mxu0 0
  %451 = vmatpush.bf16.msra.mxu0 %v327
  %452 = vmatpush.bf16.msra.mxu0 %v326
  %453 = vmatpush.bf16.msra.mxu0 %v325
  %454 = vmatpush.bf16.msra.mxu0 %v324
  %455 = vmatmul.bf16.gmra.mxu0 %v366
  %v456 = vpop.f32.mrf.mxu0
  %v457 = vadd.f32 %v438, %v456
  %v458 = vpop.f32.mrf.mxu0
  %v459 = vadd.f32 %v440, %v458
  %460 = vmatmul.bf16.gmra.mxu0 %v369
  %v461 = vpop.f32.mrf.mxu0
  %v462 = vadd.f32 %v443, %v461
  %v463 = vpop.f32.mrf.mxu0
  %v464 = vadd.f32 %v445, %v463
  %465 = vdwg.mxu0
  %466 = vst.msk [vmem:[%s2] sm:$0xff] %vm364, %v457
  %467 = vst.msk [vmem:[%s2 + $0x8] sm:$0xff] %vm364, %v459
  %468 = vst.msk [vmem:[%s2 + $0x10] sm:$0xff] %vm364, %v462
  %469 = vst.msk [vmem:[%s2 + $0x18] sm:$0xff] %vm364, %v464
  %v470 = vsel %vm364, %v457, 0.0
  %v471 = vsel %vm364, %v459, 0.0
  %v472 = vadd.f32 %v470, %v471
  %v473 = vsel %vm364, %v462, 0.0
  %v474 = vadd.f32 %v472, %v473
  %v475 = vsel %vm364, %v464, 0.0
  %v476 = vadd.f32 %v474, %v475
  %v477 = vrot.slane %v476, 4
  %v478 = vadd.f32 %v476, %v477
  %v479 = vrot.slane %v478, 2
  %v480 = vadd.f32 %v478, %v479
  %v481 = vrot.slane %v480, 1
  %v482 = vadd.f32 %v480, %v481
  %v483 = vmul.f32 %v457, %v457
  %v484 = vmul.f32 %v459, %v459
  %v485 = vmul.f32 %v462, %v462
  %v486 = vmul.f32 %v464, %v464
  %v487 = vsel %vm364, %v483, 0.0
  %v488 = vsel %vm364, %v484, 0.0
  %v489 = vadd.f32 %v487, %v488
  %v490 = vsel %vm364, %v485, 0.0
  %v491 = vadd.f32 %v489, %v490
  %v492 = vsel %vm364, %v486, 0.0
  %v493 = vadd.f32 %v491, %v492
  %v494 = vrot.slane %v493, 4
  %v495 = vadd.f32 %v493, %v494
  %v496 = vrot.slane %v495, 2
  %v497 = vadd.f32 %v495, %v496
  %v498 = vrot.slane %v497, 1
  %v499 = vadd.f32 %v497, %v498
  %vm500 = vcmask 1040384
  %v501 = vsel %vm500, %v482, %v499
  %vm502 = vcmask 1041408
  %v503 = vsel %vm502, %v501, 0.0
  %504 = vst.msk [vmem:[%s3] sm:$0xff] %vm364, %v503
  // Predicated region
  $region10: #{slim_forward.39} parent=0 // pred_check
    _
  $region11: #{slim_forward.39} parent=0 // pred_check_branch
    %506 = sbr.rel (0) target = $region13
  $region12: #{slim_forward.39} parent=0 // pred_region
    _
  $region13: #{slim_forward.39} parent=0 // pred_fallthru
    _
  // Predicated region
  $region14: #{slim_forward.39} parent=0 // pred_check
    _
  $region15: #{slim_forward.39} parent=0 // pred_check_branch
    %508 = sbr.rel (0) target = $region17
  $region16: #{slim_forward.39} parent=0 // pred_region
    _
  $region17: #{slim_forward.39} parent=0 // pred_fallthru
    _
  // Predicated region
  $region18: #{slim_forward.39} parent=0 // pred_check
    _
  $region19: #{slim_forward.39} parent=0 // pred_check_branch
    %510 = sbr.rel (0) target = $region21
  $region20: #{slim_forward.39} parent=0 // pred_region
    _
  $region21: #{slim_forward.39} parent=0 // pred_fallthru
    _
  // Predicated region
  $region22: #{slim_forward.39} parent=0 // pred_check
    _
  $region23: #{slim_forward.39} parent=0 // pred_check_branch
    %512 = sbr.rel (0) target = $region25
  $region24: #{slim_forward.39} parent=0 // pred_region
    _
  $region25: #{slim_forward.39} parent=0 // pred_fallthru
    _

// kernel: slim_forward.46
$region0: #{slim_forward.46}
  #allocation0 [shape = 'u32[]', space=smem, size = 0x4, offset = 0x4, fixed_abs, tag = 'smem constant byte address 0x4 - core index']
  #allocation1 [shape = 'u32[72,128]{1,0:T(1,128)}', space=vmem, size = 0x9000, scoped, tag = 'internal scratch']
  %s0 = inlined_call_operand.vmem [shape: f32[16,64], index: 0, kind: input, shape index: {}]
  %s1 = inlined_call_operand.vmem [shape: f32[1,64], index: 1, kind: input, shape index: {}]
  %s2 = inlined_call_operand.vmem [shape: f32[1,64], index: 2, kind: input, shape index: {}]
  %s3 = inlined_call_operand.vmem [shape: bf16[16,64], index: 3, kind: output, shape index: {}]
  %s4 = sld [smem:[#allocation0]]
  $region22: #{slim_forward.46} parent=0
    _
  %s6 = ssub.s32 1, %s4
  %s7 = scalar_select 0, %s6, %s4
  // Predicated region
  $region2: #{slim_forward.46} parent=0 // pred_check
    _
  $region3: #{slim_forward.46} parent=0 // pred_check_branch
    %9 = sbr.rel (0) target = $region5
  $region4: #{slim_forward.46} parent=0 // pred_region
    _
  $region5: #{slim_forward.46} parent=0 // pred_fallthru
    _
  // Predicated region
  $region6: #{slim_forward.46} parent=0 // pred_check
    _
  $region7: #{slim_forward.46} parent=0 // pred_check_branch
    %11 = sbr.rel (0) target = $region9
  $region8: #{slim_forward.46} parent=0 // pred_region
    _
  $region9: #{slim_forward.46} parent=0 // pred_fallthru
    _
  // Predicated region
  $region10: #{slim_forward.46} parent=0 // pred_check
    _
  $region11: #{slim_forward.46} parent=0 // pred_check_branch
    %13 = sbr.rel (0) target = $region13
  $region12: #{slim_forward.46} parent=0 // pred_region
    _
  $region13: #{slim_forward.46} parent=0 // pred_fallthru
    _
  %v14 = vld [vmem:[%s0] sm:$0xff]
  %v15 = vld [vmem:[%s0 + $0x8] sm:$0xff]
  %v16 = vld [vmem:[%s1] sm:$0x1]
  %v18 = vperm.slane %v16, 0
  %v20 = vmul.f32 %v14, %v18
  %v21 = vmul.f32 %v15, %v18
  %v22 = vld [vmem:[%s2] sm:$0x1]
  %v24 = vperm.slane %v22, 0
  %v26 = vadd.f32 %v20, %v24
  %v27 = vadd.f32 %v21, %v24
  %v28 = vmax.f32 %v26, 0.0
  %v29 = vmax.f32 %v27, 0.0
  %v30 = vpack.c.bf16 %v28, %v28
  %v31 = vpack.c.bf16 %v29, %v29
  %vm32 = vcmask 519168
  %33 = vst.msk [vmem:[%s3] sm:$0xf] %vm32, %v30
  %34 = vst.msk [vmem:[%s3 + $0x4] sm:$0xf] %vm32, %v31
  // Predicated region
  $region14: #{slim_forward.46} parent=0 // pred_check
    _
  $region15: #{slim_forward.46} parent=0 // pred_check_branch
    %36 = sbr.rel (0) target = $region17
  $region16: #{slim_forward.46} parent=0 // pred_region
    _
  $region17: #{slim_forward.46} parent=0 // pred_fallthru
    _
  // Predicated region
  $region18: #{slim_forward.46} parent=0 // pred_check
    _
  $region19: #{slim_forward.46} parent=0 // pred_check_branch
    %38 = sbr.rel (0) target = $region21
  $region20: #{slim_forward.46} parent=0 // pred_region
    _
  $region21: #{slim_forward.46} parent=0 // pred_fallthru
    _

// kernel: slim_forward.45
$region0: #{slim_forward.45}
  #allocation0 [shape = 'u32[]', space=smem, size = 0x4, offset = 0x4, fixed_abs, tag = 'smem constant byte address 0x4 - core index']
  #allocation1 [shape = 'u32[72,128]{1,0:T(1,128)}', space=vmem, size = 0x9000, scoped, tag = 'internal scratch']
  %s0 = inlined_call_operand.vmem [shape: bf16[16,576], index: 0, kind: input, shape index: {}]
  %s1 = inlined_call_operand.vmem [shape: bf16[576,64], index: 1, kind: input, shape index: {}]
  %s2 = inlined_call_operand.vmem [shape: f32[16,64], index: 2, kind: output, shape index: {0}]
  %s3 = inlined_call_operand.vmem [shape: f32[8,64], index: 3, kind: output, shape index: {1}]
  %4 = xla_tuple %s2, %s3
  %s5 = sld [smem:[#allocation0]]
  $region26: #{slim_forward.45} parent=0
    _
  %s7 = ssub.s32 1, %s5
  %s8 = scalar_select 0, %s7, %s5
  // Predicated region
  $region2: #{slim_forward.45} parent=0 // pred_check
    _
  $region3: #{slim_forward.45} parent=0 // pred_check_branch
    %10 = sbr.rel (0) target = $region5
  $region4: #{slim_forward.45} parent=0 // pred_region
    _
  $region5: #{slim_forward.45} parent=0 // pred_fallthru
    _
  // Predicated region
  $region6: #{slim_forward.45} parent=0 // pred_check
    _
  $region7: #{slim_forward.45} parent=0 // pred_check_branch
    %12 = sbr.rel (0) target = $region9
  $region8: #{slim_forward.45} parent=0 // pred_region
    _
  $region9: #{slim_forward.45} parent=0 // pred_fallthru
    _
  %v14 = vld [vmem:[%s0] sm:$0xff]
  %v15 = vld [vmem:[%s0 + $0x8] sm:$0xff]
  %v16 = vld [vmem:[%s0 + $0x10] sm:$0xf]
  %v17 = vld [vmem:[%s0 + $0x14] sm:$0xff]
  %v18 = vld [vmem:[%s0 + $0x1c] sm:$0xff]
  %v19 = vld [vmem:[%s0 + $0x24] sm:$0xf]
  %v20 = vld [vmem:[%s1] sm:$0xf]
  %v21 = vld [vmem:[%s1 + $0x4] sm:$0xf]
  %v22 = vld [vmem:[%s1 + $0x8] sm:$0xf]
  %v23 = vld [vmem:[%s1 + $0xc] sm:$0xf]
  %v24 = vld [vmem:[%s1 + $0x10] sm:$0xf]
  %v25 = vld [vmem:[%s1 + $0x14] sm:$0xf]
  %v26 = vld [vmem:[%s1 + $0x18] sm:$0xf]
  %v27 = vld [vmem:[%s1 + $0x1c] sm:$0xf]
  %v28 = vld [vmem:[%s1 + $0x20] sm:$0xf]
  %v29 = vld [vmem:[%s1 + $0x24] sm:$0xf]
  %v30 = vld [vmem:[%s1 + $0x28] sm:$0xf]
  %v31 = vld [vmem:[%s1 + $0x2c] sm:$0xf]
  %v32 = vld [vmem:[%s1 + $0x30] sm:$0xf]
  %v33 = vld [vmem:[%s1 + $0x34] sm:$0xf]
  %v34 = vld [vmem:[%s1 + $0x38] sm:$0xf]
  %v35 = vld [vmem:[%s1 + $0x3c] sm:$0xf]
  %v36 = vld [vmem:[%s1 + $0x40] sm:$0xf]
  %v37 = vld [vmem:[%s1 + $0x44] sm:$0xf]
  %v38 = vld [vmem:[%s1 + $0x48] sm:$0xf]
  %v39 = vld [vmem:[%s1 + $0x4c] sm:$0xf]
  %v40 = vld [vmem:[%s1 + $0x50] sm:$0xf]
  %v41 = vld [vmem:[%s1 + $0x54] sm:$0xf]
  %v42 = vld [vmem:[%s1 + $0x58] sm:$0xf]
  %v43 = vld [vmem:[%s1 + $0x5c] sm:$0xf]
  %v44 = vld [vmem:[%s1 + $0x60] sm:$0xf]
  %v45 = vld [vmem:[%s1 + $0x64] sm:$0xf]
  %v46 = vld [vmem:[%s1 + $0x68] sm:$0xf]
  %v47 = vld [vmem:[%s1 + $0x6c] sm:$0xf]
  %v48 = vld [vmem:[%s1 + $0x70] sm:$0xf]
  %v49 = vld [vmem:[%s1 + $0x74] sm:$0xf]
  %v50 = vld [vmem:[%s1 + $0x78] sm:$0xf]
  %v51 = vld [vmem:[%s1 + $0x7c] sm:$0xf]
  %v52 = vld [vmem:[%s1 + $0x80] sm:$0xf]
  %v53 = vld [vmem:[%s1 + $0x84] sm:$0xf]
  %v54 = vld [vmem:[%s1 + $0x88] sm:$0xf]
  %v55 = vld [vmem:[%s1 + $0x8c] sm:$0xf]
  %v56 = vld [vmem:[%s1 + $0x90] sm:$0xf]
  %v57 = vld [vmem:[%s1 + $0x94] sm:$0xf]
  %v58 = vld [vmem:[%s1 + $0x98] sm:$0xf]
  %v59 = vld [vmem:[%s1 + $0x9c] sm:$0xf]
  %v60 = vld [vmem:[%s1 + $0xa0] sm:$0xf]
  %v61 = vld [vmem:[%s1 + $0xa4] sm:$0xf]
  %v62 = vld [vmem:[%s1 + $0xa8] sm:$0xf]
  %v63 = vld [vmem:[%s1 + $0xac] sm:$0xf]
  %v64 = vld [vmem:[%s1 + $0xb0] sm:$0xf]
  %v65 = vld [vmem:[%s1 + $0xb4] sm:$0xf]
  %v66 = vld [vmem:[%s1 + $0xb8] sm:$0xf]
  %v67 = vld [vmem:[%s1 + $0xbc] sm:$0xf]
  %v68 = vld [vmem:[%s1 + $0xc0] sm:$0xf]
  %v69 = vld [vmem:[%s1 + $0xc4] sm:$0xf]
  %v70 = vld [vmem:[%s1 + $0xc8] sm:$0xf]
  %v71 = vld [vmem:[%s1 + $0xcc] sm:$0xf]
  %v72 = vld [vmem:[%s1 + $0xd0] sm:$0xf]
  %v73 = vld [vmem:[%s1 + $0xd4] sm:$0xf]
  %v74 = vld [vmem:[%s1 + $0xd8] sm:$0xf]
  %v75 = vld [vmem:[%s1 + $0xdc] sm:$0xf]
  %v76 = vld [vmem:[%s1 + $0xe0] sm:$0xf]
  %v77 = vld [vmem:[%s1 + $0xe4] sm:$0xf]
  %v78 = vld [vmem:[%s1 + $0xe8] sm:$0xf]
  %v79 = vld [vmem:[%s1 + $0xec] sm:$0xf]
  %v80 = vld [vmem:[%s1 + $0xf0] sm:$0xf]
  %v81 = vld [vmem:[%s1 + $0xf4] sm:$0xf]
  %v82 = vld [vmem:[%s1 + $0xf8] sm:$0xf]
  %v83 = vld [vmem:[%s1 + $0xfc] sm:$0xf]
  %v84 = vld [vmem:[%s1 + $0x100] sm:$0xf]
  %v85 = vld [vmem:[%s1 + $0x104] sm:$0xf]
  %v86 = vld [vmem:[%s1 + $0x108] sm:$0xf]
  %v87 = vld [vmem:[%s1 + $0x10c] sm:$0xf]
  %v88 = vld [vmem:[%s1 + $0x110] sm:$0xf]
  %v89 = vld [vmem:[%s1 + $0x114] sm:$0xf]
  %v90 = vld [vmem:[%s1 + $0x118] sm:$0xf]
  %v91 = vld [vmem:[%s1 + $0x11c] sm:$0xf]
  %v98 = vunpack.c.l.b16 %v14
  %v99 = vunpack.c.h.b16 %v14
  %v100 = vunpack.c.l.b16 %v15
  %v101 = vunpack.c.h.b16 %v15
  %v102 = vunpack.c.l.b16 %v16
  %v103 = vunpack.c.l.b16 %v17
  %v104 = vunpack.c.h.b16 %v17
  %v105 = vunpack.c.l.b16 %v18
  %v106 = vunpack.c.h.b16 %v18
  %v107 = vunpack.c.l.b16 %v19
  %v108 = vpack.c.b16 %v103, %v98
  %v109 = vpack.c.b16 %v104, %v99
  %v110 = vpack.c.b16 %v105, %v100
  %v111 = vpack.c.b16 %v106, %v101
  %v112 = vpack.c.b16 %v107, %v102
  %v189 = vunpack.c.l.b16 %v20
  %v190 = vunpack.c.l.b16 %v21
  %v191 = vunpack.c.l.b16 %v22
  %v192 = vunpack.c.l.b16 %v23
  %v193 = vunpack.c.l.b16 %v24
  %v194 = vunpack.c.l.b16 %v25
  %v195 = vunpack.c.l.b16 %v26
  %v196 = vunpack.c.l.b16 %v27
  %v197 = vunpack.c.l.b16 %v28
  %v198 = vunpack.c.l.b16 %v29
  %v199 = vunpack.c.l.b16 %v30
  %v200 = vunpack.c.l.b16 %v31
  %v201 = vunpack.c.l.b16 %v32
  %v202 = vunpack.c.l.b16 %v33
  %v203 = vunpack.c.l.b16 %v34
  %v204 = vunpack.c.l.b16 %v35
  %v205 = vunpack.c.l.b16 %v36
  %v206 = vunpack.c.l.b16 %v37
  %v207 = vunpack.c.l.b16 %v38
  %v208 = vunpack.c.l.b16 %v39
  %v209 = vunpack.c.l.b16 %v40
  %v210 = vunpack.c.l.b16 %v41
  %v211 = vunpack.c.l.b16 %v42
  %v212 = vunpack.c.l.b16 %v43
  %v213 = vunpack.c.l.b16 %v44
  %v214 = vunpack.c.l.b16 %v45
  %v215 = vunpack.c.l.b16 %v46
  %v216 = vunpack.c.l.b16 %v47
  %v217 = vunpack.c.l.b16 %v48
  %v218 = vunpack.c.l.b16 %v49
  %v219 = vunpack.c.l.b16 %v50
  %v220 = vunpack.c.l.b16 %v51
  %v221 = vunpack.c.l.b16 %v52
  %v222 = vunpack.c.l.b16 %v53
  %v223 = vunpack.c.l.b16 %v54
  %v224 = vunpack.c.l.b16 %v55
  %v225 = vunpack.c.l.b16 %v56
  %v226 = vunpack.c.l.b16 %v57
  %v227 = vunpack.c.l.b16 %v58
  %v228 = vunpack.c.l.b16 %v59
  %v229 = vunpack.c.l.b16 %v60
  %v230 = vunpack.c.l.b16 %v61
  %v231 = vunpack.c.l.b16 %v62
  %v232 = vunpack.c.l.b16 %v63
  %v233 = vunpack.c.l.b16 %v64
  %v234 = vunpack.c.l.b16 %v65
  %v235 = vunpack.c.l.b16 %v66
  %v236 = vunpack.c.l.b16 %v67
  %v237 = vunpack.c.l.b16 %v68
  %v238 = vunpack.c.l.b16 %v69
  %v239 = vunpack.c.l.b16 %v70
  %v240 = vunpack.c.l.b16 %v71
  %v241 = vunpack.c.l.b16 %v72
  %v242 = vunpack.c.l.b16 %v73
  %v243 = vunpack.c.l.b16 %v74
  %v244 = vunpack.c.l.b16 %v75
  %v245 = vunpack.c.l.b16 %v76
  %v246 = vunpack.c.l.b16 %v77
  %v247 = vunpack.c.l.b16 %v78
  %v248 = vunpack.c.l.b16 %v79
  %v249 = vunpack.c.l.b16 %v80
  %v250 = vunpack.c.l.b16 %v81
  %v251 = vunpack.c.l.b16 %v82
  %v252 = vunpack.c.l.b16 %v83
  %v253 = vunpack.c.l.b16 %v84
  %v254 = vunpack.c.l.b16 %v85
  %v255 = vunpack.c.l.b16 %v86
  %v256 = vunpack.c.l.b16 %v87
  %v257 = vunpack.c.l.b16 %v88
  %v258 = vunpack.c.l.b16 %v89
  %v259 = vunpack.c.l.b16 %v90
  %v260 = vunpack.c.l.b16 %v91
  %v261 = vpack.c.b16 %v190, %v189
  %v262 = vpack.c.b16 %v192, %v191
  %v263 = vpack.c.b16 %v194, %v193
  %v264 = vpack.c.b16 %v196, %v195
  %v265 = vpack.c.b16 %v198, %v197
  %v266 = vpack.c.b16 %v200, %v199
  %v267 = vpack.c.b16 %v202, %v201
  %v268 = vpack.c.b16 %v204, %v203
  %v269 = vpack.c.b16 %v206, %v205
  %v270 = vpack.c.b16 %v208, %v207
  %v271 = vpack.c.b16 %v210, %v209
  %v272 = vpack.c.b16 %v212, %v211
  %v273 = vpack.c.b16 %v214, %v213
  %v274 = vpack.c.b16 %v216, %v215
  %v275 = vpack.c.b16 %v218, %v217
  %v276 = vpack.c.b16 %v220, %v219
  %v277 = vpack.c.b16 %v222, %v221
  %v278 = vpack.c.b16 %v224, %v223
  %v279 = vpack.c.b16 %v226, %v225
  %v280 = vpack.c.b16 %v228, %v227
  %v281 = vpack.c.b16 %v230, %v229
  %v282 = vpack.c.b16 %v232, %v231
  %v283 = vpack.c.b16 %v234, %v233
  %v284 = vpack.c.b16 %v236, %v235
  %v285 = vpack.c.b16 %v238, %v237
  %v286 = vpack.c.b16 %v240, %v239
  %v287 = vpack.c.b16 %v242, %v241
  %v288 = vpack.c.b16 %v244, %v243
  %v289 = vpack.c.b16 %v246, %v245
  %v290 = vpack.c.b16 %v248, %v247
  %v291 = vpack.c.b16 %v250, %v249
  %v292 = vpack.c.b16 %v252, %v251
  %v293 = vpack.c.b16 %v254, %v253
  %v294 = vpack.c.b16 %v256, %v255
  %v295 = vpack.c.b16 %v258, %v257
  %v296 = vpack.c.b16 %v260, %v259
  %vm333 = vcmask 523264
  %v335 = vsel %vm333, %v112, 0
  %337 = vmatpush.bf16.msra.mxu0 %v268
  %338 = vmatpush.bf16.msra.mxu0 %v267
  %339 = vmatpush.bf16.msra.mxu0 %v266
  %340 = vmatpush.bf16.msra.mxu0 %v265
  %341 = vmatpush.bf16.msra.mxu0 %v264
  %342 = vmatpush.bf16.msra.mxu0 %v263
  %343 = vmatpush.bf16.msra.mxu0 %v262
  %344 = vmatpush.bf16.msra.mxu0 %v261
  %345 = vmatmul.bf16.gmra.mxu0 %v108
  %v346 = vpop.f32.mrf.mxu0
  %v347 = vadd.f32 0.0, %v346
  %v348 = vpop.f32.mrf.mxu0
  %v349 = vadd.f32 0.0, %v348
  %350 = vdwg.mxu0
  %351 = vmatpush.bf16.msra.mxu0 %v276
  %352 = vmatpush.bf16.msra.mxu0 %v275
  %353 = vmatpush.bf16.msra.mxu0 %v274
  %354 = vmatpush.bf16.msra.mxu0 %v273
  %355 = vmatpush.bf16.msra.mxu0 %v272
  %356 = vmatpush.bf16.msra.mxu0 %v271
  %357 = vmatpush.bf16.msra.mxu0 %v270
  %358 = vmatpush.bf16.msra.mxu0 %v269
  %359 = vmatmul.bf16.gmra.mxu0 %v109
  %v360 = vpop.f32.mrf.mxu0
  %v361 = vadd.f32 %v347, %v360
  %v362 = vpop.f32.mrf.mxu0
  %v363 = vadd.f32 %v349, %v362
  %364 = vdwg.mxu0
  %365 = vmatpush.bf16.msra.mxu0 %v284
  %366 = vmatpush.bf16.msra.mxu0 %v283
  %367 = vmatpush.bf16.msra.mxu0 %v282
  %368 = vmatpush.bf16.msra.mxu0 %v281
  %369 = vmatpush.bf16.msra.mxu0 %v280
  %370 = vmatpush.bf16.msra.mxu0 %v279
  %371 = vmatpush.bf16.msra.mxu0 %v278
  %372 = vmatpush.bf16.msra.mxu0 %v277
  %373 = vmatmul.bf16.gmra.mxu0 %v110
  %v374 = vpop.f32.mrf.mxu0
  %v375 = vadd.f32 %v361, %v374
  %v376 = vpop.f32.mrf.mxu0
  %v377 = vadd.f32 %v363, %v376
  %378 = vdwg.mxu0
  %379 = vmatpush.bf16.msra.mxu0 %v292
  %380 = vmatpush.bf16.msra.mxu0 %v291
  %381 = vmatpush.bf16.msra.mxu0 %v290
  %382 = vmatpush.bf16.msra.mxu0 %v289
  %383 = vmatpush.bf16.msra.mxu0 %v288
  %384 = vmatpush.bf16.msra.mxu0 %v287
  %385 = vmatpush.bf16.msra.mxu0 %v286
  %386 = vmatpush.bf16.msra.mxu0 %v285
  %387 = vmatmul.bf16.gmra.mxu0 %v111
  %v388 = vpop.f32.mrf.mxu0
  %v389 = vadd.f32 %v375, %v388
  %v390 = vpop.f32.mrf.mxu0
  %v391 = vadd.f32 %v377, %v390
  %392 = vdwg.mxu0
  %393 = vmatpush.bf16.msra.mxu0 0
  %394 = vmatpush.bf16.msra.mxu0 0
  %395 = vmatpush.bf16.msra.mxu0 0
  %396 = vmatpush.bf16.msra.mxu0 0
  %397 = vmatpush.bf16.msra.mxu0 %v296
  %398 = vmatpush.bf16.msra.mxu0 %v295
  %399 = vmatpush.bf16.msra.mxu0 %v294
  %400 = vmatpush.bf16.msra.mxu0 %v293
  %401 = vmatmul.bf16.gmra.mxu0 %v335
  %v402 = vpop.f32.mrf.mxu0
  %v403 = vadd.f32 %v389, %v402
  %v404 = vpop.f32.mrf.mxu0
  %v405 = vadd.f32 %v391, %v404
  %406 = vdwg.mxu0
  %407 = vst.msk [vmem:[%s2] sm:$0xff] %vm333, %v403
  %408 = vst.msk [vmem:[%s2 + $0x8] sm:$0xff] %vm333, %v405
  %v409 = vsel %vm333, %v403, 0.0
  %v410 = vsel %vm333, %v405, 0.0
  %v411 = vadd.f32 %v409, %v410
  %v412 = vrot.slane %v411, 4
  %v413 = vadd.f32 %v411, %v412
  %v414 = vrot.slane %v413, 2
  %v415 = vadd.f32 %v413, %v414
  %v416 = vrot.slane %v415, 1
  %v417 = vadd.f32 %v415, %v416
  %v418 = vmul.f32 %v403, %v403
  %v419 = vmul.f32 %v405, %v405
  %v420 = vsel %vm333, %v418, 0.0
  %v421 = vsel %vm333, %v419, 0.0
  %v422 = vadd.f32 %v420, %v421
  %v423 = vrot.slane %v422, 4
  %v424 = vadd.f32 %v422, %v423
  %v425 = vrot.slane %v424, 2
  %v426 = vadd.f32 %v424, %v425
  %v427 = vrot.slane %v426, 1
  %v428 = vadd.f32 %v426, %v427
  %vm429 = vcmask 1040384
  %v430 = vsel %vm429, %v417, %v428
  %vm431 = vcmask 1041408
  %v432 = vsel %vm431, %v430, 0.0
  %433 = vst.msk [vmem:[%s3] sm:$0xff] %vm333, %v432
  // Predicated region
  $region10: #{slim_forward.45} parent=0 // pred_check
    _
  $region11: #{slim_forward.45} parent=0 // pred_check_branch
    %435 = sbr.rel (0) target = $region13
  $region12: #{slim_forward.45} parent=0 // pred_region
    _
  $region13: #{slim_forward.45} parent=0 // pred_fallthru
    _
  // Predicated region
  $region14: #{slim_forward.45} parent=0 // pred_check
    _
  $region15: #{slim_forward.45} parent=0 // pred_check_branch
    %437 = sbr.rel (0) target = $region17
  $region16: #{slim_forward.45} parent=0 // pred_region
    _
  $region17: #{slim_forward.45} parent=0 // pred_fallthru
    _
  // Predicated region
  $region18: #{slim_forward.45} parent=0 // pred_check
    _
  $region19: #{slim_forward.45} parent=0 // pred_check_branch
    %439 = sbr.rel (0) target = $region21
  $region20: #{slim_forward.45} parent=0 // pred_region
    _
  $region21: #{slim_forward.45} parent=0 // pred_fallthru
    _
  // Predicated region
  $region22: #{slim_forward.45} parent=0 // pred_check
    _
  $region23: #{slim_forward.45} parent=0 // pred_check_branch
    %441 = sbr.rel (0) target = $region25
  $region24: #{slim_forward.45} parent=0 // pred_region
    _
  $region25: #{slim_forward.45} parent=0 // pred_fallthru
    _

// kernel: slim_forward.57
$region0: #{slim_forward.57}
  #allocation0 [shape = 'u32[]', space=smem, size = 0x4, offset = 0x4, fixed_abs, tag = 'smem constant byte address 0x4 - core index']
  #allocation1 [shape = 'u32[72,128]{1,0:T(1,128)}', space=vmem, size = 0x9000, scoped, tag = 'internal scratch']
  %s0 = inlined_call_operand.vmem [shape: bf16[16,64], index: 0, kind: input, shape index: {}]
  %s1 = inlined_call_operand.vmem [shape: bf16[64,128], index: 1, kind: input, shape index: {}]
  %s2 = inlined_call_operand.vmem [shape: f32[1,128], index: 2, kind: input, shape index: {}]
  %s3 = inlined_call_operand.vmem [shape: f32[16,128], index: 3, kind: output, shape index: {}]
  %s4 = sld [smem:[#allocation0]]
  $region22: #{slim_forward.57} parent=0
    _
  %s6 = ssub.s32 1, %s4
  %s7 = scalar_select 0, %s6, %s4
  // Predicated region
  $region2: #{slim_forward.57} parent=0 // pred_check
    _
  $region3: #{slim_forward.57} parent=0 // pred_check_branch
    %9 = sbr.rel (0) target = $region5
  $region4: #{slim_forward.57} parent=0 // pred_region
    _
  $region5: #{slim_forward.57} parent=0 // pred_fallthru
    _
  // Predicated region
  $region6: #{slim_forward.57} parent=0 // pred_check
    _
  $region7: #{slim_forward.57} parent=0 // pred_check_branch
    %11 = sbr.rel (0) target = $region9
  $region8: #{slim_forward.57} parent=0 // pred_region
    _
  $region9: #{slim_forward.57} parent=0 // pred_fallthru
    _
  // Predicated region
  $region10: #{slim_forward.57} parent=0 // pred_check
    _
  $region11: #{slim_forward.57} parent=0 // pred_check_branch
    %13 = sbr.rel (0) target = $region13
  $region12: #{slim_forward.57} parent=0 // pred_region
    _
  $region13: #{slim_forward.57} parent=0 // pred_fallthru
    _
  %v15 = vld [vmem:[%s0] sm:$0xf]
  %v16 = vld [vmem:[%s0 + $0x4] sm:$0xf]
  %v17 = vld [vmem:[%s1] sm:$0xf]
  %v18 = vld [vmem:[%s1 + $0x4] sm:$0xf]
  %v19 = vld [vmem:[%s1 + $0x8] sm:$0xf]
  %v20 = vld [vmem:[%s1 + $0xc] sm:$0xf]
  %v21 = vld [vmem:[%s1 + $0x10] sm:$0xf]
  %v22 = vld [vmem:[%s1 + $0x14] sm:$0xf]
  %v23 = vld [vmem:[%s1 + $0x18] sm:$0xf]
  %v24 = vld [vmem:[%s1 + $0x1c] sm:$0xf]
  %v25 = vld [vmem:[%s2] sm:$0x1]
  %v27 = vperm.slane %v25, 0
  %v31 = vunpack.c.l.b16 %v15
  %v32 = vunpack.c.l.b16 %v16
  %v33 = vpack.c.b16 %v32, %v31
  %v42 = vunpack.c.l.b16 %v17
  %v43 = vunpack.c.l.b16 %v18
  %v44 = vunpack.c.l.b16 %v19
  %v45 = vunpack.c.l.b16 %v20
  %v46 = vunpack.c.l.b16 %v21
  %v47 = vunpack.c.l.b16 %v22
  %v48 = vunpack.c.l.b16 %v23
  %v49 = vunpack.c.l.b16 %v24
  %v50 = vpack.c.b16 %v43, %v42
  %v51 = vpack.c.b16 %v45, %v44
  %v52 = vpack.c.b16 %v47, %v46
  %v53 = vpack.c.b16 %v49, %v48
  %vm58 = vcmask 523264
  %v60 = vsel %vm58, %v33, 0
  %62 = vmatpush.bf16.msra.mxu0 0
  %63 = vmatpush.bf16.msra.mxu0 0
  %64 = vmatpush.bf16.msra.mxu0 0
  %65 = vmatpush.bf16.msra.mxu0 0
  %66 = vmatpush.bf16.msra.mxu0 %v53
  %67 = vmatpush.bf16.msra.mxu0 %v52
  %68 = vmatpush.bf16.msra.mxu0 %v51
  %69 = vmatpush.bf16.msra.mxu0 %v50
  %70 = vmatmul.bf16.gmra.mxu0 %v60
  %v71 = vpop.f32.mrf.mxu0
  %v72 = vadd.f32 %v27, %v71
  %v73 = vpop.f32.mrf.mxu0
  %v74 = vadd.f32 %v27, %v73
  %75 = vdwg.mxu0
  %76 = vst [vmem:[%s3] sm:$0xff] %v72
  %77 = vst [vmem:[%s3 + $0x8] sm:$0xff] %v74
  // Predicated region
  $region14: #{slim_forward.57} parent=0 // pred_check
    _
  $region15: #{slim_forward.57} parent=0 // pred_check_branch
    %79 = sbr.rel (0) target = $region17
  $region16: #{slim_forward.57} parent=0 // pred_region
    _
  $region17: #{slim_forward.57} parent=0 // pred_fallthru
    _
  // Predicated region
  $region18: #{slim_forward.57} parent=0 // pred_check
    _
  $region19: #{slim_forward.57} parent=0 // pred_check_branch
    %81 = sbr.rel (0) target = $region21
  $region20: #{slim_forward.57} parent=0 // pred_region
    _
  $region21: #{slim_forward.57} parent=0 // pred_fallthru
    _

// kernel: slim_forward.55
$region0: #{slim_forward.55}
  #allocation0 [shape = 'u32[]', space=smem, size = 0x4, offset = 0x4, fixed_abs, tag = 'smem constant byte address 0x4 - core index']
  #allocation1 [shape = 'u32[72,128]{1,0:T(1,128)}', space=vmem, size = 0x9000, scoped, tag = 'internal scratch']
  %s0 = inlined_call_operand.vmem [shape: bf16[32,64], index: 0, kind: input, shape index: {}]
  %s1 = inlined_call_operand.vmem [shape: bf16[64,128], index: 1, kind: input, shape index: {}]
  %s2 = inlined_call_operand.vmem [shape: f32[1,128], index: 2, kind: input, shape index: {}]
  %s3 = inlined_call_operand.vmem [shape: f32[32,128], index: 3, kind: output, shape index: {}]
  %s4 = sld [smem:[#allocation0]]
  $region22: #{slim_forward.55} parent=0
    _
  %s6 = ssub.s32 1, %s4
  %s7 = scalar_select 0, %s6, %s4
  // Predicated region
  $region2: #{slim_forward.55} parent=0 // pred_check
    _
  $region3: #{slim_forward.55} parent=0 // pred_check_branch
    %9 = sbr.rel (0) target = $region5
  $region4: #{slim_forward.55} parent=0 // pred_region
    _
  $region5: #{slim_forward.55} parent=0 // pred_fallthru
    _
  // Predicated region
  $region6: #{slim_forward.55} parent=0 // pred_check
    _
  $region7: #{slim_forward.55} parent=0 // pred_check_branch
    %11 = sbr.rel (0) target = $region9
  $region8: #{slim_forward.55} parent=0 // pred_region
    _
  $region9: #{slim_forward.55} parent=0 // pred_fallthru
    _
  // Predicated region
  $region10: #{slim_forward.55} parent=0 // pred_check
    _
  $region11: #{slim_forward.55} parent=0 // pred_check_branch
    %13 = sbr.rel (0) target = $region13
  $region12: #{slim_forward.55} parent=0 // pred_region
    _
  $region13: #{slim_forward.55} parent=0 // pred_fallthru
    _
  %v15 = vld [vmem:[%s0] sm:$0xf]
  %v16 = vld [vmem:[%s0 + $0x4] sm:$0xf]
  %v17 = vld [vmem:[%s0 + $0x8] sm:$0xf]
  %v18 = vld [vmem:[%s0 + $0xc] sm:$0xf]
  %v19 = vld [vmem:[%s1] sm:$0xf]
  %v20 = vld [vmem:[%s1 + $0x4] sm:$0xf]
  %v21 = vld [vmem:[%s1 + $0x8] sm:$0xf]
  %v22 = vld [vmem:[%s1 + $0xc] sm:$0xf]
  %v23 = vld [vmem:[%s1 + $0x10] sm:$0xf]
  %v24 = vld [vmem:[%s1 + $0x14] sm:$0xf]
  %v25 = vld [vmem:[%s1 + $0x18] sm:$0xf]
  %v26 = vld [vmem:[%s1 + $0x1c] sm:$0xf]
  %v27 = vld [vmem:[%s2] sm:$0x1]
  %v29 = vperm.slane %v27, 0
  %v35 = vunpack.c.l.b16 %v15
  %v36 = vunpack.c.l.b16 %v16
  %v37 = vunpack.c.l.b16 %v17
  %v38 = vunpack.c.l.b16 %v18
  %v39 = vpack.c.b16 %v36, %v35
  %v40 = vpack.c.b16 %v38, %v37
  %v49 = vunpack.c.l.b16 %v19
  %v50 = vunpack.c.l.b16 %v20
  %v51 = vunpack.c.l.b16 %v21
  %v52 = vunpack.c.l.b16 %v22
  %v53 = vunpack.c.l.b16 %v23
  %v54 = vunpack.c.l.b16 %v24
  %v55 = vunpack.c.l.b16 %v25
  %v56 = vunpack.c.l.b16 %v26
  %v57 = vpack.c.b16 %v50, %v49
  %v58 = vpack.c.b16 %v52, %v51
  %v59 = vpack.c.b16 %v54, %v53
  %v60 = vpack.c.b16 %v56, %v55
  %vm65 = vcmask 523264
  %v67 = vsel %vm65, %v39, 0
  %v70 = vsel %vm65, %v40, 0
  %72 = vmatpush.bf16.msra.mxu0 0
  %73 = vmatpush.bf16.msra.mxu0 0
  %74 = vmatpush.bf16.msra.mxu0 0
  %75 = vmatpush.bf16.msra.mxu0 0
  %76 = vmatpush.bf16.msra.mxu0 %v60
  %77 = vmatpush.bf16.msra.mxu0 %v59
  %78 = vmatpush.bf16.msra.mxu0 %v58
  %79 = vmatpush.bf16.msra.mxu0 %v57
  %80 = vmatmul.bf16.gmra.mxu0 %v67
  %v81 = vpop.f32.mrf.mxu0
  %v82 = vadd.f32 %v29, %v81
  %v83 = vpop.f32.mrf.mxu0
  %v84 = vadd.f32 %v29, %v83
  %85 = vmatmul.bf16.gmra.mxu0 %v70
  %v86 = vpop.f32.mrf.mxu0
  %v87 = vadd.f32 %v29, %v86
  %v88 = vpop.f32.mrf.mxu0
  %v89 = vadd.f32 %v29, %v88
  %90 = vdwg.mxu0
  %91 = vst [vmem:[%s3] sm:$0xff] %v82
  %92 = vst [vmem:[%s3 + $0x8] sm:$0xff] %v84
  %93 = vst [vmem:[%s3 + $0x10] sm:$0xff] %v87
  %94 = vst [vmem:[%s3 + $0x18] sm:$0xff] %v89
  // Predicated region
  $region14: #{slim_forward.55} parent=0 // pred_check
    _
  $region15: #{slim_forward.55} parent=0 // pred_check_branch
    %96 = sbr.rel (0) target = $region17
  $region16: #{slim_forward.55} parent=0 // pred_region
    _
  $region17: #{slim_forward.55} parent=0 // pred_fallthru
    _
  // Predicated region
  $region18: #{slim_forward.55} parent=0 // pred_check
    _
  $region19: #{slim_forward.55} parent=0 // pred_check_branch
    %98 = sbr.rel (0) target = $region21
  $region20: #{slim_forward.55} parent=0 // pred_region
    _
  $region21: #{slim_forward.55} parent=0 // pred_fallthru
    _

</llo_original>
